<compile_context>
chip_gen: v6e
topology: v6e:2x2x1
jax: 0.10.0
libtpu: 0.0.40
codegen_flags: <defaults>
</compile_context>

<pallas_src>
import functools

import jax
import jax.numpy as jnp
from jax import lax
from jax.experimental import pallas as pl
from jax.experimental.pallas import tpu as pltpu

BN_EPS = 1e-5
LANE = 128


def _round_up(x, m):
    return (x + m - 1) // m * m


# ----------------------------- Pallas kernel --------------------------------

def _bottleneck_kernel(x_ref, w1s_ref, b1s_ref, w2_ref, b2_ref, w3_ref, b3_ref,
                       o_ref, out1_scr, *, H, W, P_p, r0, has_proj):
    """Fully fused Bottleneck forward for one image.

    x_ref    : (1, Lv, Cin_p) bf16   NHWC image rows, W padded by (1,1),
                                     channels zero-padded to Cin_p.
    w1s_ref  : (Cin_p, P_p[+Ce_p])   conv1 (and shortcut proj, if any) weights
                                     with BN scale folded, concatenated (bf16).
    b1s_ref  : (1, P_p[+Ce_p]) f32   folded BN shifts for conv1 [and shortcut].
    w2_ref   : (9, P_p, P_p) bf16    conv2 per-tap weights, bn2 scale folded.
    w3_ref   : (P_p, Ce_p) bf16      conv3 weight, bn3 scale folded.
    b2/b3    : (1, C) f32            folded BN shifts.
    o_ref    : (1, Lv, Ce_p) bf16    output rows covering the padded-width image.
    out1_scr : (Lp, P_p) bf16        VMEM slab holding conv1 output + halo rows.
    """
    Wp = W + 2
    Lv = H * Wp
    Lp = out1_scr.shape[0]

    # Zero the halo bands of the scratch slab; the window rows are rewritten
    # below every grid step, so this is megacore-safe (no cross-step state).
    out1_scr[pl.ds(0, r0), :] = jnp.zeros((r0, P_p), out1_scr.dtype)
    out1_scr[pl.ds(r0 + Lv, Lp - r0 - Lv), :] = jnp.zeros(
        (Lp - r0 - Lv, P_p), out1_scr.dtype)

    xs = x_ref[0]                                        # (Lv, Cin_p) bf16

    # conv1 (1x1)+bn1 [fused with shortcut 1x1 projection] -- one MXU pass.
    t = jnp.dot(xs, w1s_ref[...], preferred_element_type=jnp.float32)
    t = t + b1s_ref[...]

    # Interior-column mask (zero the left/right spatial pad columns so conv2's
    # zero padding is honored).  Rows need no masking: x has no pad rows.
    col = lax.broadcasted_iota(jnp.int32, (Lv, 1), 0) % Wp
    interior = jnp.logical_and(col >= 1, col <= W)

    out1 = jnp.where(interior, jnp.maximum(t[:, :P_p], 0.0), 0.0)
    out1_scr[pl.ds(r0, Lv), :] = out1.astype(out1_scr.dtype)

    # conv2 (3x3, pad=1)+bn2+relu as nine statically shifted row windows of
    # the padded slab; accumulator seeded by the first tap's matmul.
    acc = jnp.dot(out1_scr[pl.ds(r0 - Wp - 1, Lv), :], w2_ref[0],
                  preferred_element_type=jnp.float32)
    for k in range(1, 9):
        dy, dx = divmod(k, 3)
        start = r0 + (dy - 1) * Wp + (dx - 1)
        acc = acc + jnp.dot(out1_scr[pl.ds(start, Lv), :], w2_ref[k],
                            preferred_element_type=jnp.float32)
    out2 = jnp.maximum(acc + b2_ref[...], 0.0)           # (Lv, P_p) f32

    # conv3 (1x1) + bn3
    y = jnp.dot(out2.astype(jnp.bfloat16), w3_ref[...],
                preferred_element_type=jnp.float32) + b3_ref[...]

    # residual add + relu
    if has_proj:
        y = y + t[:, P_p:]                               # shortcut projection
    else:
        y = y + xs.astype(jnp.float32)                   # identity shortcut

    o_ref[0] = jnp.maximum(y, 0.0).astype(o_ref.dtype)


# ------------------------------- wrapper -------------------------------------

def fold_bn(bn):
    """Inference-mode BatchNorm folded into per-channel scale/shift."""
    gamma, beta, mean, var = bn
    scale = gamma / jnp.sqrt(var + BN_EPS)
    shift = beta - mean * scale
    return scale, shift


def _pad_row(v, n):
    return jnp.pad(v, (0, n - v.shape[0])).reshape(1, n).astype(jnp.float32)


def bottleneck_forward(x_nchw, params, stride=1):
    """Pallas implementation of Bottleneck.forward (NCHW in / NCHW out)."""
    N, Cin, H, W = x_nchw.shape
    w1 = params["conv1_w"]                               # (planes, Cin, 1, 1)
    planes = w1.shape[0]
    Cexp = 4 * planes

    Cin_p = _round_up(Cin, LANE)
    P_p = _round_up(planes, LANE)
    Ce_p = _round_up(Cexp, LANE)

    Wp = W + 2
    Lv = H * Wp
    r0 = _round_up(Wp + 1, 16)                 # sublane-aligned window start
    Lp = _round_up(r0 + Lv + Wp + 1, 16)       # scratch slab rows (with halo)

    has_proj = (stride != 1) or (Cin != Cexp)
    if not has_proj:
        assert Cin == Cexp, "identity shortcut requires Cin == expansion*planes"

    # ---- activations: NCHW -> NHWC, bf16, pad W by (1,1), channel pad.
    x = jnp.transpose(x_nchw, (0, 2, 3, 1)).astype(jnp.bfloat16)
    x = jnp.pad(x, ((0, 0), (0, 0), (1, 1), (0, Cin_p - Cin)))
    x = x.reshape(N, Lv, Cin_p)

    # ---- weights: fold BN scale, zero-pad to lane-dense sizes, cast bf16.
    s1, b1 = fold_bn(params["bn1"])
    w1m = (w1[:, :, 0, 0] * s1[:, None]).T               # (Cin, planes)
    w1m = jnp.pad(w1m, ((0, Cin_p - Cin), (0, P_p - planes)))
    b1v = _pad_row(b1, P_p)

    s2, b2 = fold_bn(params["bn2"])
    w2 = params["conv2_w"]                                # (planes, planes, 3, 3)
    w2m = jnp.transpose(w2, (2, 3, 1, 0)) * s2            # (3, 3, in, out)
    w2m = w2m.reshape(9, planes, planes)
    w2m = jnp.pad(w2m, ((0, 0), (0, P_p - planes),
                        (0, P_p - planes))).astype(jnp.bfloat16)
    b2v = _pad_row(b2, P_p)

    s3, b3 = fold_bn(params["bn3"])
    w3m = (params["conv3_w"][:, :, 0, 0] * s3[:, None]).T  # (planes, Cexp)
    w3m = jnp.pad(w3m, ((0, P_p - planes), (0, Ce_p - Cexp))).astype(jnp.bfloat16)
    b3v = _pad_row(b3, Ce_p)

    if has_proj:
        ss, bs = fold_bn(params["bn_s"])
        wsm = (params["conv_s_w"][:, :, 0, 0] * ss[:, None]).T  # (Cin, Cexp)
        wsm = jnp.pad(wsm, ((0, Cin_p - Cin), (0, Ce_p - Cexp)))
        w1s = jnp.concatenate([w1m, wsm], axis=1).astype(jnp.bfloat16)
        b1s = jnp.concatenate([b1v, _pad_row(bs, Ce_p)], axis=1)
    else:
        w1s = w1m.astype(jnp.bfloat16)
        b1s = b1v
    W1S = w1s.shape[1]

    in_specs = [
        pl.BlockSpec((1, Lv, Cin_p), lambda n: (n, 0, 0)),
        pl.BlockSpec((Cin_p, W1S), lambda n: (0, 0)),
        pl.BlockSpec((1, W1S), lambda n: (0, 0)),
        pl.BlockSpec((9, P_p, P_p), lambda n: (0, 0, 0)),
        pl.BlockSpec((1, P_p), lambda n: (0, 0)),
        pl.BlockSpec((P_p, Ce_p), lambda n: (0, 0)),
        pl.BlockSpec((1, Ce_p), lambda n: (0, 0)),
    ]

    kernel = functools.partial(_bottleneck_kernel, H=H, W=W, P_p=P_p, r0=r0,
                               has_proj=has_proj)

    out = pl.pallas_call(
        kernel,
        out_shape=jax.ShapeDtypeStruct((N, Lv, Ce_p), jnp.bfloat16),
        grid=(N,),
        in_specs=in_specs,
        out_specs=pl.BlockSpec((1, Lv, Ce_p), lambda n: (n, 0, 0)),
        scratch_shapes=[pltpu.VMEM((Lp, P_p), jnp.bfloat16)],
        compiler_params=pltpu.CompilerParams(
            dimension_semantics=("parallel",),
            vmem_limit_bytes=32 * 1024 * 1024),
    )(x, w1s, b1s, w2m, b2v, w3m, b3v)

    # (N, Lv, Ce_p) -> (N, H, W, Cexp) -> (optional stride subsample) -> NCHW f32
    out = out.reshape(N, H, Wp, Ce_p)[:, :, 1:W + 1, :Cexp]
    if stride != 1:
        # TODO(synk): for stride>1 the subsampling should move inside the
        # kernel (right after conv2) to avoid 4x conv3/shortcut/output work.
        out = out[:, ::stride, ::stride, :]
    return jnp.transpose(out, (0, 3, 1, 2)).astype(jnp.float32)


# ------------------------ pure-JAX reference (check) -------------------------

def _conv(x, w, stride=1, padding=0):
    return lax.conv_general_dilated(
        x, w, (stride, stride), [(padding, padding)] * 2,
        dimension_numbers=("NCHW", "OIHW", "NCHW"))


def _bn(y, p):
    g, b, m, v = (t[None, :, None, None] for t in p)
    return (y - m) / jnp.sqrt(v + BN_EPS) * g + b


def reference_forward(x, params, stride=1):
    out = jax.nn.relu(_bn(_conv(x, params["conv1_w"]), params["bn1"]))
    out = jax.nn.relu(_bn(_conv(out, params["conv2_w"], stride, 1), params["bn2"]))
    out = _bn(_conv(out, params["conv3_w"]), params["bn3"])
    if "conv_s_w" in params:
        sc = _bn(_conv(x, params["conv_s_w"], stride), params["bn_s"])
    else:
        sc = x
    return jax.nn.relu(out + sc)


# ----------------------------------- main ------------------------------------

def make_params(key, in_planes, planes, stride):
    expansion = 4
    ks = jax.random.split(key, 4)

    def bn_params(c, off):
        gamma = 1.0 + 0.05 * jnp.arange(c, dtype=jnp.float32)
        beta = 0.01 * (jnp.arange(c, dtype=jnp.float32) - c / 2.0) + off
        mean = 0.02 * jnp.arange(c, dtype=jnp.float32)
        var = 1.0 + 0.1 * jnp.arange(c, dtype=jnp.float32)
        return (gamma, beta, mean, var)

    params = {
        "conv1_w": 0.2 * jax.random.normal(ks[0], (planes, in_planes, 1, 1), jnp.float32),
        "bn1": bn_params(planes, 0.0),
        "conv2_w": 0.2 * jax.random.normal(ks[1], (planes, planes, 3, 3), jnp.float32),
        "bn2": bn_params(planes, 0.1),
        "conv3_w": 0.2 * jax.random.normal(ks[2], (expansion * planes, planes, 1, 1), jnp.float32),
        "bn3": bn_params(expansion * planes, -0.1),
    }
    if stride != 1 or in_planes != expansion * planes:
        params["conv_s_w"] = 0.2 * jax.random.normal(
            ks[3], (expansion * planes, in_planes, 1, 1), jnp.float32)
        params["bn_s"] = bn_params(expansion * planes, 0.05)
    return params


if __name__ == "__main__":
    # batch=2, in_planes=4, planes=4 (expansion*planes=16 -> projection
    # shortcut exercised), 16x16 spatial, stride=1.
    in_planes, planes, stride = 4, 4, 1
    key = jax.random.PRNGKey(0)
    kx, kp = jax.random.split(key)
    x = jax.random.normal(kx, (2, in_planes, 16, 16), jnp.float32)
    params = make_params(kp, in_planes, planes, stride)

    out = jax.block_until_ready(bottleneck_forward(x, params, stride=stride))
    ref = jax.block_until_ready(reference_forward(x, params, stride=stride))

    assert out.shape == ref.shape == (2, 4 * planes, 16, 16)
    max_err = float(jnp.max(jnp.abs(out - ref)))
    # bf16 matmul operands + bf16 activations/output (f32 accumulation) vs. an
    # all-f32 reference: typical max error ~1e-2; loose bound guards real bugs.
    assert max_err < 1e-1, f"mismatch vs JAX reference: {max_err}"

    # TODO(synk): BatchNorm is implemented in inference mode (running stats
    # folded to scale/shift); PyTorch train-mode batch statistics are not
    # reproduced.
    print("KERNEL_OK")
</pallas_src>

<mosaic_0001>
module attributes {stable_mosaic.version = 11 : i64} {
  func.func @_bottleneck_kernel(%arg0: i32, %arg1: memref<1x288x128xbf16, #tpu.memory_space<vmem>>, %arg2: memref<128x256xbf16, #tpu.memory_space<vmem>>, %arg3: memref<1x256xf32, #tpu.memory_space<vmem>>, %arg4: memref<9x128x128xbf16, #tpu.memory_space<vmem>>, %arg5: memref<1x128xf32, #tpu.memory_space<vmem>>, %arg6: memref<128x128xbf16, #tpu.memory_space<vmem>>, %arg7: memref<1x128xf32, #tpu.memory_space<vmem>>, %arg8: memref<1x288x128xbf16, #tpu.memory_space<vmem>>, %arg9: memref<352x128xbf16, #tpu.memory_space<vmem>>) attributes {dimension_semantics = [#tpu.dimension_semantics<parallel>], iteration_bounds = array<i64: 2>, scalar_prefetch = 0 : i64, scratch_operands = 1 : i64, tpu.core_type = #tpu.core_type<tc>, window_params = [{transform_indices = @transform_0, window_bounds = array<i64: 1, 288, 128>}, {pipeline_mode = #tpu.pipeline_mode<synchronous>, transform_indices = @transform_1, window_bounds = array<i64: 128, 256>}, {pipeline_mode = #tpu.pipeline_mode<synchronous>, transform_indices = @transform_2, window_bounds = array<i64: 1, 256>}, {pipeline_mode = #tpu.pipeline_mode<synchronous>, transform_indices = @transform_3, window_bounds = array<i64: 9, 128, 128>}, {pipeline_mode = #tpu.pipeline_mode<synchronous>, transform_indices = @transform_4, window_bounds = array<i64: 1, 128>}, {pipeline_mode = #tpu.pipeline_mode<synchronous>, transform_indices = @transform_5, window_bounds = array<i64: 128, 128>}, {pipeline_mode = #tpu.pipeline_mode<synchronous>, transform_indices = @transform_6, window_bounds = array<i64: 1, 128>}, {transform_indices = @transform_7, window_bounds = array<i64: 1, 288, 128>}]} {
    %cst = arith.constant 0.000000e+00 : bf16
    %0 = vector.broadcast %cst : bf16 to vector<32x128xbf16>
    %c0 = arith.constant 0 : index
    %c0_0 = arith.constant 0 : index
    %1 = vector.load %arg9[%c0, %c0_0] : memref<352x128xbf16, #tpu.memory_space<vmem>>, vector<32x128xbf16>
    tpu.vector_store %arg9[%c0, %c0_0], %0 {strides = array<i32>} : memref<352x128xbf16, #tpu.memory_space<vmem>>, vector<32x128xbf16>,
    %cst_1 = arith.constant 0.000000e+00 : bf16
    %2 = vector.broadcast %cst_1 : bf16 to vector<32x128xbf16>
    %c320 = arith.constant 320 : index
    %c0_2 = arith.constant 0 : index
    %3 = vector.load %arg9[%c320, %c0_2] : memref<352x128xbf16, #tpu.memory_space<vmem>>, vector<32x128xbf16>
    tpu.vector_store %arg9[%c320, %c0_2], %2 {strides = array<i32>} : memref<352x128xbf16, #tpu.memory_space<vmem>>, vector<32x128xbf16>,
    %c0_3 = arith.constant 0 : index
    %c0_4 = arith.constant 0 : index
    %c0_5 = arith.constant 0 : index
    %4 = vector.load %arg1[%c0_3, %c0_4, %c0_5] : memref<1x288x128xbf16, #tpu.memory_space<vmem>>, vector<1x288x128xbf16>
    %5 = vector.shape_cast %4 : vector<1x288x128xbf16> to vector<288x128xbf16>
    %c0_6 = arith.constant 0 : index
    %c0_7 = arith.constant 0 : index
    %6 = vector.load %arg2[%c0_6, %c0_7] : memref<128x256xbf16, #tpu.memory_space<vmem>>, vector<128x256xbf16>
    %cst_8 = arith.constant dense<0.000000e+00> : vector<288x256xf32>
    %7 = tpu.matmul %5, %6, %cst_8 {dimension_numbers = #tpu.dot_dimension_numbers<[1], [0], [0], [1], [0, 0, 1, 1], [], []>} : vector<288x128xbf16>, vector<128x256xbf16>, vector<288x256xf32> -> vector<288x256xf32>
    %c0_9 = arith.constant 0 : index
    %c0_10 = arith.constant 0 : index
    %8 = vector.load %arg3[%c0_9, %c0_10] : memref<1x256xf32, #tpu.memory_space<vmem>>, vector<1x256xf32>
    %9 = vector.broadcast %8 : vector<1x256xf32> to vector<288x256xf32>
    %10 = arith.addf %7, %9 : vector<288x256xf32>
    %11 = tpu.iota {dimensions = array<i32: 0>} : vector<288x1xi32>
    %c18_i32 = arith.constant 18 : i32
    %c0_i32 = arith.constant 0 : i32
    %12 = arith.cmpi eq, %c18_i32, %c0_i32 : i32
    %c1_i32 = arith.constant 1 : i32
    %13 = arith.select %12, %c1_i32, %c18_i32 : i32
    %14 = vector.broadcast %13 : i32 to vector<288x1xi32>
    %15 = arith.remsi %11, %14 : vector<288x1xi32>
    %c0_i32_11 = arith.constant 0 : i32
    %16 = vector.broadcast %c0_i32_11 : i32 to vector<288x1xi32>
    %17 = arith.cmpi ne, %15, %16 : vector<288x1xi32>
    %c0_i32_12 = arith.constant 0 : i32
    %18 = vector.broadcast %c0_i32_12 : i32 to vector<288x1xi32>
    %19 = arith.cmpi slt, %15, %18 : vector<288x1xi32>
    %c0_i32_13 = arith.constant 0 : i32
    %20 = arith.cmpi slt, %13, %c0_i32_13 : i32
    %21 = vector.broadcast %20 : i1 to vector<288x1xi1>
    %22 = vector.broadcast %21 : vector<288x1xi1> to vector<288x1xi1>
    %23 = arith.xori %19, %22 : vector<288x1xi1>
    %24 = arith.andi %23, %17 : vector<288x1xi1>
    %25 = vector.broadcast %13 : i32 to vector<288x1xi32>
    %26 = arith.addi %15, %25 : vector<288x1xi32>
    %27 = arith.select %24, %26, %15 : vector<288x1xi1>, vector<288x1xi32>
    %c1_i32_14 = arith.constant 1 : i32
    %28 = vector.broadcast %c1_i32_14 : i32 to vector<288x1xi32>
    %29 = arith.cmpi sge, %27, %28 : vector<288x1xi32>
    %c16_i32 = arith.constant 16 : i32
    %30 = vector.broadcast %c16_i32 : i32 to vector<288x1xi32>
    %31 = arith.cmpi sle, %27, %30 : vector<288x1xi32>
    %32 = arith.andi %29, %31 : vector<288x1xi1>
    %33 = vector.extract_strided_slice %10 {offsets = [0, 0], sizes = [288, 128], strides = [1, 1]} : vector<288x256xf32> to vector<288x128xf32>
    %cst_15 = arith.constant 0.000000e+00 : f32
    %34 = vector.broadcast %cst_15 : f32 to vector<288x128xf32>
    %35 = arith.maximumf %33, %34 : vector<288x128xf32>
    %cst_16 = arith.constant 0.000000e+00 : f32
    %36 = vector.shape_cast %32 : vector<288x1xi1> to vector<288x1xi1>
    %37 = vector.broadcast %36 : vector<288x1xi1> to vector<288x128xi1>
    %38 = vector.broadcast %cst_16 : f32 to vector<288x128xf32>
    %39 = arith.select %37, %35, %38 : vector<288x128xi1>, vector<288x128xf32>
    %40 = arith.truncf %39 : vector<288x128xf32> to vector<288x128xbf16>
    %c32 = arith.constant 32 : index
    %c0_17 = arith.constant 0 : index
    %41 = vector.load %arg9[%c32, %c0_17] : memref<352x128xbf16, #tpu.memory_space<vmem>>, vector<288x128xbf16>
    tpu.vector_store %arg9[%c32, %c0_17], %40 {strides = array<i32>} : memref<352x128xbf16, #tpu.memory_space<vmem>>, vector<288x128xbf16>,
    %c13 = arith.constant 13 : index
    %c0_18 = arith.constant 0 : index
    %42 = vector.load %arg9[%c13, %c0_18] : memref<352x128xbf16, #tpu.memory_space<vmem>>, vector<288x128xbf16>
    %c0_19 = arith.constant 0 : index
    %c0_20 = arith.constant 0 : index
    %c0_21 = arith.constant 0 : index
    %43 = vector.load %arg4[%c0_19, %c0_20, %c0_21] : memref<9x128x128xbf16, #tpu.memory_space<vmem>>, vector<1x128x128xbf16>
    %44 = vector.shape_cast %43 : vector<1x128x128xbf16> to vector<128x128xbf16>
    %cst_22 = arith.constant dense<0.000000e+00> : vector<288x128xf32>
    %45 = tpu.matmul %42, %44, %cst_22 {dimension_numbers = #tpu.dot_dimension_numbers<[1], [0], [0], [1], [0, 0, 1, 1], [], []>} : vector<288x128xbf16>, vector<128x128xbf16>, vector<288x128xf32> -> vector<288x128xf32>
    %c14 = arith.constant 14 : index
    %c0_23 = arith.constant 0 : index
    %46 = vector.load %arg9[%c14, %c0_23] : memref<352x128xbf16, #tpu.memory_space<vmem>>, vector<288x128xbf16>
    %c1 = arith.constant 1 : index
    %c0_24 = arith.constant 0 : index
    %c0_25 = arith.constant 0 : index
    %47 = vector.load %arg4[%c1, %c0_24, %c0_25] : memref<9x128x128xbf16, #tpu.memory_space<vmem>>, vector<1x128x128xbf16>
    %48 = vector.shape_cast %47 : vector<1x128x128xbf16> to vector<128x128xbf16>
    %cst_26 = arith.constant dense<0.000000e+00> : vector<288x128xf32>
    %49 = tpu.matmul %46, %48, %cst_26 {dimension_numbers = #tpu.dot_dimension_numbers<[1], [0], [0], [1], [0, 0, 1, 1], [], []>} : vector<288x128xbf16>, vector<128x128xbf16>, vector<288x128xf32> -> vector<288x128xf32>
    %50 = arith.addf %45, %49 : vector<288x128xf32>
    %c15 = arith.constant 15 : index
    %c0_27 = arith.constant 0 : index
    %51 = vector.load %arg9[%c15, %c0_27] : memref<352x128xbf16, #tpu.memory_space<vmem>>, vector<288x128xbf16>
    %c2 = arith.constant 2 : index
    %c0_28 = arith.constant 0 : index
    %c0_29 = arith.constant 0 : index
    %52 = vector.load %arg4[%c2, %c0_28, %c0_29] : memref<9x128x128xbf16, #tpu.memory_space<vmem>>, vector<1x128x128xbf16>
    %53 = vector.shape_cast %52 : vector<1x128x128xbf16> to vector<128x128xbf16>
    %cst_30 = arith.constant dense<0.000000e+00> : vector<288x128xf32>
    %54 = tpu.matmul %51, %53, %cst_30 {dimension_numbers = #tpu.dot_dimension_numbers<[1], [0], [0], [1], [0, 0, 1, 1], [], []>} : vector<288x128xbf16>, vector<128x128xbf16>, vector<288x128xf32> -> vector<288x128xf32>
    %55 = arith.addf %50, %54 : vector<288x128xf32>
    %c31 = arith.constant 31 : index
    %c0_31 = arith.constant 0 : index
    %56 = vector.load %arg9[%c31, %c0_31] : memref<352x128xbf16, #tpu.memory_space<vmem>>, vector<288x128xbf16>
    %c3 = arith.constant 3 : index
    %c0_32 = arith.constant 0 : index
    %c0_33 = arith.constant 0 : index
    %57 = vector.load %arg4[%c3, %c0_32, %c0_33] : memref<9x128x128xbf16, #tpu.memory_space<vmem>>, vector<1x128x128xbf16>
    %58 = vector.shape_cast %57 : vector<1x128x128xbf16> to vector<128x128xbf16>
    %cst_34 = arith.constant dense<0.000000e+00> : vector<288x128xf32>
    %59 = tpu.matmul %56, %58, %cst_34 {dimension_numbers = #tpu.dot_dimension_numbers<[1], [0], [0], [1], [0, 0, 1, 1], [], []>} : vector<288x128xbf16>, vector<128x128xbf16>, vector<288x128xf32> -> vector<288x128xf32>
    %60 = arith.addf %55, %59 : vector<288x128xf32>
    %c32_35 = arith.constant 32 : index
    %c0_36 = arith.constant 0 : index
    %61 = vector.load %arg9[%c32_35, %c0_36] : memref<352x128xbf16, #tpu.memory_space<vmem>>, vector<288x128xbf16>
    %c4 = arith.constant 4 : index
    %c0_37 = arith.constant 0 : index
    %c0_38 = arith.constant 0 : index
    %62 = vector.load %arg4[%c4, %c0_37, %c0_38] : memref<9x128x128xbf16, #tpu.memory_space<vmem>>, vector<1x128x128xbf16>
    %63 = vector.shape_cast %62 : vector<1x128x128xbf16> to vector<128x128xbf16>
    %cst_39 = arith.constant dense<0.000000e+00> : vector<288x128xf32>
    %64 = tpu.matmul %61, %63, %cst_39 {dimension_numbers = #tpu.dot_dimension_numbers<[1], [0], [0], [1], [0, 0, 1, 1], [], []>} : vector<288x128xbf16>, vector<128x128xbf16>, vector<288x128xf32> -> vector<288x128xf32>
    %65 = arith.addf %60, %64 : vector<288x128xf32>
    %c33 = arith.constant 33 : index
    %c0_40 = arith.constant 0 : index
    %66 = vector.load %arg9[%c33, %c0_40] : memref<352x128xbf16, #tpu.memory_space<vmem>>, vector<288x128xbf16>
    %c5 = arith.constant 5 : index
    %c0_41 = arith.constant 0 : index
    %c0_42 = arith.constant 0 : index
    %67 = vector.load %arg4[%c5, %c0_41, %c0_42] : memref<9x128x128xbf16, #tpu.memory_space<vmem>>, vector<1x128x128xbf16>
    %68 = vector.shape_cast %67 : vector<1x128x128xbf16> to vector<128x128xbf16>
    %cst_43 = arith.constant dense<0.000000e+00> : vector<288x128xf32>
    %69 = tpu.matmul %66, %68, %cst_43 {dimension_numbers = #tpu.dot_dimension_numbers<[1], [0], [0], [1], [0, 0, 1, 1], [], []>} : vector<288x128xbf16>, vector<128x128xbf16>, vector<288x128xf32> -> vector<288x128xf32>
    %70 = arith.addf %65, %69 : vector<288x128xf32>
    %c49 = arith.constant 49 : index
    %c0_44 = arith.constant 0 : index
    %71 = vector.load %arg9[%c49, %c0_44] : memref<352x128xbf16, #tpu.memory_space<vmem>>, vector<288x128xbf16>
    %c6 = arith.constant 6 : index
    %c0_45 = arith.constant 0 : index
    %c0_46 = arith.constant 0 : index
    %72 = vector.load %arg4[%c6, %c0_45, %c0_46] : memref<9x128x128xbf16, #tpu.memory_space<vmem>>, vector<1x128x128xbf16>
    %73 = vector.shape_cast %72 : vector<1x128x128xbf16> to vector<128x128xbf16>
    %cst_47 = arith.constant dense<0.000000e+00> : vector<288x128xf32>
    %74 = tpu.matmul %71, %73, %cst_47 {dimension_numbers = #tpu.dot_dimension_numbers<[1], [0], [0], [1], [0, 0, 1, 1], [], []>} : vector<288x128xbf16>, vector<128x128xbf16>, vector<288x128xf32> -> vector<288x128xf32>
    %75 = arith.addf %70, %74 : vector<288x128xf32>
    %c50 = arith.constant 50 : index
    %c0_48 = arith.constant 0 : index
    %76 = vector.load %arg9[%c50, %c0_48] : memref<352x128xbf16, #tpu.memory_space<vmem>>, vector<288x128xbf16>
    %c7 = arith.constant 7 : index
    %c0_49 = arith.constant 0 : index
    %c0_50 = arith.constant 0 : index
    %77 = vector.load %arg4[%c7, %c0_49, %c0_50] : memref<9x128x128xbf16, #tpu.memory_space<vmem>>, vector<1x128x128xbf16>
    %78 = vector.shape_cast %77 : vector<1x128x128xbf16> to vector<128x128xbf16>
    %cst_51 = arith.constant dense<0.000000e+00> : vector<288x128xf32>
    %79 = tpu.matmul %76, %78, %cst_51 {dimension_numbers = #tpu.dot_dimension_numbers<[1], [0], [0], [1], [0, 0, 1, 1], [], []>} : vector<288x128xbf16>, vector<128x128xbf16>, vector<288x128xf32> -> vector<288x128xf32>
    %80 = arith.addf %75, %79 : vector<288x128xf32>
    %c51 = arith.constant 51 : index
    %c0_52 = arith.constant 0 : index
    %81 = vector.load %arg9[%c51, %c0_52] : memref<352x128xbf16, #tpu.memory_space<vmem>>, vector<288x128xbf16>
    %c8 = arith.constant 8 : index
    %c0_53 = arith.constant 0 : index
    %c0_54 = arith.constant 0 : index
    %82 = vector.load %arg4[%c8, %c0_53, %c0_54] : memref<9x128x128xbf16, #tpu.memory_space<vmem>>, vector<1x128x128xbf16>
    %83 = vector.shape_cast %82 : vector<1x128x128xbf16> to vector<128x128xbf16>
    %cst_55 = arith.constant dense<0.000000e+00> : vector<288x128xf32>
    %84 = tpu.matmul %81, %83, %cst_55 {dimension_numbers = #tpu.dot_dimension_numbers<[1], [0], [0], [1], [0, 0, 1, 1], [], []>} : vector<288x128xbf16>, vector<128x128xbf16>, vector<288x128xf32> -> vector<288x128xf32>
    %85 = arith.addf %80, %84 : vector<288x128xf32>
    %c0_56 = arith.constant 0 : index
    %c0_57 = arith.constant 0 : index
    %86 = vector.load %arg5[%c0_56, %c0_57] : memref<1x128xf32, #tpu.memory_space<vmem>>, vector<1x128xf32>
    %87 = vector.broadcast %86 : vector<1x128xf32> to vector<288x128xf32>
    %88 = arith.addf %85, %87 : vector<288x128xf32>
    %cst_58 = arith.constant 0.000000e+00 : f32
    %89 = vector.broadcast %cst_58 : f32 to vector<288x128xf32>
    %90 = arith.maximumf %88, %89 : vector<288x128xf32>
    %91 = arith.truncf %90 : vector<288x128xf32> to vector<288x128xbf16>
    %c0_59 = arith.constant 0 : index
    %c0_60 = arith.constant 0 : index
    %92 = vector.load %arg6[%c0_59, %c0_60] : memref<128x128xbf16, #tpu.memory_space<vmem>>, vector<128x128xbf16>
    %cst_61 = arith.constant dense<0.000000e+00> : vector<288x128xf32>
    %93 = tpu.matmul %91, %92, %cst_61 {dimension_numbers = #tpu.dot_dimension_numbers<[1], [0], [0], [1], [0, 0, 1, 1], [], []>} : vector<288x128xbf16>, vector<128x128xbf16>, vector<288x128xf32> -> vector<288x128xf32>
    %c0_62 = arith.constant 0 : index
    %c0_63 = arith.constant 0 : index
    %94 = vector.load %arg7[%c0_62, %c0_63] : memref<1x128xf32, #tpu.memory_space<vmem>>, vector<1x128xf32>
    %95 = vector.broadcast %94 : vector<1x128xf32> to vector<288x128xf32>
    %96 = arith.addf %93, %95 : vector<288x128xf32>
    %97 = vector.extract_strided_slice %10 {offsets = [0, 128], sizes = [288, 128], strides = [1, 1]} : vector<288x256xf32> to vector<288x128xf32>
    %98 = arith.addf %96, %97 : vector<288x128xf32>
    %cst_64 = arith.constant 0.000000e+00 : f32
    %99 = vector.broadcast %cst_64 : f32 to vector<288x128xf32>
    %100 = arith.maximumf %98, %99 : vector<288x128xf32>
    %101 = arith.truncf %100 : vector<288x128xf32> to vector<288x128xbf16>
    %c0_65 = arith.constant 0 : index
    %c0_66 = arith.constant 0 : index
    %c0_67 = arith.constant 0 : index
    %102 = vector.load %arg8[%c0_65, %c0_66, %c0_67] : memref<1x288x128xbf16, #tpu.memory_space<vmem>>, vector<1x288x128xbf16>
    %103 = vector.shape_cast %102 : vector<1x288x128xbf16> to vector<288x128xbf16>
    %104 = vector.shape_cast %101 : vector<288x128xbf16> to vector<1x288x128xbf16>
    tpu.vector_store %arg8[%c0_65, %c0_66, %c0_67], %104 {strides = array<i32>} : memref<1x288x128xbf16, #tpu.memory_space<vmem>>, vector<1x288x128xbf16>,
    return
  }
  func.func @transform_0(%arg0: i32) -> (i32, i32, i32) {
    %c0_i32 = arith.constant 0 : i32
    %c0_i32_0 = arith.constant 0 : i32
    %c0_i32_1 = arith.constant 0 : i32
    return %arg0, %c0_i32, %c0_i32_0 : i32, i32, i32
  }
  func.func @transform_1(%arg0: i32) -> (i32, i32) {
    %c0_i32 = arith.constant 0 : i32
    %c0_i32_0 = arith.constant 0 : i32
    %c0_i32_1 = arith.constant 0 : i32
    return %c0_i32, %c0_i32_0 : i32, i32
  }
  func.func @transform_2(%arg0: i32) -> (i32, i32) {
    %c0_i32 = arith.constant 0 : i32
    %c0_i32_0 = arith.constant 0 : i32
    %c0_i32_1 = arith.constant 0 : i32
    return %c0_i32, %c0_i32_0 : i32, i32
  }
  func.func @transform_3(%arg0: i32) -> (i32, i32, i32) {
    %c0_i32 = arith.constant 0 : i32
    %c0_i32_0 = arith.constant 0 : i32
    %c0_i32_1 = arith.constant 0 : i32
    %c0_i32_2 = arith.constant 0 : i32
    return %c0_i32, %c0_i32_0, %c0_i32_1 : i32, i32, i32
  }
  func.func @transform_4(%arg0: i32) -> (i32, i32) {
    %c0_i32 = arith.constant 0 : i32
    %c0_i32_0 = arith.constant 0 : i32
    %c0_i32_1 = arith.constant 0 : i32
    return %c0_i32, %c0_i32_0 : i32, i32
  }
  func.func @transform_5(%arg0: i32) -> (i32, i32) {
    %c0_i32 = arith.constant 0 : i32
    %c0_i32_0 = arith.constant 0 : i32
    %c0_i32_1 = arith.constant 0 : i32
    return %c0_i32, %c0_i32_0 : i32, i32
  }
  func.func @transform_6(%arg0: i32) -> (i32, i32) {
    %c0_i32 = arith.constant 0 : i32
    %c0_i32_0 = arith.constant 0 : i32
    %c0_i32_1 = arith.constant 0 : i32
    return %c0_i32, %c0_i32_0 : i32, i32
  }
  func.func @transform_7(%arg0: i32) -> (i32, i32, i32) {
    %c0_i32 = arith.constant 0 : i32
    %c0_i32_0 = arith.constant 0 : i32
    %c0_i32_1 = arith.constant 0 : i32
    return %arg0, %c0_i32, %c0_i32_0 : i32, i32, i32
  }
}

</mosaic_0001>

<llo_original>
// kernel: tpu_custom_call.1
$region0: #{tpu_custom_call.1}
  #allocation0 [shape = 'u32[]', space=smem, size = 0x4, offset = 0x4, fixed_abs, tag = 'smem constant byte address 0x4 - core index']
  #allocation1 [shape = 'u32[144,128]{1,0:T(1,128)}', space=vmem, size = 0x12000, scoped, tag = 'internal scratch']
  #allocation2 [shape = 'bf16[352,128]{1,0:T(8,128)(2,1)}', space=vmem, size = 0x16000, scoped, tag = 'scratch operand']
  %s0 = inlined_call_operand.hbm [shape: bf16[2,288,128], index: 0, kind: input, shape index: {}]
  %s1 = inlined_call_operand.hbm [shape: bf16[128,256], index: 1, kind: input, shape index: {}]
  %s2 = inlined_call_operand.vmem [shape: f32[1,256], index: 2, kind: input, shape index: {}]
  %s3 = inlined_call_operand.hbm [shape: bf16[9,128,128], index: 3, kind: input, shape index: {}]
  %s4 = inlined_call_operand.vmem [shape: f32[1,128], index: 4, kind: input, shape index: {}]
  %s5 = inlined_call_operand.hbm [shape: bf16[128,128], index: 5, kind: input, shape index: {}]
  %s6 = inlined_call_operand.vmem [shape: f32[1,128], index: 6, kind: input, shape index: {}]
  %s7 = inlined_call_operand.hbm [shape: bf16[2,288,128], index: 7, kind: output, shape index: {}]
  %s8 = sld [smem:[#allocation0]]
  $region77: #{tpu_custom_call.1} parent=0
    _
  %s10 = ssub.s32 1, %s8
  %s11 = scalar_select 0, %s10, %s8
  $region1: #{tpu_custom_call.1} parent=0
    #allocation3 [shape = 'u8[147456]{0}', space=vmem, size = 0x24000, scoped, tag = 'input window, operand 0']
    #allocation4 [shape = 's32[2]{0}', space=sflag, size = 0x8, scoped, tag = 'scoped memory for tpu_custom_call.1']
    #allocation5 [shape = 's32[2]{0}', space=sflag, size = 0x8, scoped, tag = 'scoped memory for tpu_custom_call.1']
    #allocation6 [shape = 'u8[65536]{0}', space=vmem, size = 0x10000, scoped, tag = 'input window, operand 1, single buffered']
    #allocation7 [shape = 's32[1]{0}', space=sflag, size = 0x4, scoped, tag = 'scoped memory for tpu_custom_call.1']
    #allocation8 [shape = 'u8[294912]{0}', space=vmem, size = 0x48000, scoped, tag = 'input window, operand 3, single buffered']
    #allocation9 [shape = 'u8[32768]{0}', space=vmem, size = 0x8000, scoped, tag = 'input window, operand 5, single buffered']
    #allocation10 [shape = 's32[1]{0}', space=sflag, size = 0x4, scoped, tag = 'scoped memory for tpu_custom_call.1']
    #allocation11 [shape = 'u8[147456]{0}', space=vmem, size = 0x24000, scoped, tag = 'output window, operand 0']
    %12 = vsyncpa [#allocation4], 0
    %s13 = scalar_lea.sflag [#allocation4], 1
    %14 = vsyncpa %s13, 0
    %15 = vsyncpa [#allocation7], 0
    %16 = vsyncpa [#allocation10], 0
    %17 = vsyncpa [#allocation5], 0
    %s18 = scalar_lea.sflag [#allocation5], 1
    %19 = vsyncpa %s18, 0
    loop: start=0, step=1, limit=4
    $region2: #{tpu_custom_call.1} parent=1 // loop_pre_header
      _
    $region3: #{tpu_custom_call.1} parent=1 // loop_header
      %s21 = sphi 0, %s25
      %p22 = scmp.ge.s32.totalorder %s21, 4
      %s31 = sphi 0, %s33
      %s34 = sphi 0, %s31
      %s35 = sphi 0, %s34
      %s51 = sphi 0, %s35
      %s55 = sphi 0, %s55
      %s57 = sphi 0, %s55
      %s58 = sphi 0, %s57
      %s72 = sphi 0, %s58
      %s76 = sphi 0, %s76
      %s78 = sphi 0, %s76
      %s79 = sphi 0, %s78
      %s93 = sphi 0, %s79
      %s97 = sphi 0, %s97
      %s99 = sphi 0, %s97
      %s100 = sphi 0, %s99
      %s114 = sphi 0, %s100
      %s118 = sphi 0, %s118
      %s120 = sphi 0, %s118
      %s121 = sphi 0, %s120
      %s135 = sphi 0, %s121
      %s139 = sphi 0, %s139
      %s141 = sphi 0, %s139
      %s142 = sphi 0, %s141
      %s156 = sphi 0, %s142
      %s160 = sphi 0, %s160
      %s162 = sphi 0, %s160
      %s163 = sphi 0, %s162
      %s177 = sphi 0, %s163
      %s183 = sphi 0, %s185
      %s186 = sphi 0, %s183
      %s187 = sphi 0, %s186
      %s203 = sphi 0, %s187
    $region4: #{tpu_custom_call.1} parent=1 // loop_header_branch
      %24 = sbr.rel (%p22) target = $region8
    $region5: #{tpu_custom_call.1} parent=1 // loop_body
      %s26 = ssub.s32 %s21, 1
      %s27 = ssub.s32 %s21, 2
      %s28 = sadd.s32 %s21, 1
      %s29 = ssub.s32 %s21, %s28
      %p30 = scmp.eq.s32.totalorder %s29, 0
      %s32 = sadd.s32 %s31, 1
      %s33 = scalar_select %p30, %s31, %s32
      %p36 = pneg %p30
      %p37 = scmp.eq.s32.totalorder %s21, 1
      %p38 = por %p36, %p37
      %p39 = scmp.ne.s32.totalorder %s31, %s34
      %p40 = scmp.eq.s32.totalorder %s21, 0
      %p41 = por %p39, %p40
      %p42 = scmp.ne.s32.totalorder %s31, %s34
      %p43 = scmp.eq.s32.totalorder %s26, 1
      %p44 = por %p42, %p43
      %p45 = scmp.ne.s32.totalorder %s34, %s35
      %p46 = scmp.eq.s32.totalorder %s26, 0
      %p47 = por %p45, %p46
      %p48 = scmp.ne.s32.totalorder %s34, %s35
      %p49 = scmp.eq.s32.totalorder %s27, 1
      %p50 = por %p48, %p49
      %p52 = scmp.ne.s32.totalorder %s35, %s51
      %p53 = scmp.eq.s32.totalorder %s27, 0
      %p54 = por %p52, %p53
      %s56 = sadd.s32 %s55, 1
      %p59 = scmp.eq.s32.totalorder %s21, 1
      %p60 = scmp.ne.s32.totalorder %s55, %s57
      %p61 = scmp.eq.s32.totalorder %s21, 0
      %p62 = por %p60, %p61
      %p63 = scmp.ne.s32.totalorder %s55, %s57
      %p64 = scmp.eq.s32.totalorder %s26, 1
      %p65 = por %p63, %p64
      %p66 = scmp.ne.s32.totalorder %s57, %s58
      %p67 = scmp.eq.s32.totalorder %s26, 0
      %p68 = por %p66, %p67
      %p69 = scmp.ne.s32.totalorder %s57, %s58
      %p70 = scmp.eq.s32.totalorder %s27, 1
      %p71 = por %p69, %p70
      %p73 = scmp.ne.s32.totalorder %s58, %s72
      %p74 = scmp.eq.s32.totalorder %s27, 0
      %p75 = por %p73, %p74
      %s77 = sadd.s32 %s76, 1
      %p80 = scmp.eq.s32.totalorder %s21, 1
      %p81 = scmp.ne.s32.totalorder %s76, %s78
      %p82 = scmp.eq.s32.totalorder %s21, 0
      %p83 = por %p81, %p82
      %p84 = scmp.ne.s32.totalorder %s76, %s78
      %p85 = scmp.eq.s32.totalorder %s26, 1
      %p86 = por %p84, %p85
      %p87 = scmp.ne.s32.totalorder %s78, %s79
      %p88 = scmp.eq.s32.totalorder %s26, 0
      %p89 = por %p87, %p88
      %p90 = scmp.ne.s32.totalorder %s78, %s79
      %p91 = scmp.eq.s32.totalorder %s27, 1
      %p92 = por %p90, %p91
      %p94 = scmp.ne.s32.totalorder %s79, %s93
      %p95 = scmp.eq.s32.totalorder %s27, 0
      %p96 = por %p94, %p95
      %s98 = sadd.s32 %s97, 1
      %p101 = scmp.eq.s32.totalorder %s21, 1
      %p102 = scmp.ne.s32.totalorder %s97, %s99
      %p103 = scmp.eq.s32.totalorder %s21, 0
      %p104 = por %p102, %p103
      %p105 = scmp.ne.s32.totalorder %s97, %s99
      %p106 = scmp.eq.s32.totalorder %s26, 1
      %p107 = por %p105, %p106
      %p108 = scmp.ne.s32.totalorder %s99, %s100
      %p109 = scmp.eq.s32.totalorder %s26, 0
      %p110 = por %p108, %p109
      %p111 = scmp.ne.s32.totalorder %s99, %s100
      %p112 = scmp.eq.s32.totalorder %s27, 1
      %p113 = por %p111, %p112
      %p115 = scmp.ne.s32.totalorder %s100, %s114
      %p116 = scmp.eq.s32.totalorder %s27, 0
      %p117 = por %p115, %p116
      %s119 = sadd.s32 %s118, 1
      %p122 = scmp.eq.s32.totalorder %s21, 1
      %p123 = scmp.ne.s32.totalorder %s118, %s120
      %p124 = scmp.eq.s32.totalorder %s21, 0
      %p125 = por %p123, %p124
      %p126 = scmp.ne.s32.totalorder %s118, %s120
      %p127 = scmp.eq.s32.totalorder %s26, 1
      %p128 = por %p126, %p127
      %p129 = scmp.ne.s32.totalorder %s120, %s121
      %p130 = scmp.eq.s32.totalorder %s26, 0
      %p131 = por %p129, %p130
      %p132 = scmp.ne.s32.totalorder %s120, %s121
      %p133 = scmp.eq.s32.totalorder %s27, 1
      %p134 = por %p132, %p133
      %p136 = scmp.ne.s32.totalorder %s121, %s135
      %p137 = scmp.eq.s32.totalorder %s27, 0
      %p138 = por %p136, %p137
      %s140 = sadd.s32 %s139, 1
      %p143 = scmp.eq.s32.totalorder %s21, 1
      %p144 = scmp.ne.s32.totalorder %s139, %s141
      %p145 = scmp.eq.s32.totalorder %s21, 0
      %p146 = por %p144, %p145
      %p147 = scmp.ne.s32.totalorder %s139, %s141
      %p148 = scmp.eq.s32.totalorder %s26, 1
      %p149 = por %p147, %p148
      %p150 = scmp.ne.s32.totalorder %s141, %s142
      %p151 = scmp.eq.s32.totalorder %s26, 0
      %p152 = por %p150, %p151
      %p153 = scmp.ne.s32.totalorder %s141, %s142
      %p154 = scmp.eq.s32.totalorder %s27, 1
      %p155 = por %p153, %p154
      %p157 = scmp.ne.s32.totalorder %s142, %s156
      %p158 = scmp.eq.s32.totalorder %s27, 0
      %p159 = por %p157, %p158
      %s161 = sadd.s32 %s160, 1
      %p164 = scmp.eq.s32.totalorder %s21, 1
      %p165 = scmp.ne.s32.totalorder %s160, %s162
      %p166 = scmp.eq.s32.totalorder %s21, 0
      %p167 = por %p165, %p166
      %p168 = scmp.ne.s32.totalorder %s160, %s162
      %p169 = scmp.eq.s32.totalorder %s26, 1
      %p170 = por %p168, %p169
      %p171 = scmp.ne.s32.totalorder %s162, %s163
      %p172 = scmp.eq.s32.totalorder %s26, 0
      %p173 = por %p171, %p172
      %p174 = scmp.ne.s32.totalorder %s162, %s163
      %p175 = scmp.eq.s32.totalorder %s27, 1
      %p176 = por %p174, %p175
      %p178 = scmp.ne.s32.totalorder %s163, %s177
      %p179 = scmp.eq.s32.totalorder %s27, 0
      %p180 = por %p178, %p179
      %s181 = ssub.s32 %s21, %s28
      %p182 = scmp.eq.s32.totalorder %s181, 0
      %s184 = sadd.s32 %s183, 1
      %s185 = scalar_select %p182, %s183, %s184
      %p188 = pneg %p182
      %p189 = scmp.eq.s32.totalorder %s21, 1
      %p190 = por %p188, %p189
      %p191 = scmp.ne.s32.totalorder %s183, %s186
      %p192 = scmp.eq.s32.totalorder %s21, 0
      %p193 = por %p191, %p192
      %p194 = scmp.ne.s32.totalorder %s183, %s186
      %p195 = scmp.eq.s32.totalorder %s26, 1
      %p196 = por %p194, %p195
      %p197 = scmp.ne.s32.totalorder %s186, %s187
      %p198 = scmp.eq.s32.totalorder %s26, 0
      %p199 = por %p197, %p198
      %p200 = scmp.ne.s32.totalorder %s186, %s187
      %p201 = scmp.eq.s32.totalorder %s27, 1
      %p202 = por %p200, %p201
      %p204 = scmp.ne.s32.totalorder %s187, %s203
      %p205 = scmp.eq.s32.totalorder %s27, 0
      %p206 = por %p204, %p205
      %p207 = scmp.le.s32.totalorder 1, %s21
      %p208 = scmp.lt.s32.totalorder %s21, 3
      %p209 = pnand %p207, %p208
      %p210 = pneg %p209
      // Predicated region
      $region9: #{tpu_custom_call.1} parent=5 // pred_check
        _
      $region10: #{tpu_custom_call.1} parent=5 // pred_check_branch
        %212 = sbr.rel (%p209) target = $region12
      $region11: #{tpu_custom_call.1} parent=5 // pred_region
        %s213 = ssub.s32 %s21, 1
        // Predicated region
        $region13: #{tpu_custom_call.1} parent=11 // pred_check
          %p214 = pneg %p68
        $region14: #{tpu_custom_call.1} parent=11 // pred_check_branch
          %216 = sbr.rel (%p214) target = $region16
        $region15: #{tpu_custom_call.1} parent=11 // pred_region
          %s218 = ssub.s32 2048, 2048
          %219 = vsyncadd [#allocation7], %s218
          %s220 = sshll.u32 [#allocation6], 4
          %s221 = int_to_ptr.vmem [resolvable:$true] %s220
          %226 = dma.hbm_to_vmem [thread:$0]  %s1, 2048, %s221, [#allocation7], 128, 128, 8
        $region16: #{tpu_custom_call.1} parent=11 // pred_fallthru
          _
        // Predicated region
        $region17: #{tpu_custom_call.1} parent=11 // pred_check
          %p227 = pneg %p89
        $region18: #{tpu_custom_call.1} parent=11 // pred_check_branch
          %229 = sbr.rel (%p227) target = $region20
        $region19: #{tpu_custom_call.1} parent=11 // pred_region
          _
        $region20: #{tpu_custom_call.1} parent=11 // pred_fallthru
          _
        // Predicated region
        $region21: #{tpu_custom_call.1} parent=11 // pred_check
          %p230 = pneg %p110
        $region22: #{tpu_custom_call.1} parent=11 // pred_check_branch
          %232 = sbr.rel (%p230) target = $region24
        $region23: #{tpu_custom_call.1} parent=11 // pred_region
          %s234 = ssub.s32 9216, 9216
          %235 = vsyncadd [#allocation7], %s234
          %s236 = sshll.u32 [#allocation8], 4
          %s237 = int_to_ptr.vmem [resolvable:$true] %s236
          %242 = dma.hbm_to_vmem [thread:$0]  %s3, 9216, %s237, [#allocation7], 64, 64, 4
        $region24: #{tpu_custom_call.1} parent=11 // pred_fallthru
          _
        // Predicated region
        $region25: #{tpu_custom_call.1} parent=11 // pred_check
          %p243 = pneg %p131
        $region26: #{tpu_custom_call.1} parent=11 // pred_check_branch
          %245 = sbr.rel (%p243) target = $region28
        $region27: #{tpu_custom_call.1} parent=11 // pred_region
          _
        $region28: #{tpu_custom_call.1} parent=11 // pred_fallthru
          _
        // Predicated region
        $region29: #{tpu_custom_call.1} parent=11 // pred_check
          %p246 = pneg %p152
        $region30: #{tpu_custom_call.1} parent=11 // pred_check_branch
          %248 = sbr.rel (%p246) target = $region32
        $region31: #{tpu_custom_call.1} parent=11 // pred_region
          %s250 = ssub.s32 1024, 1024
          %251 = vsyncadd [#allocation10], %s250
          %s252 = sshll.u32 [#allocation9], 4
          %s253 = int_to_ptr.vmem [resolvable:$true] %s252
          %258 = dma.hbm_to_vmem [thread:$0]  %s5, 1024, %s253, [#allocation10], 64, 64, 4
        $region32: #{tpu_custom_call.1} parent=11 // pred_fallthru
          _
        // Predicated region
        $region33: #{tpu_custom_call.1} parent=11 // pred_check
          %p259 = pneg %p173
        $region34: #{tpu_custom_call.1} parent=11 // pred_check_branch
          %261 = sbr.rel (%p259) target = $region36
        $region35: #{tpu_custom_call.1} parent=11 // pred_region
          _
        $region36: #{tpu_custom_call.1} parent=11 // pred_fallthru
          _
      $region12: #{tpu_custom_call.1} parent=5 // pred_fallthru
        _
      %p262 = scmp.lt.s32.totalorder %s21, 2
      // Predicated region
      $region37: #{tpu_custom_call.1} parent=5 // pred_check
        %p263 = pneg %p262
      $region38: #{tpu_custom_call.1} parent=5 // pred_check_branch
        %265 = sbr.rel (%p263) target = $region40
      $region39: #{tpu_custom_call.1} parent=5 // pred_region
        // Predicated region
        $region41: #{tpu_custom_call.1} parent=39 // pred_check
          %p266 = pneg %p41
        $region42: #{tpu_custom_call.1} parent=39 // pred_check_branch
          %268 = sbr.rel (%p266) target = $region44
        $region43: #{tpu_custom_call.1} parent=39 // pred_region
          %s269 = sand.u32 %s31, 1
          %s270 = scalar_lea.sflag [#allocation4], %s269
          %s271 = sand.u32 %s31, 1
          %s272 = smul.addr %s271, 144
          %s273 = scalar_lea.vmem [#allocation3], %s272
          %s275 = ssub.s32 2304, 2304
          %276 = vsyncadd %s270, %s275
          %s277 = smul.addr %s21, 36
          %s278 = smul.addr %s277, 64
          %s279 = scalar_lea.hbm %s0, %s278
          %s280 = sshll.u32 %s273, 4
          %s281 = int_to_ptr.vmem [resolvable:$true] %s280
          %286 = dma.hbm_to_vmem [thread:$0]  %s279, 2304, %s281, %s270, 64, 64, 4
        $region44: #{tpu_custom_call.1} parent=39 // pred_fallthru
          _
      $region40: #{tpu_custom_call.1} parent=5 // pred_fallthru
        _
      %p287 = scmp.le.s32.totalorder 1, %s21
      %p288 = scmp.lt.s32.totalorder %s21, 3
      %p289 = pnand %p287, %p288
      %p290 = pneg %p289
      // Predicated region
      $region45: #{tpu_custom_call.1} parent=5 // pred_check
        _
      $region46: #{tpu_custom_call.1} parent=5 // pred_check_branch
        %292 = sbr.rel (%p289) target = $region48
      $region47: #{tpu_custom_call.1} parent=5 // pred_region
        %s293 = ssub.s32 %s21, 1
        %s294 = sand.u32 %s34, 1
        %s295 = scalar_lea.sflag [#allocation4], %s294
        %s296 = sand.u32 %s34, 1
        %s297 = smul.addr %s296, 144
        %s298 = scalar_lea.vmem [#allocation3], %s297
        // Predicated region
        $region49: #{tpu_custom_call.1} parent=47 // pred_check
          %p299 = pneg %p47
        $region50: #{tpu_custom_call.1} parent=47 // pred_check_branch
          %301 = sbr.rel (%p299) target = $region52
        $region51: #{tpu_custom_call.1} parent=47 // pred_region
          %302 = dma.done %s295, 2304
        $region52: #{tpu_custom_call.1} parent=47 // pred_fallthru
          _
        // Predicated region
        $region53: #{tpu_custom_call.1} parent=47 // pred_check
          %p303 = pneg %p68
        $region54: #{tpu_custom_call.1} parent=47 // pred_check_branch
          %305 = sbr.rel (%p303) target = $region56
        $region55: #{tpu_custom_call.1} parent=47 // pred_region
          %306 = dma.done [#allocation7], 2048
        $region56: #{tpu_custom_call.1} parent=47 // pred_fallthru
          _
        // Predicated region
        $region57: #{tpu_custom_call.1} parent=47 // pred_check
          %p307 = pneg %p110
        $region58: #{tpu_custom_call.1} parent=47 // pred_check_branch
          %309 = sbr.rel (%p307) target = $region60
        $region59: #{tpu_custom_call.1} parent=47 // pred_region
          %310 = dma.done [#allocation7], 9216
        $region60: #{tpu_custom_call.1} parent=47 // pred_fallthru
          _
        // Predicated region
        $region61: #{tpu_custom_call.1} parent=47 // pred_check
          %p311 = pneg %p152
        $region62: #{tpu_custom_call.1} parent=47 // pred_check_branch
          %313 = sbr.rel (%p311) target = $region64
        $region63: #{tpu_custom_call.1} parent=47 // pred_region
          %314 = dma.done [#allocation10], 1024
        $region64: #{tpu_custom_call.1} parent=47 // pred_fallthru
          _
        %s315 = sand.u32 %s34, 1
        %s316 = scalar_lea.sflag [#allocation4], %s315
        %s317 = sand.u32 %s34, 1
        %s318 = smul.addr %s317, 144
        %s319 = scalar_lea.vmem [#allocation3], %s318
        %p320 = pneg %p47
        %p321 = pneg %p44
        %p322 = pneg %p68
        %p323 = pneg %p65
        %p324 = pneg %p89
        %p325 = pneg %p86
        %p326 = pneg %p110
        %p327 = pneg %p107
        %p328 = pneg %p131
        %p329 = pneg %p128
        %p330 = pneg %p152
        %p331 = pneg %p149
        %p332 = pneg %p173
        %p333 = pneg %p170
        %p334 = pneg %p199
        %p335 = pneg %p196
        %s336 = sand.u32 %s186, 1
        %s337 = scalar_lea.sflag [#allocation5], %s336
        %s338 = sand.u32 %s186, 1
        %s339 = smul.addr %s338, 144
        %s340 = scalar_lea.vmem [#allocation11], %s339
        %342 = vst [vmem:[#allocation2] sm:$0xf] 0
        %343 = vst [vmem:[#allocation2 + $0x4] sm:$0xf] 0
        %344 = vst [vmem:[#allocation2 + $0x8] sm:$0xf] 0
        %345 = vst [vmem:[#allocation2 + $0xc] sm:$0xf] 0
        %346 = vst [vmem:[#allocation2 + $0xa0] sm:$0xf] 0
        %347 = vst [vmem:[#allocation2 + $0xa4] sm:$0xf] 0
        %348 = vst [vmem:[#allocation2 + $0xa8] sm:$0xf] 0
        %349 = vst [vmem:[#allocation2 + $0xac] sm:$0xf] 0
        %v350 = vld [vmem:[%s298] sm:$0xf]
        %v351 = vld [vmem:[%s298 + $0x4] sm:$0xf]
        %v352 = vld [vmem:[%s298 + $0x8] sm:$0xf]
        %v353 = vld [vmem:[%s298 + $0xc] sm:$0xf]
        %v354 = vld [vmem:[%s298 + $0x10] sm:$0xf]
        %v355 = vld [vmem:[%s298 + $0x14] sm:$0xf]
        %v356 = vld [vmem:[%s298 + $0x18] sm:$0xf]
        %v357 = vld [vmem:[%s298 + $0x1c] sm:$0xf]
        %v358 = vld [vmem:[%s298 + $0x20] sm:$0xf]
        %v359 = vld [vmem:[%s298 + $0x24] sm:$0xf]
        %v360 = vld [vmem:[%s298 + $0x28] sm:$0xf]
        %v361 = vld [vmem:[%s298 + $0x2c] sm:$0xf]
        %v362 = vld [vmem:[%s298 + $0x30] sm:$0xf]
        %v363 = vld [vmem:[%s298 + $0x34] sm:$0xf]
        %v364 = vld [vmem:[%s298 + $0x38] sm:$0xf]
        %v365 = vld [vmem:[%s298 + $0x3c] sm:$0xf]
        %v366 = vld [vmem:[%s298 + $0x40] sm:$0xf]
        %v367 = vld [vmem:[%s298 + $0x44] sm:$0xf]
        %v368 = vld [vmem:[%s298 + $0x48] sm:$0xf]
        %v369 = vld [vmem:[%s298 + $0x4c] sm:$0xf]
        %v370 = vld [vmem:[%s298 + $0x50] sm:$0xf]
        %v371 = vld [vmem:[%s298 + $0x54] sm:$0xf]
        %v372 = vld [vmem:[%s298 + $0x58] sm:$0xf]
        %v373 = vld [vmem:[%s298 + $0x5c] sm:$0xf]
        %v374 = vld [vmem:[%s298 + $0x60] sm:$0xf]
        %v375 = vld [vmem:[%s298 + $0x64] sm:$0xf]
        %v376 = vld [vmem:[%s298 + $0x68] sm:$0xf]
        %v377 = vld [vmem:[%s298 + $0x6c] sm:$0xf]
        %v378 = vld [vmem:[%s298 + $0x70] sm:$0xf]
        %v379 = vld [vmem:[%s298 + $0x74] sm:$0xf]
        %v380 = vld [vmem:[%s298 + $0x78] sm:$0xf]
        %v381 = vld [vmem:[%s298 + $0x7c] sm:$0xf]
        %v382 = vld [vmem:[%s298 + $0x80] sm:$0xf]
        %v383 = vld [vmem:[%s298 + $0x84] sm:$0xf]
        %v384 = vld [vmem:[%s298 + $0x88] sm:$0xf]
        %v385 = vld [vmem:[%s298 + $0x8c] sm:$0xf]
        %v386 = vld [vmem:[#allocation6] sm:$0xff]
        %v387 = vld [vmem:[#allocation6 + $0x8] sm:$0xff]
        %v388 = vld [vmem:[#allocation6 + $0x10] sm:$0xff]
        %v389 = vld [vmem:[#allocation6 + $0x18] sm:$0xff]
        %v390 = vld [vmem:[#allocation6 + $0x20] sm:$0xff]
        %v391 = vld [vmem:[#allocation6 + $0x28] sm:$0xff]
        %v392 = vld [vmem:[#allocation6 + $0x30] sm:$0xff]
        %v393 = vld [vmem:[#allocation6 + $0x38] sm:$0xff]
        %v394 = vld [vmem:[#allocation6 + $0x40] sm:$0xff]
        %v395 = vld [vmem:[#allocation6 + $0x48] sm:$0xff]
        %v396 = vld [vmem:[#allocation6 + $0x50] sm:$0xff]
        %v397 = vld [vmem:[#allocation6 + $0x58] sm:$0xff]
        %v398 = vld [vmem:[#allocation6 + $0x60] sm:$0xff]
        %v399 = vld [vmem:[#allocation6 + $0x68] sm:$0xff]
        %v400 = vld [vmem:[#allocation6 + $0x70] sm:$0xff]
        %v401 = vld [vmem:[#allocation6 + $0x78] sm:$0xff]
        %v402 = vld [vmem:[%s2] sm:$0x3]
        %v404 = vlaneseq
        %v405 = vshrl.u32 %v404, 7
        %v406 = vsub.s32 0, %v405
        %v407 = vrot.slane %v402, %v406
        %v408 = vlaneseq
        %v409 = vshrl.u32 %v408, 7
        %v410 = vsub.s32 1, %v409
        %v411 = vrot.slane %v402, %v410
        %v450 = vunpack.c.l.b16 %v350
        %v451 = vunpack.c.l.b16 %v351
        %v452 = vunpack.c.l.b16 %v352
        %v453 = vunpack.c.l.b16 %v353
        %v454 = vunpack.c.l.b16 %v354
        %v455 = vunpack.c.l.b16 %v355
        %v456 = vunpack.c.l.b16 %v356
        %v457 = vunpack.c.l.b16 %v357
        %v458 = vunpack.c.l.b16 %v358
        %v459 = vunpack.c.l.b16 %v359
        %v460 = vunpack.c.l.b16 %v360
        %v461 = vunpack.c.l.b16 %v361
        %v462 = vunpack.c.l.b16 %v362
        %v463 = vunpack.c.l.b16 %v363
        %v464 = vunpack.c.l.b16 %v364
        %v465 = vunpack.c.l.b16 %v365
        %v466 = vunpack.c.l.b16 %v366
        %v467 = vunpack.c.l.b16 %v367
        %v468 = vunpack.c.l.b16 %v368
        %v469 = vunpack.c.l.b16 %v369
        %v470 = vunpack.c.l.b16 %v370
        %v471 = vunpack.c.l.b16 %v371
        %v472 = vunpack.c.l.b16 %v372
        %v473 = vunpack.c.l.b16 %v373
        %v474 = vunpack.c.l.b16 %v374
        %v475 = vunpack.c.l.b16 %v375
        %v476 = vunpack.c.l.b16 %v376
        %v477 = vunpack.c.l.b16 %v377
        %v478 = vunpack.c.l.b16 %v378
        %v479 = vunpack.c.l.b16 %v379
        %v480 = vunpack.c.l.b16 %v380
        %v481 = vunpack.c.l.b16 %v381
        %v482 = vunpack.c.l.b16 %v382
        %v483 = vunpack.c.l.b16 %v383
        %v484 = vunpack.c.l.b16 %v384
        %v485 = vunpack.c.l.b16 %v385
        %v486 = vpack.c.b16 %v451, %v450
        %v487 = vpack.c.b16 %v453, %v452
        %v488 = vpack.c.b16 %v455, %v454
        %v489 = vpack.c.b16 %v457, %v456
        %v490 = vpack.c.b16 %v459, %v458
        %v491 = vpack.c.b16 %v461, %v460
        %v492 = vpack.c.b16 %v463, %v462
        %v493 = vpack.c.b16 %v465, %v464
        %v494 = vpack.c.b16 %v467, %v466
        %v495 = vpack.c.b16 %v469, %v468
        %v496 = vpack.c.b16 %v471, %v470
        %v497 = vpack.c.b16 %v473, %v472
        %v498 = vpack.c.b16 %v475, %v474
        %v499 = vpack.c.b16 %v477, %v476
        %v500 = vpack.c.b16 %v479, %v478
        %v501 = vpack.c.b16 %v481, %v480
        %v502 = vpack.c.b16 %v483, %v482
        %v503 = vpack.c.b16 %v485, %v484
        %v538 = vunpack.c.l.b16 %v386
        %v539 = vunpack.c.h.b16 %v386
        %v540 = vunpack.c.l.b16 %v387
        %v541 = vunpack.c.h.b16 %v387
        %v542 = vunpack.c.l.b16 %v388
        %v543 = vunpack.c.h.b16 %v388
        %v544 = vunpack.c.l.b16 %v389
        %v545 = vunpack.c.h.b16 %v389
        %v546 = vunpack.c.l.b16 %v390
        %v547 = vunpack.c.h.b16 %v390
        %v548 = vunpack.c.l.b16 %v391
        %v549 = vunpack.c.h.b16 %v391
        %v550 = vunpack.c.l.b16 %v392
        %v551 = vunpack.c.h.b16 %v392
        %v552 = vunpack.c.l.b16 %v393
        %v553 = vunpack.c.h.b16 %v393
        %v554 = vunpack.c.l.b16 %v394
        %v555 = vunpack.c.h.b16 %v394
        %v556 = vunpack.c.l.b16 %v395
        %v557 = vunpack.c.h.b16 %v395
        %v558 = vunpack.c.l.b16 %v396
        %v559 = vunpack.c.h.b16 %v396
        %v560 = vunpack.c.l.b16 %v397
        %v561 = vunpack.c.h.b16 %v397
        %v562 = vunpack.c.l.b16 %v398
        %v563 = vunpack.c.h.b16 %v398
        %v564 = vunpack.c.l.b16 %v399
        %v565 = vunpack.c.h.b16 %v399
        %v566 = vunpack.c.l.b16 %v400
        %v567 = vunpack.c.h.b16 %v400
        %v568 = vunpack.c.l.b16 %v401
        %v569 = vunpack.c.h.b16 %v401
        %v570 = vpack.c.b16 %v540, %v538
        %v571 = vpack.c.b16 %v541, %v539
        %v572 = vpack.c.b16 %v544, %v542
        %v573 = vpack.c.b16 %v545, %v543
        %v574 = vpack.c.b16 %v548, %v546
        %v575 = vpack.c.b16 %v549, %v547
        %v576 = vpack.c.b16 %v552, %v550
        %v577 = vpack.c.b16 %v553, %v551
        %v578 = vpack.c.b16 %v556, %v554
        %v579 = vpack.c.b16 %v557, %v555
        %v580 = vpack.c.b16 %v560, %v558
        %v581 = vpack.c.b16 %v561, %v559
        %v582 = vpack.c.b16 %v564, %v562
        %v583 = vpack.c.b16 %v565, %v563
        %v584 = vpack.c.b16 %v568, %v566
        %v585 = vpack.c.b16 %v569, %v567
        %602 = vmatprep.subr.bf16.mxu0 %v585
        %603 = vmatpush1.bf16.msra.mxu0 %v584
        %604 = vmatprep.subr.bf16.mxu0 %v583
        %605 = vmatpush1.bf16.msra.mxu0 %v582
        %606 = vmatprep.subr.bf16.mxu0 %v581
        %607 = vmatpush1.bf16.msra.mxu0 %v580
        %608 = vmatprep.subr.bf16.mxu0 %v579
        %609 = vmatpush1.bf16.msra.mxu0 %v578
        %610 = vmatprep.subr.bf16.mxu0 %v577
        %611 = vmatpush1.bf16.msra.mxu0 %v576
        %612 = vmatprep.subr.bf16.mxu0 %v575
        %613 = vmatpush1.bf16.msra.mxu0 %v574
        %614 = vmatprep.subr.bf16.mxu0 %v573
        %615 = vmatpush1.bf16.msra.mxu0 %v572
        %616 = vmatprep.subr.bf16.mxu0 %v571
        %617 = vmatpush1.bf16.msra.mxu0 %v570
        %618 = vmatprep.subr.bf16.mxu0 0
        %619 = vmatpush2.bf16.msra.mxu0 0
        %620 = vmatprep.subr.bf16.mxu0 0
        %621 = vmatpush2.bf16.msra.mxu0 0
        %622 = vmatprep.subr.bf16.mxu0 0
        %623 = vmatpush2.bf16.msra.mxu0 0
        %624 = vmatprep.subr.bf16.mxu0 0
        %625 = vmatpush2.bf16.msra.mxu0 0
        %626 = vmatprep.subr.bf16.mxu0 0
        %627 = vmatpush2.bf16.msra.mxu0 0
        %628 = vmatprep.subr.bf16.mxu0 0
        %629 = vmatpush2.bf16.msra.mxu0 0
        %630 = vmatprep.subr.bf16.mxu0 0
        %631 = vmatpush2.bf16.msra.mxu0 0
        %632 = vmatprep.subr.bf16.mxu0 0
        %633 = vmatpush2.bf16.msra.mxu0 0
        %634 = vmatprep.mubr.bf16.mxu0 0
        %635 = vmatmul.mubr.bf16.gmra.mxu0 %v486
        %v636 = vpop.f32.mrf.mxu0
        %v637 = vadd.f32 %v407, %v636
        %v638 = vpop.f32.mrf.mxu0
        %v639 = vadd.f32 %v411, %v638
        %v640 = vpop.f32.mrf.mxu0
        %v641 = vadd.f32 %v407, %v640
        %v642 = vpop.f32.mrf.mxu0
        %v643 = vadd.f32 %v411, %v642
        %644 = vmatprep.mubr.bf16.mxu0 0
        %645 = vmatmul.mubr.bf16.gmra.mxu0 %v487
        %v646 = vpop.f32.mrf.mxu0
        %v647 = vadd.f32 %v407, %v646
        %v648 = vpop.f32.mrf.mxu0
        %v649 = vadd.f32 %v411, %v648
        %v650 = vpop.f32.mrf.mxu0
        %v651 = vadd.f32 %v407, %v650
        %v652 = vpop.f32.mrf.mxu0
        %v653 = vadd.f32 %v411, %v652
        %654 = vmatprep.mubr.bf16.mxu0 0
        %655 = vmatmul.mubr.bf16.gmra.mxu0 %v488
        %v656 = vpop.f32.mrf.mxu0
        %v657 = vadd.f32 %v407, %v656
        %v658 = vpop.f32.mrf.mxu0
        %v659 = vadd.f32 %v411, %v658
        %v660 = vpop.f32.mrf.mxu0
        %v661 = vadd.f32 %v407, %v660
        %v662 = vpop.f32.mrf.mxu0
        %v663 = vadd.f32 %v411, %v662
        %664 = vmatprep.mubr.bf16.mxu0 0
        %665 = vmatmul.mubr.bf16.gmra.mxu0 %v489
        %v666 = vpop.f32.mrf.mxu0
        %v667 = vadd.f32 %v407, %v666
        %v668 = vpop.f32.mrf.mxu0
        %v669 = vadd.f32 %v411, %v668
        %v670 = vpop.f32.mrf.mxu0
        %v671 = vadd.f32 %v407, %v670
        %v672 = vpop.f32.mrf.mxu0
        %v673 = vadd.f32 %v411, %v672
        %674 = vmatprep.mubr.bf16.mxu0 0
        %675 = vmatmul.mubr.bf16.gmra.mxu0 %v490
        %v676 = vpop.f32.mrf.mxu0
        %v677 = vadd.f32 %v407, %v676
        %v678 = vpop.f32.mrf.mxu0
        %v679 = vadd.f32 %v411, %v678
        %v680 = vpop.f32.mrf.mxu0
        %v681 = vadd.f32 %v407, %v680
        %v682 = vpop.f32.mrf.mxu0
        %v683 = vadd.f32 %v411, %v682
        %684 = vmatprep.mubr.bf16.mxu0 0
        %685 = vmatmul.mubr.bf16.gmra.mxu0 %v491
        %v686 = vpop.f32.mrf.mxu0
        %v687 = vadd.f32 %v407, %v686
        %v688 = vpop.f32.mrf.mxu0
        %v689 = vadd.f32 %v411, %v688
        %v690 = vpop.f32.mrf.mxu0
        %v691 = vadd.f32 %v407, %v690
        %v692 = vpop.f32.mrf.mxu0
        %v693 = vadd.f32 %v411, %v692
        %694 = vmatprep.mubr.bf16.mxu0 0
        %695 = vmatmul.mubr.bf16.gmra.mxu0 %v492
        %v696 = vpop.f32.mrf.mxu0
        %v697 = vadd.f32 %v407, %v696
        %v698 = vpop.f32.mrf.mxu0
        %v699 = vadd.f32 %v411, %v698
        %v700 = vpop.f32.mrf.mxu0
        %v701 = vadd.f32 %v407, %v700
        %v702 = vpop.f32.mrf.mxu0
        %v703 = vadd.f32 %v411, %v702
        %704 = vmatprep.mubr.bf16.mxu0 0
        %705 = vmatmul.mubr.bf16.gmra.mxu0 %v493
        %v706 = vpop.f32.mrf.mxu0
        %v707 = vadd.f32 %v407, %v706
        %v708 = vpop.f32.mrf.mxu0
        %v709 = vadd.f32 %v411, %v708
        %v710 = vpop.f32.mrf.mxu0
        %v711 = vadd.f32 %v407, %v710
        %v712 = vpop.f32.mrf.mxu0
        %v713 = vadd.f32 %v411, %v712
        %714 = vmatprep.mubr.bf16.mxu0 0
        %715 = vmatmul.mubr.bf16.gmra.mxu0 %v494
        %v716 = vpop.f32.mrf.mxu0
        %v717 = vadd.f32 %v407, %v716
        %v718 = vpop.f32.mrf.mxu0
        %v719 = vadd.f32 %v411, %v718
        %v720 = vpop.f32.mrf.mxu0
        %v721 = vadd.f32 %v407, %v720
        %v722 = vpop.f32.mrf.mxu0
        %v723 = vadd.f32 %v411, %v722
        %724 = vmatprep.mubr.bf16.mxu0 0
        %725 = vmatmul.mubr.bf16.gmra.mxu0 %v495
        %v726 = vpop.f32.mrf.mxu0
        %v727 = vadd.f32 %v407, %v726
        %v728 = vpop.f32.mrf.mxu0
        %v729 = vadd.f32 %v411, %v728
        %v730 = vpop.f32.mrf.mxu0
        %v731 = vadd.f32 %v407, %v730
        %v732 = vpop.f32.mrf.mxu0
        %v733 = vadd.f32 %v411, %v732
        %734 = vmatprep.mubr.bf16.mxu0 0
        %735 = vmatmul.mubr.bf16.gmra.mxu0 %v496
        %v736 = vpop.f32.mrf.mxu0
        %v737 = vadd.f32 %v407, %v736
        %v738 = vpop.f32.mrf.mxu0
        %v739 = vadd.f32 %v411, %v738
        %v740 = vpop.f32.mrf.mxu0
        %v741 = vadd.f32 %v407, %v740
        %v742 = vpop.f32.mrf.mxu0
        %v743 = vadd.f32 %v411, %v742
        %744 = vmatprep.mubr.bf16.mxu0 0
        %745 = vmatmul.mubr.bf16.gmra.mxu0 %v497
        %v746 = vpop.f32.mrf.mxu0
        %v747 = vadd.f32 %v407, %v746
        %v748 = vpop.f32.mrf.mxu0
        %v749 = vadd.f32 %v411, %v748
        %v750 = vpop.f32.mrf.mxu0
        %v751 = vadd.f32 %v407, %v750
        %v752 = vpop.f32.mrf.mxu0
        %v753 = vadd.f32 %v411, %v752
        %754 = vmatprep.mubr.bf16.mxu0 0
        %755 = vmatmul.mubr.bf16.gmra.mxu0 %v498
        %v756 = vpop.f32.mrf.mxu0
        %v757 = vadd.f32 %v407, %v756
        %v758 = vpop.f32.mrf.mxu0
        %v759 = vadd.f32 %v411, %v758
        %v760 = vpop.f32.mrf.mxu0
        %v761 = vadd.f32 %v407, %v760
        %v762 = vpop.f32.mrf.mxu0
        %v763 = vadd.f32 %v411, %v762
        %764 = vmatprep.mubr.bf16.mxu0 0
        %765 = vmatmul.mubr.bf16.gmra.mxu0 %v499
        %v766 = vpop.f32.mrf.mxu0
        %v767 = vadd.f32 %v407, %v766
        %v768 = vpop.f32.mrf.mxu0
        %v769 = vadd.f32 %v411, %v768
        %v770 = vpop.f32.mrf.mxu0
        %v771 = vadd.f32 %v407, %v770
        %v772 = vpop.f32.mrf.mxu0
        %v773 = vadd.f32 %v411, %v772
        %774 = vmatprep.mubr.bf16.mxu0 0
        %775 = vmatmul.mubr.bf16.gmra.mxu0 %v500
        %v776 = vpop.f32.mrf.mxu0
        %v777 = vadd.f32 %v407, %v776
        %v778 = vpop.f32.mrf.mxu0
        %v779 = vadd.f32 %v411, %v778
        %v780 = vpop.f32.mrf.mxu0
        %v781 = vadd.f32 %v407, %v780
        %v782 = vpop.f32.mrf.mxu0
        %v783 = vadd.f32 %v411, %v782
        %784 = vmatprep.mubr.bf16.mxu0 0
        %785 = vmatmul.mubr.bf16.gmra.mxu0 %v501
        %v786 = vpop.f32.mrf.mxu0
        %v787 = vadd.f32 %v407, %v786
        %v788 = vpop.f32.mrf.mxu0
        %v789 = vadd.f32 %v411, %v788
        %v790 = vpop.f32.mrf.mxu0
        %v791 = vadd.f32 %v407, %v790
        %v792 = vpop.f32.mrf.mxu0
        %v793 = vadd.f32 %v411, %v792
        %794 = vmatprep.mubr.bf16.mxu0 0
        %795 = vmatmul.mubr.bf16.gmra.mxu0 %v502
        %v796 = vpop.f32.mrf.mxu0
        %v797 = vadd.f32 %v407, %v796
        %v798 = vpop.f32.mrf.mxu0
        %v799 = vadd.f32 %v411, %v798
        %v800 = vpop.f32.mrf.mxu0
        %v801 = vadd.f32 %v407, %v800
        %v802 = vpop.f32.mrf.mxu0
        %v803 = vadd.f32 %v411, %v802
        %804 = vmatprep.mubr.bf16.mxu0 0
        %805 = vmatmul.mubr.bf16.gmra.mxu0 %v503
        %v806 = vpop.f32.mrf.mxu0
        %v807 = vadd.f32 %v407, %v806
        %v808 = vpop.f32.mrf.mxu0
        %v809 = vadd.f32 %v411, %v808
        %v810 = vpop.f32.mrf.mxu0
        %v811 = vadd.f32 %v407, %v810
        %v812 = vpop.f32.mrf.mxu0
        %v813 = vadd.f32 %v411, %v812
        %814 = vdwg.mxu0
        %v815 = vlaneseq
        %v816 = vshrl.u32 %v815, 7
        %v817 = vadd.s32 %v816, 8
        %v818 = vadd.s32 %v816, 16
        %v819 = vadd.s32 %v816, 24
        %v820 = vadd.s32 %v816, 32
        %v821 = vadd.s32 %v816, 40
        %v822 = vadd.s32 %v816, 48
        %v823 = vadd.s32 %v816, 56
        %v824 = vadd.s32 %v816, 64
        %v825 = vadd.s32 %v816, 72
        %v826 = vadd.s32 %v816, 80
        %v827 = vadd.s32 %v816, 88
        %v828 = vadd.s32 %v816, 96
        %v829 = vadd.s32 %v816, 104
        %v830 = vadd.s32 %v816, 112
        %v831 = vadd.s32 %v816, 120
        %v832 = vadd.s32 %v816, 128
        %v833 = vadd.s32 %v816, 136
        %v834 = vadd.s32 %v816, 144
        %v835 = vadd.s32 %v816, 152
        %v836 = vadd.s32 %v816, 160
        %v837 = vadd.s32 %v816, 168
        %v838 = vadd.s32 %v816, 176
        %v839 = vadd.s32 %v816, 184
        %v840 = vadd.s32 %v816, 192
        %v841 = vadd.s32 %v816, 200
        %v842 = vadd.s32 %v816, 208
        %v843 = vadd.s32 %v816, 216
        %v844 = vadd.s32 %v816, 224
        %v845 = vadd.s32 %v816, 232
        %v846 = vadd.s32 %v816, 240
        %v847 = vadd.s32 %v816, 248
        %v848 = vadd.s32 %v816, 256
        %v849 = vadd.s32 %v816, 264
        %v850 = vadd.s32 %v816, 272
        %v851 = vadd.s32 %v816, 280
        %vm852 = vcmp.lt.s32.totalorder %v816, 0
        %v853 = vsub.s32 0, %v816
        %v854 = vsel %vm852, %v853, %v816
        %v855 = vmul.u32.u64.compose %v854, 3817748708
        %v856 = vextract.low.u32 %v855
        %v857 = vextract.high.u32 %v855
        %v858 = vshrl.u32 %v857, 4
        %v859 = vmul.u32 %v858, 18
        %v860 = vsub.s32 %v854, %v859
        %v861 = vsub.s32 0, %v860
        %v862 = vsel %vm852, %v861, %v860
        %vm863 = vcmp.lt.s32.totalorder %v817, 0
        %v864 = vsub.s32 0, %v817
        %v865 = vsel %vm863, %v864, %v817
        %v866 = vmul.u32.u64.compose %v865, 3817748708
        %v867 = vextract.low.u32 %v866
        %v868 = vextract.high.u32 %v866
        %v869 = vshrl.u32 %v868, 4
        %v870 = vmul.u32 %v869, 18
        %v871 = vsub.s32 %v865, %v870
        %v872 = vsub.s32 0, %v871
        %v873 = vsel %vm863, %v872, %v871
        %vm874 = vcmp.lt.s32.totalorder %v818, 0
        %v875 = vsub.s32 0, %v818
        %v876 = vsel %vm874, %v875, %v818
        %v877 = vmul.u32.u64.compose %v876, 3817748708
        %v878 = vextract.low.u32 %v877
        %v879 = vextract.high.u32 %v877
        %v880 = vshrl.u32 %v879, 4
        %v881 = vmul.u32 %v880, 18
        %v882 = vsub.s32 %v876, %v881
        %v883 = vsub.s32 0, %v882
        %v884 = vsel %vm874, %v883, %v882
        %vm885 = vcmp.lt.s32.totalorder %v819, 0
        %v886 = vsub.s32 0, %v819
        %v887 = vsel %vm885, %v886, %v819
        %v888 = vmul.u32.u64.compose %v887, 3817748708
        %v889 = vextract.low.u32 %v888
        %v890 = vextract.high.u32 %v888
        %v891 = vshrl.u32 %v890, 4
        %v892 = vmul.u32 %v891, 18
        %v893 = vsub.s32 %v887, %v892
        %v894 = vsub.s32 0, %v893
        %v895 = vsel %vm885, %v894, %v893
        %vm896 = vcmp.lt.s32.totalorder %v820, 0
        %v897 = vsub.s32 0, %v820
        %v898 = vsel %vm896, %v897, %v820
        %v899 = vmul.u32.u64.compose %v898, 3817748708
        %v900 = vextract.low.u32 %v899
        %v901 = vextract.high.u32 %v899
        %v902 = vshrl.u32 %v901, 4
        %v903 = vmul.u32 %v902, 18
        %v904 = vsub.s32 %v898, %v903
        %v905 = vsub.s32 0, %v904
        %v906 = vsel %vm896, %v905, %v904
        %vm907 = vcmp.lt.s32.totalorder %v821, 0
        %v908 = vsub.s32 0, %v821
        %v909 = vsel %vm907, %v908, %v821
        %v910 = vmul.u32.u64.compose %v909, 3817748708
        %v911 = vextract.low.u32 %v910
        %v912 = vextract.high.u32 %v910
        %v913 = vshrl.u32 %v912, 4
        %v914 = vmul.u32 %v913, 18
        %v915 = vsub.s32 %v909, %v914
        %v916 = vsub.s32 0, %v915
        %v917 = vsel %vm907, %v916, %v915
        %vm918 = vcmp.lt.s32.totalorder %v822, 0
        %v919 = vsub.s32 0, %v822
        %v920 = vsel %vm918, %v919, %v822
        %v921 = vmul.u32.u64.compose %v920, 3817748708
        %v922 = vextract.low.u32 %v921
        %v923 = vextract.high.u32 %v921
        %v924 = vshrl.u32 %v923, 4
        %v925 = vmul.u32 %v924, 18
        %v926 = vsub.s32 %v920, %v925
        %v927 = vsub.s32 0, %v926
        %v928 = vsel %vm918, %v927, %v926
        %vm929 = vcmp.lt.s32.totalorder %v823, 0
        %v930 = vsub.s32 0, %v823
        %v931 = vsel %vm929, %v930, %v823
        %v932 = vmul.u32.u64.compose %v931, 3817748708
        %v933 = vextract.low.u32 %v932
        %v934 = vextract.high.u32 %v932
        %v935 = vshrl.u32 %v934, 4
        %v936 = vmul.u32 %v935, 18
        %v937 = vsub.s32 %v931, %v936
        %v938 = vsub.s32 0, %v937
        %v939 = vsel %vm929, %v938, %v937
        %vm940 = vcmp.lt.s32.totalorder %v824, 0
        %v941 = vsub.s32 0, %v824
        %v942 = vsel %vm940, %v941, %v824
        %v943 = vmul.u32.u64.compose %v942, 3817748708
        %v944 = vextract.low.u32 %v943
        %v945 = vextract.high.u32 %v943
        %v946 = vshrl.u32 %v945, 4
        %v947 = vmul.u32 %v946, 18
        %v948 = vsub.s32 %v942, %v947
        %v949 = vsub.s32 0, %v948
        %v950 = vsel %vm940, %v949, %v948
        %vm951 = vcmp.lt.s32.totalorder %v825, 0
        %v952 = vsub.s32 0, %v825
        %v953 = vsel %vm951, %v952, %v825
        %v954 = vmul.u32.u64.compose %v953, 3817748708
        %v955 = vextract.low.u32 %v954
        %v956 = vextract.high.u32 %v954
        %v957 = vshrl.u32 %v956, 4
        %v958 = vmul.u32 %v957, 18
        %v959 = vsub.s32 %v953, %v958
        %v960 = vsub.s32 0, %v959
        %v961 = vsel %vm951, %v960, %v959
        %vm962 = vcmp.lt.s32.totalorder %v826, 0
        %v963 = vsub.s32 0, %v826
        %v964 = vsel %vm962, %v963, %v826
        %v965 = vmul.u32.u64.compose %v964, 3817748708
        %v966 = vextract.low.u32 %v965
        %v967 = vextract.high.u32 %v965
        %v968 = vshrl.u32 %v967, 4
        %v969 = vmul.u32 %v968, 18
        %v970 = vsub.s32 %v964, %v969
        %v971 = vsub.s32 0, %v970
        %v972 = vsel %vm962, %v971, %v970
        %vm973 = vcmp.lt.s32.totalorder %v827, 0
        %v974 = vsub.s32 0, %v827
        %v975 = vsel %vm973, %v974, %v827
        %v976 = vmul.u32.u64.compose %v975, 3817748708
        %v977 = vextract.low.u32 %v976
        %v978 = vextract.high.u32 %v976
        %v979 = vshrl.u32 %v978, 4
        %v980 = vmul.u32 %v979, 18
        %v981 = vsub.s32 %v975, %v980
        %v982 = vsub.s32 0, %v981
        %v983 = vsel %vm973, %v982, %v981
        %vm984 = vcmp.lt.s32.totalorder %v828, 0
        %v985 = vsub.s32 0, %v828
        %v986 = vsel %vm984, %v985, %v828
        %v987 = vmul.u32.u64.compose %v986, 3817748708
        %v988 = vextract.low.u32 %v987
        %v989 = vextract.high.u32 %v987
        %v990 = vshrl.u32 %v989, 4
        %v991 = vmul.u32 %v990, 18
        %v992 = vsub.s32 %v986, %v991
        %v993 = vsub.s32 0, %v992
        %v994 = vsel %vm984, %v993, %v992
        %vm995 = vcmp.lt.s32.totalorder %v829, 0
        %v996 = vsub.s32 0, %v829
        %v997 = vsel %vm995, %v996, %v829
        %v998 = vmul.u32.u64.compose %v997, 3817748708
        %v999 = vextract.low.u32 %v998
        %v1000 = vextract.high.u32 %v998
        %v1001 = vshrl.u32 %v1000, 4
        %v1002 = vmul.u32 %v1001, 18
        %v1003 = vsub.s32 %v997, %v1002
        %v1004 = vsub.s32 0, %v1003
        %v1005 = vsel %vm995, %v1004, %v1003
        %vm1006 = vcmp.lt.s32.totalorder %v830, 0
        %v1007 = vsub.s32 0, %v830
        %v1008 = vsel %vm1006, %v1007, %v830
        %v1009 = vmul.u32.u64.compose %v1008, 3817748708
        %v1010 = vextract.low.u32 %v1009
        %v1011 = vextract.high.u32 %v1009
        %v1012 = vshrl.u32 %v1011, 4
        %v1013 = vmul.u32 %v1012, 18
        %v1014 = vsub.s32 %v1008, %v1013
        %v1015 = vsub.s32 0, %v1014
        %v1016 = vsel %vm1006, %v1015, %v1014
        %vm1017 = vcmp.lt.s32.totalorder %v831, 0
        %v1018 = vsub.s32 0, %v831
        %v1019 = vsel %vm1017, %v1018, %v831
        %v1020 = vmul.u32.u64.compose %v1019, 3817748708
        %v1021 = vextract.low.u32 %v1020
        %v1022 = vextract.high.u32 %v1020
        %v1023 = vshrl.u32 %v1022, 4
        %v1024 = vmul.u32 %v1023, 18
        %v1025 = vsub.s32 %v1019, %v1024
        %v1026 = vsub.s32 0, %v1025
        %v1027 = vsel %vm1017, %v1026, %v1025
        %vm1028 = vcmp.lt.s32.totalorder %v832, 0
        %v1029 = vsub.s32 0, %v832
        %v1030 = vsel %vm1028, %v1029, %v832
        %v1031 = vmul.u32.u64.compose %v1030, 3817748708
        %v1032 = vextract.low.u32 %v1031
        %v1033 = vextract.high.u32 %v1031
        %v1034 = vshrl.u32 %v1033, 4
        %v1035 = vmul.u32 %v1034, 18
        %v1036 = vsub.s32 %v1030, %v1035
        %v1037 = vsub.s32 0, %v1036
        %v1038 = vsel %vm1028, %v1037, %v1036
        %vm1039 = vcmp.lt.s32.totalorder %v833, 0
        %v1040 = vsub.s32 0, %v833
        %v1041 = vsel %vm1039, %v1040, %v833
        %v1042 = vmul.u32.u64.compose %v1041, 3817748708
        %v1043 = vextract.low.u32 %v1042
        %v1044 = vextract.high.u32 %v1042
        %v1045 = vshrl.u32 %v1044, 4
        %v1046 = vmul.u32 %v1045, 18
        %v1047 = vsub.s32 %v1041, %v1046
        %v1048 = vsub.s32 0, %v1047
        %v1049 = vsel %vm1039, %v1048, %v1047
        %vm1050 = vcmp.lt.s32.totalorder %v834, 0
        %v1051 = vsub.s32 0, %v834
        %v1052 = vsel %vm1050, %v1051, %v834
        %v1053 = vmul.u32.u64.compose %v1052, 3817748708
        %v1054 = vextract.low.u32 %v1053
        %v1055 = vextract.high.u32 %v1053
        %v1056 = vshrl.u32 %v1055, 4
        %v1057 = vmul.u32 %v1056, 18
        %v1058 = vsub.s32 %v1052, %v1057
        %v1059 = vsub.s32 0, %v1058
        %v1060 = vsel %vm1050, %v1059, %v1058
        %vm1061 = vcmp.lt.s32.totalorder %v835, 0
        %v1062 = vsub.s32 0, %v835
        %v1063 = vsel %vm1061, %v1062, %v835
        %v1064 = vmul.u32.u64.compose %v1063, 3817748708
        %v1065 = vextract.low.u32 %v1064
        %v1066 = vextract.high.u32 %v1064
        %v1067 = vshrl.u32 %v1066, 4
        %v1068 = vmul.u32 %v1067, 18
        %v1069 = vsub.s32 %v1063, %v1068
        %v1070 = vsub.s32 0, %v1069
        %v1071 = vsel %vm1061, %v1070, %v1069
        %vm1072 = vcmp.lt.s32.totalorder %v836, 0
        %v1073 = vsub.s32 0, %v836
        %v1074 = vsel %vm1072, %v1073, %v836
        %v1075 = vmul.u32.u64.compose %v1074, 3817748708
        %v1076 = vextract.low.u32 %v1075
        %v1077 = vextract.high.u32 %v1075
        %v1078 = vshrl.u32 %v1077, 4
        %v1079 = vmul.u32 %v1078, 18
        %v1080 = vsub.s32 %v1074, %v1079
        %v1081 = vsub.s32 0, %v1080
        %v1082 = vsel %vm1072, %v1081, %v1080
        %vm1083 = vcmp.lt.s32.totalorder %v837, 0
        %v1084 = vsub.s32 0, %v837
        %v1085 = vsel %vm1083, %v1084, %v837
        %v1086 = vmul.u32.u64.compose %v1085, 3817748708
        %v1087 = vextract.low.u32 %v1086
        %v1088 = vextract.high.u32 %v1086
        %v1089 = vshrl.u32 %v1088, 4
        %v1090 = vmul.u32 %v1089, 18
        %v1091 = vsub.s32 %v1085, %v1090
        %v1092 = vsub.s32 0, %v1091
        %v1093 = vsel %vm1083, %v1092, %v1091
        %vm1094 = vcmp.lt.s32.totalorder %v838, 0
        %v1095 = vsub.s32 0, %v838
        %v1096 = vsel %vm1094, %v1095, %v838
        %v1097 = vmul.u32.u64.compose %v1096, 3817748708
        %v1098 = vextract.low.u32 %v1097
        %v1099 = vextract.high.u32 %v1097
        %v1100 = vshrl.u32 %v1099, 4
        %v1101 = vmul.u32 %v1100, 18
        %v1102 = vsub.s32 %v1096, %v1101
        %v1103 = vsub.s32 0, %v1102
        %v1104 = vsel %vm1094, %v1103, %v1102
        %vm1105 = vcmp.lt.s32.totalorder %v839, 0
        %v1106 = vsub.s32 0, %v839
        %v1107 = vsel %vm1105, %v1106, %v839
        %v1108 = vmul.u32.u64.compose %v1107, 3817748708
        %v1109 = vextract.low.u32 %v1108
        %v1110 = vextract.high.u32 %v1108
        %v1111 = vshrl.u32 %v1110, 4
        %v1112 = vmul.u32 %v1111, 18
        %v1113 = vsub.s32 %v1107, %v1112
        %v1114 = vsub.s32 0, %v1113
        %v1115 = vsel %vm1105, %v1114, %v1113
        %vm1116 = vcmp.lt.s32.totalorder %v840, 0
        %v1117 = vsub.s32 0, %v840
        %v1118 = vsel %vm1116, %v1117, %v840
        %v1119 = vmul.u32.u64.compose %v1118, 3817748708
        %v1120 = vextract.low.u32 %v1119
        %v1121 = vextract.high.u32 %v1119
        %v1122 = vshrl.u32 %v1121, 4
        %v1123 = vmul.u32 %v1122, 18
        %v1124 = vsub.s32 %v1118, %v1123
        %v1125 = vsub.s32 0, %v1124
        %v1126 = vsel %vm1116, %v1125, %v1124
        %vm1127 = vcmp.lt.s32.totalorder %v841, 0
        %v1128 = vsub.s32 0, %v841
        %v1129 = vsel %vm1127, %v1128, %v841
        %v1130 = vmul.u32.u64.compose %v1129, 3817748708
        %v1131 = vextract.low.u32 %v1130
        %v1132 = vextract.high.u32 %v1130
        %v1133 = vshrl.u32 %v1132, 4
        %v1134 = vmul.u32 %v1133, 18
        %v1135 = vsub.s32 %v1129, %v1134
        %v1136 = vsub.s32 0, %v1135
        %v1137 = vsel %vm1127, %v1136, %v1135
        %vm1138 = vcmp.lt.s32.totalorder %v842, 0
        %v1139 = vsub.s32 0, %v842
        %v1140 = vsel %vm1138, %v1139, %v842
        %v1141 = vmul.u32.u64.compose %v1140, 3817748708
        %v1142 = vextract.low.u32 %v1141
        %v1143 = vextract.high.u32 %v1141
        %v1144 = vshrl.u32 %v1143, 4
        %v1145 = vmul.u32 %v1144, 18
        %v1146 = vsub.s32 %v1140, %v1145
        %v1147 = vsub.s32 0, %v1146
        %v1148 = vsel %vm1138, %v1147, %v1146
        %vm1149 = vcmp.lt.s32.totalorder %v843, 0
        %v1150 = vsub.s32 0, %v843
        %v1151 = vsel %vm1149, %v1150, %v843
        %v1152 = vmul.u32.u64.compose %v1151, 3817748708
        %v1153 = vextract.low.u32 %v1152
        %v1154 = vextract.high.u32 %v1152
        %v1155 = vshrl.u32 %v1154, 4
        %v1156 = vmul.u32 %v1155, 18
        %v1157 = vsub.s32 %v1151, %v1156
        %v1158 = vsub.s32 0, %v1157
        %v1159 = vsel %vm1149, %v1158, %v1157
        %vm1160 = vcmp.lt.s32.totalorder %v844, 0
        %v1161 = vsub.s32 0, %v844
        %v1162 = vsel %vm1160, %v1161, %v844
        %v1163 = vmul.u32.u64.compose %v1162, 3817748708
        %v1164 = vextract.low.u32 %v1163
        %v1165 = vextract.high.u32 %v1163
        %v1166 = vshrl.u32 %v1165, 4
        %v1167 = vmul.u32 %v1166, 18
        %v1168 = vsub.s32 %v1162, %v1167
        %v1169 = vsub.s32 0, %v1168
        %v1170 = vsel %vm1160, %v1169, %v1168
        %vm1171 = vcmp.lt.s32.totalorder %v845, 0
        %v1172 = vsub.s32 0, %v845
        %v1173 = vsel %vm1171, %v1172, %v845
        %v1174 = vmul.u32.u64.compose %v1173, 3817748708
        %v1175 = vextract.low.u32 %v1174
        %v1176 = vextract.high.u32 %v1174
        %v1177 = vshrl.u32 %v1176, 4
        %v1178 = vmul.u32 %v1177, 18
        %v1179 = vsub.s32 %v1173, %v1178
        %v1180 = vsub.s32 0, %v1179
        %v1181 = vsel %vm1171, %v1180, %v1179
        %vm1182 = vcmp.lt.s32.totalorder %v846, 0
        %v1183 = vsub.s32 0, %v846
        %v1184 = vsel %vm1182, %v1183, %v846
        %v1185 = vmul.u32.u64.compose %v1184, 3817748708
        %v1186 = vextract.low.u32 %v1185
        %v1187 = vextract.high.u32 %v1185
        %v1188 = vshrl.u32 %v1187, 4
        %v1189 = vmul.u32 %v1188, 18
        %v1190 = vsub.s32 %v1184, %v1189
        %v1191 = vsub.s32 0, %v1190
        %v1192 = vsel %vm1182, %v1191, %v1190
        %vm1193 = vcmp.lt.s32.totalorder %v847, 0
        %v1194 = vsub.s32 0, %v847
        %v1195 = vsel %vm1193, %v1194, %v847
        %v1196 = vmul.u32.u64.compose %v1195, 3817748708
        %v1197 = vextract.low.u32 %v1196
        %v1198 = vextract.high.u32 %v1196
        %v1199 = vshrl.u32 %v1198, 4
        %v1200 = vmul.u32 %v1199, 18
        %v1201 = vsub.s32 %v1195, %v1200
        %v1202 = vsub.s32 0, %v1201
        %v1203 = vsel %vm1193, %v1202, %v1201
        %vm1204 = vcmp.lt.s32.totalorder %v848, 0
        %v1205 = vsub.s32 0, %v848
        %v1206 = vsel %vm1204, %v1205, %v848
        %v1207 = vmul.u32.u64.compose %v1206, 3817748708
        %v1208 = vextract.low.u32 %v1207
        %v1209 = vextract.high.u32 %v1207
        %v1210 = vshrl.u32 %v1209, 4
        %v1211 = vmul.u32 %v1210, 18
        %v1212 = vsub.s32 %v1206, %v1211
        %v1213 = vsub.s32 0, %v1212
        %v1214 = vsel %vm1204, %v1213, %v1212
        %vm1215 = vcmp.lt.s32.totalorder %v849, 0
        %v1216 = vsub.s32 0, %v849
        %v1217 = vsel %vm1215, %v1216, %v849
        %v1218 = vmul.u32.u64.compose %v1217, 3817748708
        %v1219 = vextract.low.u32 %v1218
        %v1220 = vextract.high.u32 %v1218
        %v1221 = vshrl.u32 %v1220, 4
        %v1222 = vmul.u32 %v1221, 18
        %v1223 = vsub.s32 %v1217, %v1222
        %v1224 = vsub.s32 0, %v1223
        %v1225 = vsel %vm1215, %v1224, %v1223
        %vm1226 = vcmp.lt.s32.totalorder %v850, 0
        %v1227 = vsub.s32 0, %v850
        %v1228 = vsel %vm1226, %v1227, %v850
        %v1229 = vmul.u32.u64.compose %v1228, 3817748708
        %v1230 = vextract.low.u32 %v1229
        %v1231 = vextract.high.u32 %v1229
        %v1232 = vshrl.u32 %v1231, 4
        %v1233 = vmul.u32 %v1232, 18
        %v1234 = vsub.s32 %v1228, %v1233
        %v1235 = vsub.s32 0, %v1234
        %v1236 = vsel %vm1226, %v1235, %v1234
        %vm1237 = vcmp.lt.s32.totalorder %v851, 0
        %v1238 = vsub.s32 0, %v851
        %v1239 = vsel %vm1237, %v1238, %v851
        %v1240 = vmul.u32.u64.compose %v1239, 3817748708
        %v1241 = vextract.low.u32 %v1240
        %v1242 = vextract.high.u32 %v1240
        %v1243 = vshrl.u32 %v1242, 4
        %v1244 = vmul.u32 %v1243, 18
        %v1245 = vsub.s32 %v1239, %v1244
        %v1246 = vsub.s32 0, %v1245
        %v1247 = vsel %vm1237, %v1246, %v1245
        %vm1248 = vcmp.ne.s32.totalorder %v862, 0
        %vm1249 = vcmp.ne.s32.totalorder %v873, 0
        %vm1250 = vcmp.ne.s32.totalorder %v884, 0
        %vm1251 = vcmp.ne.s32.totalorder %v895, 0
        %vm1252 = vcmp.ne.s32.totalorder %v906, 0
        %vm1253 = vcmp.ne.s32.totalorder %v917, 0
        %vm1254 = vcmp.ne.s32.totalorder %v928, 0
        %vm1255 = vcmp.ne.s32.totalorder %v939, 0
        %vm1256 = vcmp.ne.s32.totalorder %v950, 0
        %vm1257 = vcmp.ne.s32.totalorder %v961, 0
        %vm1258 = vcmp.ne.s32.totalorder %v972, 0
        %vm1259 = vcmp.ne.s32.totalorder %v983, 0
        %vm1260 = vcmp.ne.s32.totalorder %v994, 0
        %vm1261 = vcmp.ne.s32.totalorder %v1005, 0
        %vm1262 = vcmp.ne.s32.totalorder %v1016, 0
        %vm1263 = vcmp.ne.s32.totalorder %v1027, 0
        %vm1264 = vcmp.ne.s32.totalorder %v1038, 0
        %vm1265 = vcmp.ne.s32.totalorder %v1049, 0
        %vm1266 = vcmp.ne.s32.totalorder %v1060, 0
        %vm1267 = vcmp.ne.s32.totalorder %v1071, 0
        %vm1268 = vcmp.ne.s32.totalorder %v1082, 0
        %vm1269 = vcmp.ne.s32.totalorder %v1093, 0
        %vm1270 = vcmp.ne.s32.totalorder %v1104, 0
        %vm1271 = vcmp.ne.s32.totalorder %v1115, 0
        %vm1272 = vcmp.ne.s32.totalorder %v1126, 0
        %vm1273 = vcmp.ne.s32.totalorder %v1137, 0
        %vm1274 = vcmp.ne.s32.totalorder %v1148, 0
        %vm1275 = vcmp.ne.s32.totalorder %v1159, 0
        %vm1276 = vcmp.ne.s32.totalorder %v1170, 0
        %vm1277 = vcmp.ne.s32.totalorder %v1181, 0
        %vm1278 = vcmp.ne.s32.totalorder %v1192, 0
        %vm1279 = vcmp.ne.s32.totalorder %v1203, 0
        %vm1280 = vcmp.ne.s32.totalorder %v1214, 0
        %vm1281 = vcmp.ne.s32.totalorder %v1225, 0
        %vm1282 = vcmp.ne.s32.totalorder %v1236, 0
        %vm1283 = vcmp.ne.s32.totalorder %v1247, 0
        %vm1284 = vcmp.lt.s32.totalorder %v862, 0
        %vm1285 = vcmp.lt.s32.totalorder %v873, 0
        %vm1286 = vcmp.lt.s32.totalorder %v884, 0
        %vm1287 = vcmp.lt.s32.totalorder %v895, 0
        %vm1288 = vcmp.lt.s32.totalorder %v906, 0
        %vm1289 = vcmp.lt.s32.totalorder %v917, 0
        %vm1290 = vcmp.lt.s32.totalorder %v928, 0
        %vm1291 = vcmp.lt.s32.totalorder %v939, 0
        %vm1292 = vcmp.lt.s32.totalorder %v950, 0
        %vm1293 = vcmp.lt.s32.totalorder %v961, 0
        %vm1294 = vcmp.lt.s32.totalorder %v972, 0
        %vm1295 = vcmp.lt.s32.totalorder %v983, 0
        %vm1296 = vcmp.lt.s32.totalorder %v994, 0
        %vm1297 = vcmp.lt.s32.totalorder %v1005, 0
        %vm1298 = vcmp.lt.s32.totalorder %v1016, 0
        %vm1299 = vcmp.lt.s32.totalorder %v1027, 0
        %vm1300 = vcmp.lt.s32.totalorder %v1038, 0
        %vm1301 = vcmp.lt.s32.totalorder %v1049, 0
        %vm1302 = vcmp.lt.s32.totalorder %v1060, 0
        %vm1303 = vcmp.lt.s32.totalorder %v1071, 0
        %vm1304 = vcmp.lt.s32.totalorder %v1082, 0
        %vm1305 = vcmp.lt.s32.totalorder %v1093, 0
        %vm1306 = vcmp.lt.s32.totalorder %v1104, 0
        %vm1307 = vcmp.lt.s32.totalorder %v1115, 0
        %vm1308 = vcmp.lt.s32.totalorder %v1126, 0
        %vm1309 = vcmp.lt.s32.totalorder %v1137, 0
        %vm1310 = vcmp.lt.s32.totalorder %v1148, 0
        %vm1311 = vcmp.lt.s32.totalorder %v1159, 0
        %vm1312 = vcmp.lt.s32.totalorder %v1170, 0
        %vm1313 = vcmp.lt.s32.totalorder %v1181, 0
        %vm1314 = vcmp.lt.s32.totalorder %v1192, 0
        %vm1315 = vcmp.lt.s32.totalorder %v1203, 0
        %vm1316 = vcmp.lt.s32.totalorder %v1214, 0
        %vm1317 = vcmp.lt.s32.totalorder %v1225, 0
        %vm1318 = vcmp.lt.s32.totalorder %v1236, 0
        %vm1319 = vcmp.lt.s32.totalorder %v1247, 0
        %vm1320 = vmand %vm1284, %vm1248
        %vm1321 = vmand %vm1285, %vm1249
        %vm1322 = vmand %vm1286, %vm1250
        %vm1323 = vmand %vm1287, %vm1251
        %vm1324 = vmand %vm1288, %vm1252
        %vm1325 = vmand %vm1289, %vm1253
        %vm1326 = vmand %vm1290, %vm1254
        %vm1327 = vmand %vm1291, %vm1255
        %vm1328 = vmand %vm1292, %vm1256
        %vm1329 = vmand %vm1293, %vm1257
        %vm1330 = vmand %vm1294, %vm1258
        %vm1331 = vmand %vm1295, %vm1259
        %vm1332 = vmand %vm1296, %vm1260
        %vm1333 = vmand %vm1297, %vm1261
        %vm1334 = vmand %vm1298, %vm1262
        %vm1335 = vmand %vm1299, %vm1263
        %vm1336 = vmand %vm1300, %vm1264
        %vm1337 = vmand %vm1301, %vm1265
        %vm1338 = vmand %vm1302, %vm1266
        %vm1339 = vmand %vm1303, %vm1267
        %vm1340 = vmand %vm1304, %vm1268
        %vm1341 = vmand %vm1305, %vm1269
        %vm1342 = vmand %vm1306, %vm1270
        %vm1343 = vmand %vm1307, %vm1271
        %vm1344 = vmand %vm1308, %vm1272
        %vm1345 = vmand %vm1309, %vm1273
        %vm1346 = vmand %vm1310, %vm1274
        %vm1347 = vmand %vm1311, %vm1275
        %vm1348 = vmand %vm1312, %vm1276
        %vm1349 = vmand %vm1313, %vm1277
        %vm1350 = vmand %vm1314, %vm1278
        %vm1351 = vmand %vm1315, %vm1279
        %vm1352 = vmand %vm1316, %vm1280
        %vm1353 = vmand %vm1317, %vm1281
        %vm1354 = vmand %vm1318, %vm1282
        %vm1355 = vmand %vm1319, %vm1283
        %v1356 = vadd.s32 %v862, 18
        %v1357 = vadd.s32 %v873, 18
        %v1358 = vadd.s32 %v884, 18
        %v1359 = vadd.s32 %v895, 18
        %v1360 = vadd.s32 %v906, 18
        %v1361 = vadd.s32 %v917, 18
        %v1362 = vadd.s32 %v928, 18
        %v1363 = vadd.s32 %v939, 18
        %v1364 = vadd.s32 %v950, 18
        %v1365 = vadd.s32 %v961, 18
        %v1366 = vadd.s32 %v972, 18
        %v1367 = vadd.s32 %v983, 18
        %v1368 = vadd.s32 %v994, 18
        %v1369 = vadd.s32 %v1005, 18
        %v1370 = vadd.s32 %v1016, 18
        %v1371 = vadd.s32 %v1027, 18
        %v1372 = vadd.s32 %v1038, 18
        %v1373 = vadd.s32 %v1049, 18
        %v1374 = vadd.s32 %v1060, 18
        %v1375 = vadd.s32 %v1071, 18
        %v1376 = vadd.s32 %v1082, 18
        %v1377 = vadd.s32 %v1093, 18
        %v1378 = vadd.s32 %v1104, 18
        %v1379 = vadd.s32 %v1115, 18
        %v1380 = vadd.s32 %v1126, 18
        %v1381 = vadd.s32 %v1137, 18
        %v1382 = vadd.s32 %v1148, 18
        %v1383 = vadd.s32 %v1159, 18
        %v1384 = vadd.s32 %v1170, 18
        %v1385 = vadd.s32 %v1181, 18
        %v1386 = vadd.s32 %v1192, 18
        %v1387 = vadd.s32 %v1203, 18
        %v1388 = vadd.s32 %v1214, 18
        %v1389 = vadd.s32 %v1225, 18
        %v1390 = vadd.s32 %v1236, 18
        %v1391 = vadd.s32 %v1247, 18
        %v1392 = vsel %vm1320, %v1356, %v862
        %v1393 = vsel %vm1321, %v1357, %v873
        %v1394 = vsel %vm1322, %v1358, %v884
        %v1395 = vsel %vm1323, %v1359, %v895
        %v1396 = vsel %vm1324, %v1360, %v906
        %v1397 = vsel %vm1325, %v1361, %v917
        %v1398 = vsel %vm1326, %v1362, %v928
        %v1399 = vsel %vm1327, %v1363, %v939
        %v1400 = vsel %vm1328, %v1364, %v950
        %v1401 = vsel %vm1329, %v1365, %v961
        %v1402 = vsel %vm1330, %v1366, %v972
        %v1403 = vsel %vm1331, %v1367, %v983
        %v1404 = vsel %vm1332, %v1368, %v994
        %v1405 = vsel %vm1333, %v1369, %v1005
        %v1406 = vsel %vm1334, %v1370, %v1016
        %v1407 = vsel %vm1335, %v1371, %v1027
        %v1408 = vsel %vm1336, %v1372, %v1038
        %v1409 = vsel %vm1337, %v1373, %v1049
        %v1410 = vsel %vm1338, %v1374, %v1060
        %v1411 = vsel %vm1339, %v1375, %v1071
        %v1412 = vsel %vm1340, %v1376, %v1082
        %v1413 = vsel %vm1341, %v1377, %v1093
        %v1414 = vsel %vm1342, %v1378, %v1104
        %v1415 = vsel %vm1343, %v1379, %v1115
        %v1416 = vsel %vm1344, %v1380, %v1126
        %v1417 = vsel %vm1345, %v1381, %v1137
        %v1418 = vsel %vm1346, %v1382, %v1148
        %v1419 = vsel %vm1347, %v1383, %v1159
        %v1420 = vsel %vm1348, %v1384, %v1170
        %v1421 = vsel %vm1349, %v1385, %v1181
        %v1422 = vsel %vm1350, %v1386, %v1192
        %v1423 = vsel %vm1351, %v1387, %v1203
        %v1424 = vsel %vm1352, %v1388, %v1214
        %v1425 = vsel %vm1353, %v1389, %v1225
        %v1426 = vsel %vm1354, %v1390, %v1236
        %v1427 = vsel %vm1355, %v1391, %v1247
        %vm1428 = vcmp.ge.s32.totalorder %v1392, 1
        %vm1429 = vcmp.ge.s32.totalorder %v1393, 1
        %vm1430 = vcmp.ge.s32.totalorder %v1394, 1
        %vm1431 = vcmp.ge.s32.totalorder %v1395, 1
        %vm1432 = vcmp.ge.s32.totalorder %v1396, 1
        %vm1433 = vcmp.ge.s32.totalorder %v1397, 1
        %vm1434 = vcmp.ge.s32.totalorder %v1398, 1
        %vm1435 = vcmp.ge.s32.totalorder %v1399, 1
        %vm1436 = vcmp.ge.s32.totalorder %v1400, 1
        %vm1437 = vcmp.ge.s32.totalorder %v1401, 1
        %vm1438 = vcmp.ge.s32.totalorder %v1402, 1
        %vm1439 = vcmp.ge.s32.totalorder %v1403, 1
        %vm1440 = vcmp.ge.s32.totalorder %v1404, 1
        %vm1441 = vcmp.ge.s32.totalorder %v1405, 1
        %vm1442 = vcmp.ge.s32.totalorder %v1406, 1
        %vm1443 = vcmp.ge.s32.totalorder %v1407, 1
        %vm1444 = vcmp.ge.s32.totalorder %v1408, 1
        %vm1445 = vcmp.ge.s32.totalorder %v1409, 1
        %vm1446 = vcmp.ge.s32.totalorder %v1410, 1
        %vm1447 = vcmp.ge.s32.totalorder %v1411, 1
        %vm1448 = vcmp.ge.s32.totalorder %v1412, 1
        %vm1449 = vcmp.ge.s32.totalorder %v1413, 1
        %vm1450 = vcmp.ge.s32.totalorder %v1414, 1
        %vm1451 = vcmp.ge.s32.totalorder %v1415, 1
        %vm1452 = vcmp.ge.s32.totalorder %v1416, 1
        %vm1453 = vcmp.ge.s32.totalorder %v1417, 1
        %vm1454 = vcmp.ge.s32.totalorder %v1418, 1
        %vm1455 = vcmp.ge.s32.totalorder %v1419, 1
        %vm1456 = vcmp.ge.s32.totalorder %v1420, 1
        %vm1457 = vcmp.ge.s32.totalorder %v1421, 1
        %vm1458 = vcmp.ge.s32.totalorder %v1422, 1
        %vm1459 = vcmp.ge.s32.totalorder %v1423, 1
        %vm1460 = vcmp.ge.s32.totalorder %v1424, 1
        %vm1461 = vcmp.ge.s32.totalorder %v1425, 1
        %vm1462 = vcmp.ge.s32.totalorder %v1426, 1
        %vm1463 = vcmp.ge.s32.totalorder %v1427, 1
        %vm1464 = vcmp.le.s32.totalorder %v1392, 16
        %vm1465 = vcmp.le.s32.totalorder %v1393, 16
        %vm1466 = vcmp.le.s32.totalorder %v1394, 16
        %vm1467 = vcmp.le.s32.totalorder %v1395, 16
        %vm1468 = vcmp.le.s32.totalorder %v1396, 16
        %vm1469 = vcmp.le.s32.totalorder %v1397, 16
        %vm1470 = vcmp.le.s32.totalorder %v1398, 16
        %vm1471 = vcmp.le.s32.totalorder %v1399, 16
        %vm1472 = vcmp.le.s32.totalorder %v1400, 16
        %vm1473 = vcmp.le.s32.totalorder %v1401, 16
        %vm1474 = vcmp.le.s32.totalorder %v1402, 16
        %vm1475 = vcmp.le.s32.totalorder %v1403, 16
        %vm1476 = vcmp.le.s32.totalorder %v1404, 16
        %vm1477 = vcmp.le.s32.totalorder %v1405, 16
        %vm1478 = vcmp.le.s32.totalorder %v1406, 16
        %vm1479 = vcmp.le.s32.totalorder %v1407, 16
        %vm1480 = vcmp.le.s32.totalorder %v1408, 16
        %vm1481 = vcmp.le.s32.totalorder %v1409, 16
        %vm1482 = vcmp.le.s32.totalorder %v1410, 16
        %vm1483 = vcmp.le.s32.totalorder %v1411, 16
        %vm1484 = vcmp.le.s32.totalorder %v1412, 16
        %vm1485 = vcmp.le.s32.totalorder %v1413, 16
        %vm1486 = vcmp.le.s32.totalorder %v1414, 16
        %vm1487 = vcmp.le.s32.totalorder %v1415, 16
        %vm1488 = vcmp.le.s32.totalorder %v1416, 16
        %vm1489 = vcmp.le.s32.totalorder %v1417, 16
        %vm1490 = vcmp.le.s32.totalorder %v1418, 16
        %vm1491 = vcmp.le.s32.totalorder %v1419, 16
        %vm1492 = vcmp.le.s32.totalorder %v1420, 16
        %vm1493 = vcmp.le.s32.totalorder %v1421, 16
        %vm1494 = vcmp.le.s32.totalorder %v1422, 16
        %vm1495 = vcmp.le.s32.totalorder %v1423, 16
        %vm1496 = vcmp.le.s32.totalorder %v1424, 16
        %vm1497 = vcmp.le.s32.totalorder %v1425, 16
        %vm1498 = vcmp.le.s32.totalorder %v1426, 16
        %vm1499 = vcmp.le.s32.totalorder %v1427, 16
        %vm1500 = vmand %vm1428, %vm1464
        %vm1501 = vmand %vm1429, %vm1465
        %vm1502 = vmand %vm1430, %vm1466
        %vm1503 = vmand %vm1431, %vm1467
        %vm1504 = vmand %vm1432, %vm1468
        %vm1505 = vmand %vm1433, %vm1469
        %vm1506 = vmand %vm1434, %vm1470
        %vm1507 = vmand %vm1435, %vm1471
        %vm1508 = vmand %vm1436, %vm1472
        %vm1509 = vmand %vm1437, %vm1473
        %vm1510 = vmand %vm1438, %vm1474
        %vm1511 = vmand %vm1439, %vm1475
        %vm1512 = vmand %vm1440, %vm1476
        %vm1513 = vmand %vm1441, %vm1477
        %vm1514 = vmand %vm1442, %vm1478
        %vm1515 = vmand %vm1443, %vm1479
        %vm1516 = vmand %vm1444, %vm1480
        %vm1517 = vmand %vm1445, %vm1481
        %vm1518 = vmand %vm1446, %vm1482
        %vm1519 = vmand %vm1447, %vm1483
        %vm1520 = vmand %vm1448, %vm1484
        %vm1521 = vmand %vm1449, %vm1485
        %vm1522 = vmand %vm1450, %vm1486
        %vm1523 = vmand %vm1451, %vm1487
        %vm1524 = vmand %vm1452, %vm1488
        %vm1525 = vmand %vm1453, %vm1489
        %vm1526 = vmand %vm1454, %vm1490
        %vm1527 = vmand %vm1455, %vm1491
        %vm1528 = vmand %vm1456, %vm1492
        %vm1529 = vmand %vm1457, %vm1493
        %vm1530 = vmand %vm1458, %vm1494
        %vm1531 = vmand %vm1459, %vm1495
        %vm1532 = vmand %vm1460, %vm1496
        %vm1533 = vmand %vm1461, %vm1497
        %vm1534 = vmand %vm1462, %vm1498
        %vm1535 = vmand %vm1463, %vm1499
        %v1536 = vmax.f32 %v637, 0.0
        %v1537 = vmax.f32 %v641, 0.0
        %v1538 = vmax.f32 %v647, 0.0
        %v1539 = vmax.f32 %v651, 0.0
        %v1540 = vmax.f32 %v657, 0.0
        %v1541 = vmax.f32 %v661, 0.0
        %v1542 = vmax.f32 %v667, 0.0
        %v1543 = vmax.f32 %v671, 0.0
        %v1544 = vmax.f32 %v677, 0.0
        %v1545 = vmax.f32 %v681, 0.0
        %v1546 = vmax.f32 %v687, 0.0
        %v1547 = vmax.f32 %v691, 0.0
        %v1548 = vmax.f32 %v697, 0.0
        %v1549 = vmax.f32 %v701, 0.0
        %v1550 = vmax.f32 %v707, 0.0
        %v1551 = vmax.f32 %v711, 0.0
        %v1552 = vmax.f32 %v717, 0.0
        %v1553 = vmax.f32 %v721, 0.0
        %v1554 = vmax.f32 %v727, 0.0
        %v1555 = vmax.f32 %v731, 0.0
        %v1556 = vmax.f32 %v737, 0.0
        %v1557 = vmax.f32 %v741, 0.0
        %v1558 = vmax.f32 %v747, 0.0
        %v1559 = vmax.f32 %v751, 0.0
        %v1560 = vmax.f32 %v757, 0.0
        %v1561 = vmax.f32 %v761, 0.0
        %v1562 = vmax.f32 %v767, 0.0
        %v1563 = vmax.f32 %v771, 0.0
        %v1564 = vmax.f32 %v777, 0.0
        %v1565 = vmax.f32 %v781, 0.0
        %v1566 = vmax.f32 %v787, 0.0
        %v1567 = vmax.f32 %v791, 0.0
        %v1568 = vmax.f32 %v797, 0.0
        %v1569 = vmax.f32 %v801, 0.0
        %v1570 = vmax.f32 %v807, 0.0
        %v1571 = vmax.f32 %v811, 0.0
        %v1572 = vsel %vm1500, 1, 0
        %v1573 = vsel %vm1501, 1, 0
        %v1574 = vsel %vm1502, 1, 0
        %v1575 = vsel %vm1503, 1, 0
        %v1576 = vsel %vm1504, 1, 0
        %v1577 = vsel %vm1505, 1, 0
        %v1578 = vsel %vm1506, 1, 0
        %v1579 = vsel %vm1507, 1, 0
        %v1580 = vsel %vm1508, 1, 0
        %v1581 = vsel %vm1509, 1, 0
        %v1582 = vsel %vm1510, 1, 0
        %v1583 = vsel %vm1511, 1, 0
        %v1584 = vsel %vm1512, 1, 0
        %v1585 = vsel %vm1513, 1, 0
        %v1586 = vsel %vm1514, 1, 0
        %v1587 = vsel %vm1515, 1, 0
        %v1588 = vsel %vm1516, 1, 0
        %v1589 = vsel %vm1517, 1, 0
        %v1590 = vsel %vm1518, 1, 0
        %v1591 = vsel %vm1519, 1, 0
        %v1592 = vsel %vm1520, 1, 0
        %v1593 = vsel %vm1521, 1, 0
        %v1594 = vsel %vm1522, 1, 0
        %v1595 = vsel %vm1523, 1, 0
        %v1596 = vsel %vm1524, 1, 0
        %v1597 = vsel %vm1525, 1, 0
        %v1598 = vsel %vm1526, 1, 0
        %v1599 = vsel %vm1527, 1, 0
        %v1600 = vsel %vm1528, 1, 0
        %v1601 = vsel %vm1529, 1, 0
        %v1602 = vsel %vm1530, 1, 0
        %v1603 = vsel %vm1531, 1, 0
        %v1604 = vsel %vm1532, 1, 0
        %v1605 = vsel %vm1533, 1, 0
        %v1606 = vsel %vm1534, 1, 0
        %v1607 = vsel %vm1535, 1, 0
        %vm1608 = vcmp.eq.s32.totalorder %v1572, 1
        %vm1609 = vcmp.eq.s32.totalorder %v1573, 1
        %vm1610 = vcmp.eq.s32.totalorder %v1574, 1
        %vm1611 = vcmp.eq.s32.totalorder %v1575, 1
        %vm1612 = vcmp.eq.s32.totalorder %v1576, 1
        %vm1613 = vcmp.eq.s32.totalorder %v1577, 1
        %vm1614 = vcmp.eq.s32.totalorder %v1578, 1
        %vm1615 = vcmp.eq.s32.totalorder %v1579, 1
        %vm1616 = vcmp.eq.s32.totalorder %v1580, 1
        %vm1617 = vcmp.eq.s32.totalorder %v1581, 1
        %vm1618 = vcmp.eq.s32.totalorder %v1582, 1
        %vm1619 = vcmp.eq.s32.totalorder %v1583, 1
        %vm1620 = vcmp.eq.s32.totalorder %v1584, 1
        %vm1621 = vcmp.eq.s32.totalorder %v1585, 1
        %vm1622 = vcmp.eq.s32.totalorder %v1586, 1
        %vm1623 = vcmp.eq.s32.totalorder %v1587, 1
        %vm1624 = vcmp.eq.s32.totalorder %v1588, 1
        %vm1625 = vcmp.eq.s32.totalorder %v1589, 1
        %vm1626 = vcmp.eq.s32.totalorder %v1590, 1
        %vm1627 = vcmp.eq.s32.totalorder %v1591, 1
        %vm1628 = vcmp.eq.s32.totalorder %v1592, 1
        %vm1629 = vcmp.eq.s32.totalorder %v1593, 1
        %vm1630 = vcmp.eq.s32.totalorder %v1594, 1
        %vm1631 = vcmp.eq.s32.totalorder %v1595, 1
        %vm1632 = vcmp.eq.s32.totalorder %v1596, 1
        %vm1633 = vcmp.eq.s32.totalorder %v1597, 1
        %vm1634 = vcmp.eq.s32.totalorder %v1598, 1
        %vm1635 = vcmp.eq.s32.totalorder %v1599, 1
        %vm1636 = vcmp.eq.s32.totalorder %v1600, 1
        %vm1637 = vcmp.eq.s32.totalorder %v1601, 1
        %vm1638 = vcmp.eq.s32.totalorder %v1602, 1
        %vm1639 = vcmp.eq.s32.totalorder %v1603, 1
        %vm1640 = vcmp.eq.s32.totalorder %v1604, 1
        %vm1641 = vcmp.eq.s32.totalorder %v1605, 1
        %vm1642 = vcmp.eq.s32.totalorder %v1606, 1
        %vm1643 = vcmp.eq.s32.totalorder %v1607, 1
        %v1644 = vsel %vm1608, %v1536, 0.0
        %v1645 = vsel %vm1609, %v1537, 0.0
        %v1646 = vsel %vm1610, %v1538, 0.0
        %v1647 = vsel %vm1611, %v1539, 0.0
        %v1648 = vsel %vm1612, %v1540, 0.0
        %v1649 = vsel %vm1613, %v1541, 0.0
        %v1650 = vsel %vm1614, %v1542, 0.0
        %v1651 = vsel %vm1615, %v1543, 0.0
        %v1652 = vsel %vm1616, %v1544, 0.0
        %v1653 = vsel %vm1617, %v1545, 0.0
        %v1654 = vsel %vm1618, %v1546, 0.0
        %v1655 = vsel %vm1619, %v1547, 0.0
        %v1656 = vsel %vm1620, %v1548, 0.0
        %v1657 = vsel %vm1621, %v1549, 0.0
        %v1658 = vsel %vm1622, %v1550, 0.0
        %v1659 = vsel %vm1623, %v1551, 0.0
        %v1660 = vsel %vm1624, %v1552, 0.0
        %v1661 = vsel %vm1625, %v1553, 0.0
        %v1662 = vsel %vm1626, %v1554, 0.0
        %v1663 = vsel %vm1627, %v1555, 0.0
        %v1664 = vsel %vm1628, %v1556, 0.0
        %v1665 = vsel %vm1629, %v1557, 0.0
        %v1666 = vsel %vm1630, %v1558, 0.0
        %v1667 = vsel %vm1631, %v1559, 0.0
        %v1668 = vsel %vm1632, %v1560, 0.0
        %v1669 = vsel %vm1633, %v1561, 0.0
        %v1670 = vsel %vm1634, %v1562, 0.0
        %v1671 = vsel %vm1635, %v1563, 0.0
        %v1672 = vsel %vm1636, %v1564, 0.0
        %v1673 = vsel %vm1637, %v1565, 0.0
        %v1674 = vsel %vm1638, %v1566, 0.0
        %v1675 = vsel %vm1639, %v1567, 0.0
        %v1676 = vsel %vm1640, %v1568, 0.0
        %v1677 = vsel %vm1641, %v1569, 0.0
        %v1678 = vsel %vm1642, %v1570, 0.0
        %v1679 = vsel %vm1643, %v1571, 0.0
        %v1680 = vpack.c.bf16 %v1645, %v1644
        %v1681 = vpack.c.bf16 %v1647, %v1646
        %v1682 = vpack.c.bf16 %v1649, %v1648
        %v1683 = vpack.c.bf16 %v1651, %v1650
        %v1684 = vpack.c.bf16 %v1653, %v1652
        %v1685 = vpack.c.bf16 %v1655, %v1654
        %v1686 = vpack.c.bf16 %v1657, %v1656
        %v1687 = vpack.c.bf16 %v1659, %v1658
        %v1688 = vpack.c.bf16 %v1661, %v1660
        %v1689 = vpack.c.bf16 %v1663, %v1662
        %v1690 = vpack.c.bf16 %v1665, %v1664
        %v1691 = vpack.c.bf16 %v1667, %v1666
        %v1692 = vpack.c.bf16 %v1669, %v1668
        %v1693 = vpack.c.bf16 %v1671, %v1670
        %v1694 = vpack.c.bf16 %v1673, %v1672
        %v1695 = vpack.c.bf16 %v1675, %v1674
        %v1696 = vpack.c.bf16 %v1677, %v1676
        %v1697 = vpack.c.bf16 %v1679, %v1678
        %v1716 = vunpack.c.l.b16 %v1680
        %v1717 = vunpack.c.h.b16 %v1680
        %v1718 = vunpack.c.l.b16 %v1681
        %v1719 = vunpack.c.h.b16 %v1681
        %v1720 = vunpack.c.l.b16 %v1682
        %v1721 = vunpack.c.h.b16 %v1682
        %v1722 = vunpack.c.l.b16 %v1683
        %v1723 = vunpack.c.h.b16 %v1683
        %v1724 = vunpack.c.l.b16 %v1684
        %v1725 = vunpack.c.h.b16 %v1684
        %v1726 = vunpack.c.l.b16 %v1685
        %v1727 = vunpack.c.h.b16 %v1685
        %v1728 = vunpack.c.l.b16 %v1686
        %v1729 = vunpack.c.h.b16 %v1686
        %v1730 = vunpack.c.l.b16 %v1687
        %v1731 = vunpack.c.h.b16 %v1687
        %v1732 = vunpack.c.l.b16 %v1688
        %v1733 = vunpack.c.h.b16 %v1688
        %v1734 = vunpack.c.l.b16 %v1689
        %v1735 = vunpack.c.h.b16 %v1689
        %v1736 = vunpack.c.l.b16 %v1690
        %v1737 = vunpack.c.h.b16 %v1690
        %v1738 = vunpack.c.l.b16 %v1691
        %v1739 = vunpack.c.h.b16 %v1691
        %v1740 = vunpack.c.l.b16 %v1692
        %v1741 = vunpack.c.h.b16 %v1692
        %v1742 = vunpack.c.l.b16 %v1693
        %v1743 = vunpack.c.h.b16 %v1693
        %v1744 = vunpack.c.l.b16 %v1694
        %v1745 = vunpack.c.h.b16 %v1694
        %v1746 = vunpack.c.l.b16 %v1695
        %v1747 = vunpack.c.h.b16 %v1695
        %v1748 = vunpack.c.l.b16 %v1696
        %v1749 = vunpack.c.h.b16 %v1696
        %v1750 = vunpack.c.l.b16 %v1697
        %v1751 = vunpack.c.h.b16 %v1697
        %v1752 = vpack.c.b16 %v1716, %v1716
        %v1753 = vpack.c.b16 %v1717, %v1717
        %v1754 = vpack.c.b16 %v1718, %v1718
        %v1755 = vpack.c.b16 %v1719, %v1719
        %v1756 = vpack.c.b16 %v1720, %v1720
        %v1757 = vpack.c.b16 %v1721, %v1721
        %v1758 = vpack.c.b16 %v1722, %v1722
        %v1759 = vpack.c.b16 %v1723, %v1723
        %v1760 = vpack.c.b16 %v1724, %v1724
        %v1761 = vpack.c.b16 %v1725, %v1725
        %v1762 = vpack.c.b16 %v1726, %v1726
        %v1763 = vpack.c.b16 %v1727, %v1727
        %v1764 = vpack.c.b16 %v1728, %v1728
        %v1765 = vpack.c.b16 %v1729, %v1729
        %v1766 = vpack.c.b16 %v1730, %v1730
        %v1767 = vpack.c.b16 %v1731, %v1731
        %v1768 = vpack.c.b16 %v1732, %v1732
        %v1769 = vpack.c.b16 %v1733, %v1733
        %v1770 = vpack.c.b16 %v1734, %v1734
        %v1771 = vpack.c.b16 %v1735, %v1735
        %v1772 = vpack.c.b16 %v1736, %v1736
        %v1773 = vpack.c.b16 %v1737, %v1737
        %v1774 = vpack.c.b16 %v1738, %v1738
        %v1775 = vpack.c.b16 %v1739, %v1739
        %v1776 = vpack.c.b16 %v1740, %v1740
        %v1777 = vpack.c.b16 %v1741, %v1741
        %v1778 = vpack.c.b16 %v1742, %v1742
        %v1779 = vpack.c.b16 %v1743, %v1743
        %v1780 = vpack.c.b16 %v1744, %v1744
        %v1781 = vpack.c.b16 %v1745, %v1745
        %v1782 = vpack.c.b16 %v1746, %v1746
        %v1783 = vpack.c.b16 %v1747, %v1747
        %v1784 = vpack.c.b16 %v1748, %v1748
        %v1785 = vpack.c.b16 %v1749, %v1749
        %v1786 = vpack.c.b16 %v1750, %v1750
        %v1787 = vpack.c.b16 %v1751, %v1751
        %1824 = vst [vmem:[#allocation2 + $0x10] sm:$0xf] %v1752
        %1825 = vst [vmem:[#allocation2 + $0x14] sm:$0xf] %v1753
        %1826 = vst [vmem:[#allocation2 + $0x18] sm:$0xf] %v1754
        %1827 = vst [vmem:[#allocation2 + $0x1c] sm:$0xf] %v1755
        %1828 = vst [vmem:[#allocation2 + $0x20] sm:$0xf] %v1756
        %1829 = vst [vmem:[#allocation2 + $0x24] sm:$0xf] %v1757
        %1830 = vst [vmem:[#allocation2 + $0x28] sm:$0xf] %v1758
        %1831 = vst [vmem:[#allocation2 + $0x2c] sm:$0xf] %v1759
        %1832 = vst [vmem:[#allocation2 + $0x30] sm:$0xf] %v1760
        %1833 = vst [vmem:[#allocation2 + $0x34] sm:$0xf] %v1761
        %1834 = vst [vmem:[#allocation2 + $0x38] sm:$0xf] %v1762
        %1835 = vst [vmem:[#allocation2 + $0x3c] sm:$0xf] %v1763
        %1836 = vst [vmem:[#allocation2 + $0x40] sm:$0xf] %v1764
        %1837 = vst [vmem:[#allocation2 + $0x44] sm:$0xf] %v1765
        %1838 = vst [vmem:[#allocation2 + $0x48] sm:$0xf] %v1766
        %1839 = vst [vmem:[#allocation2 + $0x4c] sm:$0xf] %v1767
        %1840 = vst [vmem:[#allocation2 + $0x50] sm:$0xf] %v1768
        %1841 = vst [vmem:[#allocation2 + $0x54] sm:$0xf] %v1769
        %1842 = vst [vmem:[#allocation2 + $0x58] sm:$0xf] %v1770
        %1843 = vst [vmem:[#allocation2 + $0x5c] sm:$0xf] %v1771
        %1844 = vst [vmem:[#allocation2 + $0x60] sm:$0xf] %v1772
        %1845 = vst [vmem:[#allocation2 + $0x64] sm:$0xf] %v1773
        %1846 = vst [vmem:[#allocation2 + $0x68] sm:$0xf] %v1774
        %1847 = vst [vmem:[#allocation2 + $0x6c] sm:$0xf] %v1775
        %1848 = vst [vmem:[#allocation2 + $0x70] sm:$0xf] %v1776
        %1849 = vst [vmem:[#allocation2 + $0x74] sm:$0xf] %v1777
        %1850 = vst [vmem:[#allocation2 + $0x78] sm:$0xf] %v1778
        %1851 = vst [vmem:[#allocation2 + $0x7c] sm:$0xf] %v1779
        %1852 = vst [vmem:[#allocation2 + $0x80] sm:$0xf] %v1780
        %1853 = vst [vmem:[#allocation2 + $0x84] sm:$0xf] %v1781
        %1854 = vst [vmem:[#allocation2 + $0x88] sm:$0xf] %v1782
        %1855 = vst [vmem:[#allocation2 + $0x8c] sm:$0xf] %v1783
        %1856 = vst [vmem:[#allocation2 + $0x90] sm:$0xf] %v1784
        %1857 = vst [vmem:[#allocation2 + $0x94] sm:$0xf] %v1785
        %1858 = vst [vmem:[#allocation2 + $0x98] sm:$0xf] %v1786
        %1859 = vst [vmem:[#allocation2 + $0x9c] sm:$0xf] %v1787
        %v1860 = vld [vmem:[#allocation2 + $0x4] sm:$0xc]
        %v1861 = vld [vmem:[#allocation2 + $0x8] sm:$0xf]
        %v1862 = vld [vmem:[#allocation2 + $0xc] sm:$0xf]
        %v1863 = vld [vmem:[#allocation2 + $0x10] sm:$0xf]
        %v1864 = vld [vmem:[#allocation2 + $0x14] sm:$0xf]
        %v1865 = vld [vmem:[#allocation2 + $0x18] sm:$0xf]
        %v1866 = vld [vmem:[#allocation2 + $0x1c] sm:$0xf]
        %v1867 = vld [vmem:[#allocation2 + $0x20] sm:$0xf]
        %v1868 = vld [vmem:[#allocation2 + $0x24] sm:$0xf]
        %v1869 = vld [vmem:[#allocation2 + $0x28] sm:$0xf]
        %v1870 = vld [vmem:[#allocation2 + $0x2c] sm:$0xf]
        %v1871 = vld [vmem:[#allocation2 + $0x30] sm:$0xf]
        %v1872 = vld [vmem:[#allocation2 + $0x34] sm:$0xf]
        %v1873 = vld [vmem:[#allocation2 + $0x38] sm:$0xf]
        %v1874 = vld [vmem:[#allocation2 + $0x3c] sm:$0xf]
        %v1875 = vld [vmem:[#allocation2 + $0x40] sm:$0xf]
        %v1876 = vld [vmem:[#allocation2 + $0x44] sm:$0xf]
        %v1877 = vld [vmem:[#allocation2 + $0x48] sm:$0xf]
        %v1878 = vld [vmem:[#allocation2 + $0x4c] sm:$0xf]
        %v1879 = vld [vmem:[#allocation2 + $0x50] sm:$0xf]
        %v1880 = vld [vmem:[#allocation2 + $0x54] sm:$0xf]
        %v1881 = vld [vmem:[#allocation2 + $0x58] sm:$0xf]
        %v1882 = vld [vmem:[#allocation2 + $0x5c] sm:$0xf]
        %v1883 = vld [vmem:[#allocation2 + $0x60] sm:$0xf]
        %v1884 = vld [vmem:[#allocation2 + $0x64] sm:$0xf]
        %v1885 = vld [vmem:[#allocation2 + $0x68] sm:$0xf]
        %v1886 = vld [vmem:[#allocation2 + $0x6c] sm:$0xf]
        %v1887 = vld [vmem:[#allocation2 + $0x70] sm:$0xf]
        %v1888 = vld [vmem:[#allocation2 + $0x74] sm:$0xf]
        %v1889 = vld [vmem:[#allocation2 + $0x78] sm:$0xf]
        %v1890 = vld [vmem:[#allocation2 + $0x7c] sm:$0xf]
        %v1891 = vld [vmem:[#allocation2 + $0x80] sm:$0xf]
        %v1892 = vld [vmem:[#allocation2 + $0x84] sm:$0xf]
        %v1893 = vld [vmem:[#allocation2 + $0x88] sm:$0xf]
        %v1894 = vld [vmem:[#allocation2 + $0x8c] sm:$0xf]
        %v1895 = vld [vmem:[#allocation2 + $0x90] sm:$0xf]
        %v1896 = vld [vmem:[#allocation2 + $0x94] sm:$0x7]
        %v1897 = vld [vmem:[#allocation8] sm:$0xf]
        %v1898 = vld [vmem:[#allocation8 + $0x4] sm:$0xf]
        %v1899 = vld [vmem:[#allocation8 + $0x8] sm:$0xf]
        %v1900 = vld [vmem:[#allocation8 + $0xc] sm:$0xf]
        %v1901 = vld [vmem:[#allocation8 + $0x10] sm:$0xf]
        %v1902 = vld [vmem:[#allocation8 + $0x14] sm:$0xf]
        %v1903 = vld [vmem:[#allocation8 + $0x18] sm:$0xf]
        %v1904 = vld [vmem:[#allocation8 + $0x1c] sm:$0xf]
        %v1905 = vld [vmem:[#allocation8 + $0x20] sm:$0xf]
        %v1906 = vld [vmem:[#allocation8 + $0x24] sm:$0xf]
        %v1907 = vld [vmem:[#allocation8 + $0x28] sm:$0xf]
        %v1908 = vld [vmem:[#allocation8 + $0x2c] sm:$0xf]
        %v1909 = vld [vmem:[#allocation8 + $0x30] sm:$0xf]
        %v1910 = vld [vmem:[#allocation8 + $0x34] sm:$0xf]
        %v1911 = vld [vmem:[#allocation8 + $0x38] sm:$0xf]
        %v1912 = vld [vmem:[#allocation8 + $0x3c] sm:$0xf]
        %v1913 = vld [vmem:[#allocation2 + $0x4] sm:$0x8]
        %s1914 = scalar_lea.vmem [#allocation8], 64
        %v1915 = vld [vmem:[%s1914] sm:$0xf]
        %v1916 = vld [vmem:[%s1914 + $0x4] sm:$0xf]
        %v1917 = vld [vmem:[%s1914 + $0x8] sm:$0xf]
        %v1918 = vld [vmem:[%s1914 + $0xc] sm:$0xf]
        %v1919 = vld [vmem:[%s1914 + $0x10] sm:$0xf]
        %v1920 = vld [vmem:[%s1914 + $0x14] sm:$0xf]
        %v1921 = vld [vmem:[%s1914 + $0x18] sm:$0xf]
        %v1922 = vld [vmem:[%s1914 + $0x1c] sm:$0xf]
        %v1923 = vld [vmem:[%s1914 + $0x20] sm:$0xf]
        %v1924 = vld [vmem:[%s1914 + $0x24] sm:$0xf]
        %v1925 = vld [vmem:[%s1914 + $0x28] sm:$0xf]
        %v1926 = vld [vmem:[%s1914 + $0x2c] sm:$0xf]
        %v1927 = vld [vmem:[%s1914 + $0x30] sm:$0xf]
        %v1928 = vld [vmem:[%s1914 + $0x34] sm:$0xf]
        %v1929 = vld [vmem:[%s1914 + $0x38] sm:$0xf]
        %v1930 = vld [vmem:[%s1914 + $0x3c] sm:$0xf]
        %v1968 = vunpack.c.l.b16 %v1913
        %v1969 = vunpack.c.l.b16 %v1861
        %v1970 = vunpack.c.l.b16 %v1862
        %v1971 = vunpack.c.l.b16 %v1863
        %v1972 = vunpack.c.l.b16 %v1864
        %v1973 = vunpack.c.l.b16 %v1865
        %v1974 = vunpack.c.l.b16 %v1866
        %v1975 = vunpack.c.l.b16 %v1867
        %v1976 = vunpack.c.l.b16 %v1868
        %v1977 = vunpack.c.l.b16 %v1869
        %v1978 = vunpack.c.l.b16 %v1870
        %v1979 = vunpack.c.l.b16 %v1871
        %v1980 = vunpack.c.l.b16 %v1872
        %v1981 = vunpack.c.l.b16 %v1873
        %v1982 = vunpack.c.l.b16 %v1874
        %v1983 = vunpack.c.l.b16 %v1875
        %v1984 = vunpack.c.l.b16 %v1876
        %v1985 = vunpack.c.l.b16 %v1877
        %v1986 = vunpack.c.l.b16 %v1878
        %v1987 = vunpack.c.l.b16 %v1879
        %v1988 = vunpack.c.l.b16 %v1880
        %v1989 = vunpack.c.l.b16 %v1881
        %v1990 = vunpack.c.l.b16 %v1882
        %v1991 = vunpack.c.l.b16 %v1883
        %v1992 = vunpack.c.l.b16 %v1884
        %v1993 = vunpack.c.l.b16 %v1885
        %v1994 = vunpack.c.l.b16 %v1886
        %v1995 = vunpack.c.l.b16 %v1887
        %v1996 = vunpack.c.l.b16 %v1888
        %v1997 = vunpack.c.l.b16 %v1889
        %v1998 = vunpack.c.l.b16 %v1890
        %v1999 = vunpack.c.l.b16 %v1891
        %v2000 = vunpack.c.l.b16 %v1892
        %v2001 = vunpack.c.l.b16 %v1893
        %v2002 = vunpack.c.l.b16 %v1894
        %v2003 = vunpack.c.l.b16 %v1895
        %v2004 = vunpack.c.l.b16 %v1896
        %v2005 = vpack.c.b16 %v1969, %v1968
        %v2006 = vpack.c.b16 %v1971, %v1970
        %v2007 = vpack.c.b16 %v1973, %v1972
        %v2008 = vpack.c.b16 %v1975, %v1974
        %v2009 = vpack.c.b16 %v1977, %v1976
        %v2010 = vpack.c.b16 %v1979, %v1978
        %v2011 = vpack.c.b16 %v1981, %v1980
        %v2012 = vpack.c.b16 %v1983, %v1982
        %v2013 = vpack.c.b16 %v1985, %v1984
        %v2014 = vpack.c.b16 %v1987, %v1986
        %v2015 = vpack.c.b16 %v1989, %v1988
        %v2016 = vpack.c.b16 %v1991, %v1990
        %v2017 = vpack.c.b16 %v1993, %v1992
        %v2018 = vpack.c.b16 %v1995, %v1994
        %v2019 = vpack.c.b16 %v1997, %v1996
        %v2020 = vpack.c.b16 %v1999, %v1998
        %v2021 = vpack.c.b16 %v2001, %v2000
        %v2022 = vpack.c.b16 %v2003, %v2002
        %v2023 = vpack.c.b16 %v2004, %v2004
        %vm2024 = vcmask 1044480
        %v2025 = vrot.slane %v2005, 3
        %v2026 = vrot.slane %v2006, 3
        %v2027 = vsel %vm2024, %v2025, %v2026
        %v2028 = vrot.slane %v2007, 3
        %v2029 = vsel %vm2024, %v2026, %v2028
        %v2030 = vrot.slane %v2008, 3
        %v2031 = vsel %vm2024, %v2028, %v2030
        %v2032 = vrot.slane %v2009, 3
        %v2033 = vsel %vm2024, %v2030, %v2032
        %v2034 = vrot.slane %v2010, 3
        %v2035 = vsel %vm2024, %v2032, %v2034
        %v2036 = vrot.slane %v2011, 3
        %v2037 = vsel %vm2024, %v2034, %v2036
        %v2038 = vrot.slane %v2012, 3
        %v2039 = vsel %vm2024, %v2036, %v2038
        %v2040 = vrot.slane %v2013, 3
        %v2041 = vsel %vm2024, %v2038, %v2040
        %v2042 = vrot.slane %v2014, 3
        %v2043 = vsel %vm2024, %v2040, %v2042
        %v2044 = vrot.slane %v2015, 3
        %v2045 = vsel %vm2024, %v2042, %v2044
        %v2046 = vrot.slane %v2016, 3
        %v2047 = vsel %vm2024, %v2044, %v2046
        %v2048 = vrot.slane %v2017, 3
        %v2049 = vsel %vm2024, %v2046, %v2048
        %v2050 = vrot.slane %v2018, 3
        %v2051 = vsel %vm2024, %v2048, %v2050
        %v2052 = vrot.slane %v2019, 3
        %v2053 = vsel %vm2024, %v2050, %v2052
        %v2054 = vrot.slane %v2020, 3
        %v2055 = vsel %vm2024, %v2052, %v2054
        %v2056 = vrot.slane %v2021, 3
        %v2057 = vsel %vm2024, %v2054, %v2056
        %v2058 = vrot.slane %v2022, 3
        %v2059 = vsel %vm2024, %v2056, %v2058
        %v2060 = vrot.slane %v2023, 3
        %v2061 = vsel %vm2024, %v2058, %v2060
        %v2096 = vunpack.c.l.b16 %v1915
        %v2097 = vunpack.c.l.b16 %v1916
        %v2098 = vunpack.c.l.b16 %v1917
        %v2099 = vunpack.c.l.b16 %v1918
        %v2100 = vunpack.c.l.b16 %v1919
        %v2101 = vunpack.c.l.b16 %v1920
        %v2102 = vunpack.c.l.b16 %v1921
        %v2103 = vunpack.c.l.b16 %v1922
        %v2104 = vunpack.c.l.b16 %v1923
        %v2105 = vunpack.c.l.b16 %v1924
        %v2106 = vunpack.c.l.b16 %v1925
        %v2107 = vunpack.c.l.b16 %v1926
        %v2108 = vunpack.c.l.b16 %v1927
        %v2109 = vunpack.c.l.b16 %v1928
        %v2110 = vunpack.c.l.b16 %v1929
        %v2111 = vunpack.c.l.b16 %v1930
        %v2112 = vpack.c.b16 %v2097, %v2096
        %v2113 = vpack.c.b16 %v2099, %v2098
        %v2114 = vpack.c.b16 %v2101, %v2100
        %v2115 = vpack.c.b16 %v2103, %v2102
        %v2116 = vpack.c.b16 %v2105, %v2104
        %v2117 = vpack.c.b16 %v2107, %v2106
        %v2118 = vpack.c.b16 %v2109, %v2108
        %v2119 = vpack.c.b16 %v2111, %v2110
        %2128 = vmatprep.subr.bf16.mxu0 0
        %2129 = vmatpush1.bf16.msra.mxu0 %v2119
        %2130 = vmatprep.subr.bf16.mxu0 0
        %2131 = vmatpush1.bf16.msra.mxu0 %v2118
        %2132 = vmatprep.subr.bf16.mxu0 0
        %2133 = vmatpush1.bf16.msra.mxu0 %v2117
        %2134 = vmatprep.subr.bf16.mxu0 0
        %2135 = vmatpush1.bf16.msra.mxu0 %v2116
        %2136 = vmatprep.subr.bf16.mxu0 0
        %2137 = vmatpush1.bf16.msra.mxu0 %v2115
        %2138 = vmatprep.subr.bf16.mxu0 0
        %2139 = vmatpush1.bf16.msra.mxu0 %v2114
        %2140 = vmatprep.subr.bf16.mxu0 0
        %2141 = vmatpush1.bf16.msra.mxu0 %v2113
        %2142 = vmatprep.subr.bf16.mxu0 0
        %2143 = vmatpush1.bf16.msra.mxu0 %v2112
        %2144 = vmatprep.subr.bf16.mxu0 0
        %2145 = vmatpush2.bf16.msra.mxu0 0
        %2146 = vmatprep.subr.bf16.mxu0 0
        %2147 = vmatpush2.bf16.msra.mxu0 0
        %2148 = vmatprep.subr.bf16.mxu0 0
        %2149 = vmatpush2.bf16.msra.mxu0 0
        %2150 = vmatprep.subr.bf16.mxu0 0
        %2151 = vmatpush2.bf16.msra.mxu0 0
        %2152 = vmatprep.subr.bf16.mxu0 0
        %2153 = vmatpush2.bf16.msra.mxu0 0
        %2154 = vmatprep.subr.bf16.mxu0 0
        %2155 = vmatpush2.bf16.msra.mxu0 0
        %2156 = vmatprep.subr.bf16.mxu0 0
        %2157 = vmatpush2.bf16.msra.mxu0 0
        %2158 = vmatprep.subr.bf16.mxu0 0
        %2159 = vmatpush2.bf16.msra.mxu0 0
        %2160 = vmatprep.mubr.bf16.mxu0 0
        %2161 = vmatmul.mubr.bf16.gmra.mxu0 %v2027
        %v2162 = vpop.f32.mrf.mxu0
        %v2163 = vadd.f32 0.0, %v2162
        %v2164 = vpop.f32.mrf.mxu0
        %v2165 = vpop.f32.mrf.mxu0
        %v2166 = vadd.f32 0.0, %v2165
        %v2167 = vpop.f32.mrf.mxu0
        %2168 = vmatprep.mubr.bf16.mxu0 0
        %2169 = vmatmul.mubr.bf16.gmra.mxu0 %v2029
        %v2170 = vpop.f32.mrf.mxu0
        %v2171 = vadd.f32 0.0, %v2170
        %v2172 = vpop.f32.mrf.mxu0
        %v2173 = vpop.f32.mrf.mxu0
        %v2174 = vadd.f32 0.0, %v2173
        %v2175 = vpop.f32.mrf.mxu0
        %2176 = vmatprep.mubr.bf16.mxu0 0
        %2177 = vmatmul.mubr.bf16.gmra.mxu0 %v2031
        %v2178 = vpop.f32.mrf.mxu0
        %v2179 = vadd.f32 0.0, %v2178
        %v2180 = vpop.f32.mrf.mxu0
        %v2181 = vpop.f32.mrf.mxu0
        %v2182 = vadd.f32 0.0, %v2181
        %v2183 = vpop.f32.mrf.mxu0
        %2184 = vmatprep.mubr.bf16.mxu0 0
        %2185 = vmatmul.mubr.bf16.gmra.mxu0 %v2033
        %v2186 = vpop.f32.mrf.mxu0
        %v2187 = vadd.f32 0.0, %v2186
        %v2188 = vpop.f32.mrf.mxu0
        %v2189 = vpop.f32.mrf.mxu0
        %v2190 = vadd.f32 0.0, %v2189
        %v2191 = vpop.f32.mrf.mxu0
        %2192 = vmatprep.mubr.bf16.mxu0 0
        %2193 = vmatmul.mubr.bf16.gmra.mxu0 %v2035
        %v2194 = vpop.f32.mrf.mxu0
        %v2195 = vadd.f32 0.0, %v2194
        %v2196 = vpop.f32.mrf.mxu0
        %v2197 = vpop.f32.mrf.mxu0
        %v2198 = vadd.f32 0.0, %v2197
        %v2199 = vpop.f32.mrf.mxu0
        %2200 = vmatprep.mubr.bf16.mxu0 0
        %2201 = vmatmul.mubr.bf16.gmra.mxu0 %v2037
        %v2202 = vpop.f32.mrf.mxu0
        %v2203 = vadd.f32 0.0, %v2202
        %v2204 = vpop.f32.mrf.mxu0
        %v2205 = vpop.f32.mrf.mxu0
        %v2206 = vadd.f32 0.0, %v2205
        %v2207 = vpop.f32.mrf.mxu0
        %2208 = vmatprep.mubr.bf16.mxu0 0
        %2209 = vmatmul.mubr.bf16.gmra.mxu0 %v2039
        %v2210 = vpop.f32.mrf.mxu0
        %v2211 = vadd.f32 0.0, %v2210
        %v2212 = vpop.f32.mrf.mxu0
        %v2213 = vpop.f32.mrf.mxu0
        %v2214 = vadd.f32 0.0, %v2213
        %v2215 = vpop.f32.mrf.mxu0
        %2216 = vmatprep.mubr.bf16.mxu0 0
        %2217 = vmatmul.mubr.bf16.gmra.mxu0 %v2041
        %v2218 = vpop.f32.mrf.mxu0
        %v2219 = vadd.f32 0.0, %v2218
        %v2220 = vpop.f32.mrf.mxu0
        %v2221 = vpop.f32.mrf.mxu0
        %v2222 = vadd.f32 0.0, %v2221
        %v2223 = vpop.f32.mrf.mxu0
        %2224 = vmatprep.mubr.bf16.mxu0 0
        %2225 = vmatmul.mubr.bf16.gmra.mxu0 %v2043
        %v2226 = vpop.f32.mrf.mxu0
        %v2227 = vadd.f32 0.0, %v2226
        %v2228 = vpop.f32.mrf.mxu0
        %v2229 = vpop.f32.mrf.mxu0
        %v2230 = vadd.f32 0.0, %v2229
        %v2231 = vpop.f32.mrf.mxu0
        %2232 = vmatprep.mubr.bf16.mxu0 0
        %2233 = vmatmul.mubr.bf16.gmra.mxu0 %v2045
        %v2234 = vpop.f32.mrf.mxu0
        %v2235 = vadd.f32 0.0, %v2234
        %v2236 = vpop.f32.mrf.mxu0
        %v2237 = vpop.f32.mrf.mxu0
        %v2238 = vadd.f32 0.0, %v2237
        %v2239 = vpop.f32.mrf.mxu0
        %2240 = vmatprep.mubr.bf16.mxu0 0
        %2241 = vmatmul.mubr.bf16.gmra.mxu0 %v2047
        %v2242 = vpop.f32.mrf.mxu0
        %v2243 = vadd.f32 0.0, %v2242
        %v2244 = vpop.f32.mrf.mxu0
        %v2245 = vpop.f32.mrf.mxu0
        %v2246 = vadd.f32 0.0, %v2245
        %v2247 = vpop.f32.mrf.mxu0
        %2248 = vmatprep.mubr.bf16.mxu0 0
        %2249 = vmatmul.mubr.bf16.gmra.mxu0 %v2049
        %v2250 = vpop.f32.mrf.mxu0
        %v2251 = vadd.f32 0.0, %v2250
        %v2252 = vpop.f32.mrf.mxu0
        %v2253 = vpop.f32.mrf.mxu0
        %v2254 = vadd.f32 0.0, %v2253
        %v2255 = vpop.f32.mrf.mxu0
        %2256 = vmatprep.mubr.bf16.mxu0 0
        %2257 = vmatmul.mubr.bf16.gmra.mxu0 %v2051
        %v2258 = vpop.f32.mrf.mxu0
        %v2259 = vadd.f32 0.0, %v2258
        %v2260 = vpop.f32.mrf.mxu0
        %v2261 = vpop.f32.mrf.mxu0
        %v2262 = vadd.f32 0.0, %v2261
        %v2263 = vpop.f32.mrf.mxu0
        %2264 = vmatprep.mubr.bf16.mxu0 0
        %2265 = vmatmul.mubr.bf16.gmra.mxu0 %v2053
        %v2266 = vpop.f32.mrf.mxu0
        %v2267 = vadd.f32 0.0, %v2266
        %v2268 = vpop.f32.mrf.mxu0
        %v2269 = vpop.f32.mrf.mxu0
        %v2270 = vadd.f32 0.0, %v2269
        %v2271 = vpop.f32.mrf.mxu0
        %2272 = vmatprep.mubr.bf16.mxu0 0
        %2273 = vmatmul.mubr.bf16.gmra.mxu0 %v2055
        %v2274 = vpop.f32.mrf.mxu0
        %v2275 = vadd.f32 0.0, %v2274
        %v2276 = vpop.f32.mrf.mxu0
        %v2277 = vpop.f32.mrf.mxu0
        %v2278 = vadd.f32 0.0, %v2277
        %v2279 = vpop.f32.mrf.mxu0
        %2280 = vmatprep.mubr.bf16.mxu0 0
        %2281 = vmatmul.mubr.bf16.gmra.mxu0 %v2057
        %v2282 = vpop.f32.mrf.mxu0
        %v2283 = vadd.f32 0.0, %v2282
        %v2284 = vpop.f32.mrf.mxu0
        %v2285 = vpop.f32.mrf.mxu0
        %v2286 = vadd.f32 0.0, %v2285
        %v2287 = vpop.f32.mrf.mxu0
        %2288 = vmatprep.mubr.bf16.mxu0 0
        %2289 = vmatmul.mubr.bf16.gmra.mxu0 %v2059
        %v2290 = vpop.f32.mrf.mxu0
        %v2291 = vadd.f32 0.0, %v2290
        %v2292 = vpop.f32.mrf.mxu0
        %v2293 = vpop.f32.mrf.mxu0
        %v2294 = vadd.f32 0.0, %v2293
        %v2295 = vpop.f32.mrf.mxu0
        %2296 = vmatprep.mubr.bf16.mxu0 0
        %2297 = vmatmul.mubr.bf16.gmra.mxu0 %v2061
        %v2298 = vpop.f32.mrf.mxu0
        %v2299 = vadd.f32 0.0, %v2298
        %v2300 = vpop.f32.mrf.mxu0
        %v2301 = vpop.f32.mrf.mxu0
        %v2302 = vadd.f32 0.0, %v2301
        %v2303 = vpop.f32.mrf.mxu0
        %2304 = vdwg.mxu0
        %v2306 = vunpack.c.l.b16 %v1860
        %v2307 = vpack.c.b16 %v1969, %v2306
        %vm2308 = vsmask.f32 5376
        %v2310 = vshrl.u32 %v2307, 16
        %v2312 = vrot.slane %v2310, 2
        %v2313 = vshll.u32 %v2307, 16
        %v2315 = vrot.slane %v2313, 3
        %v2316 = vor.u32 %v2312, %v2315
        %v2318 = vshrl.u32 %v2006, 16
        %v2320 = vrot.slane %v2318, 2
        %v2321 = vshll.u32 %v2006, 16
        %v2323 = vrot.slane %v2321, 3
        %v2324 = vor.u32 %v2320, %v2323
        %v2325 = vsel %vm2308, %v2316, %v2324
        %v2327 = vshrl.u32 %v2007, 16
        %v2329 = vrot.slane %v2327, 2
        %v2330 = vshll.u32 %v2007, 16
        %v2332 = vrot.slane %v2330, 3
        %v2333 = vor.u32 %v2329, %v2332
        %v2334 = vsel %vm2308, %v2324, %v2333
        %v2336 = vshrl.u32 %v2008, 16
        %v2338 = vrot.slane %v2336, 2
        %v2339 = vshll.u32 %v2008, 16
        %v2341 = vrot.slane %v2339, 3
        %v2342 = vor.u32 %v2338, %v2341
        %v2343 = vsel %vm2308, %v2333, %v2342
        %v2345 = vshrl.u32 %v2009, 16
        %v2347 = vrot.slane %v2345, 2
        %v2348 = vshll.u32 %v2009, 16
        %v2350 = vrot.slane %v2348, 3
        %v2351 = vor.u32 %v2347, %v2350
        %v2352 = vsel %vm2308, %v2342, %v2351
        %v2354 = vshrl.u32 %v2010, 16
        %v2356 = vrot.slane %v2354, 2
        %v2357 = vshll.u32 %v2010, 16
        %v2359 = vrot.slane %v2357, 3
        %v2360 = vor.u32 %v2356, %v2359
        %v2361 = vsel %vm2308, %v2351, %v2360
        %v2363 = vshrl.u32 %v2011, 16
        %v2365 = vrot.slane %v2363, 2
        %v2366 = vshll.u32 %v2011, 16
        %v2368 = vrot.slane %v2366, 3
        %v2369 = vor.u32 %v2365, %v2368
        %v2370 = vsel %vm2308, %v2360, %v2369
        %v2372 = vshrl.u32 %v2012, 16
        %v2374 = vrot.slane %v2372, 2
        %v2375 = vshll.u32 %v2012, 16
        %v2377 = vrot.slane %v2375, 3
        %v2378 = vor.u32 %v2374, %v2377
        %v2379 = vsel %vm2308, %v2369, %v2378
        %v2381 = vshrl.u32 %v2013, 16
        %v2383 = vrot.slane %v2381, 2
        %v2384 = vshll.u32 %v2013, 16
        %v2386 = vrot.slane %v2384, 3
        %v2387 = vor.u32 %v2383, %v2386
        %v2388 = vsel %vm2308, %v2378, %v2387
        %v2390 = vshrl.u32 %v2014, 16
        %v2392 = vrot.slane %v2390, 2
        %v2393 = vshll.u32 %v2014, 16
        %v2395 = vrot.slane %v2393, 3
        %v2396 = vor.u32 %v2392, %v2395
        %v2397 = vsel %vm2308, %v2387, %v2396
        %v2399 = vshrl.u32 %v2015, 16
        %v2401 = vrot.slane %v2399, 2
        %v2402 = vshll.u32 %v2015, 16
        %v2404 = vrot.slane %v2402, 3
        %v2405 = vor.u32 %v2401, %v2404
        %v2406 = vsel %vm2308, %v2396, %v2405
        %v2408 = vshrl.u32 %v2016, 16
        %v2410 = vrot.slane %v2408, 2
        %v2411 = vshll.u32 %v2016, 16
        %v2413 = vrot.slane %v2411, 3
        %v2414 = vor.u32 %v2410, %v2413
        %v2415 = vsel %vm2308, %v2405, %v2414
        %v2417 = vshrl.u32 %v2017, 16
        %v2419 = vrot.slane %v2417, 2
        %v2420 = vshll.u32 %v2017, 16
        %v2422 = vrot.slane %v2420, 3
        %v2423 = vor.u32 %v2419, %v2422
        %v2424 = vsel %vm2308, %v2414, %v2423
        %v2426 = vshrl.u32 %v2018, 16
        %v2428 = vrot.slane %v2426, 2
        %v2429 = vshll.u32 %v2018, 16
        %v2431 = vrot.slane %v2429, 3
        %v2432 = vor.u32 %v2428, %v2431
        %v2433 = vsel %vm2308, %v2423, %v2432
        %v2435 = vshrl.u32 %v2019, 16
        %v2437 = vrot.slane %v2435, 2
        %v2438 = vshll.u32 %v2019, 16
        %v2440 = vrot.slane %v2438, 3
        %v2441 = vor.u32 %v2437, %v2440
        %v2442 = vsel %vm2308, %v2432, %v2441
        %v2444 = vshrl.u32 %v2020, 16
        %v2446 = vrot.slane %v2444, 2
        %v2447 = vshll.u32 %v2020, 16
        %v2449 = vrot.slane %v2447, 3
        %v2450 = vor.u32 %v2446, %v2449
        %v2451 = vsel %vm2308, %v2441, %v2450
        %v2453 = vshrl.u32 %v2021, 16
        %v2455 = vrot.slane %v2453, 2
        %v2456 = vshll.u32 %v2021, 16
        %v2458 = vrot.slane %v2456, 3
        %v2459 = vor.u32 %v2455, %v2458
        %v2460 = vsel %vm2308, %v2450, %v2459
        %v2462 = vshrl.u32 %v2022, 16
        %v2464 = vrot.slane %v2462, 2
        %v2465 = vshll.u32 %v2022, 16
        %v2467 = vrot.slane %v2465, 3
        %v2468 = vor.u32 %v2464, %v2467
        %v2469 = vsel %vm2308, %v2459, %v2468
        %v2471 = vshrl.u32 %v2023, 16
        %v2473 = vrot.slane %v2471, 2
        %v2474 = vshll.u32 %v2023, 16
        %v2476 = vrot.slane %v2474, 3
        %v2477 = vor.u32 %v2473, %v2476
        %v2478 = vsel %vm2308, %v2468, %v2477
        %v2513 = vunpack.c.l.b16 %v1897
        %v2514 = vunpack.c.l.b16 %v1898
        %v2515 = vunpack.c.l.b16 %v1899
        %v2516 = vunpack.c.l.b16 %v1900
        %v2517 = vunpack.c.l.b16 %v1901
        %v2518 = vunpack.c.l.b16 %v1902
        %v2519 = vunpack.c.l.b16 %v1903
        %v2520 = vunpack.c.l.b16 %v1904
        %v2521 = vunpack.c.l.b16 %v1905
        %v2522 = vunpack.c.l.b16 %v1906
        %v2523 = vunpack.c.l.b16 %v1907
        %v2524 = vunpack.c.l.b16 %v1908
        %v2525 = vunpack.c.l.b16 %v1909
        %v2526 = vunpack.c.l.b16 %v1910
        %v2527 = vunpack.c.l.b16 %v1911
        %v2528 = vunpack.c.l.b16 %v1912
        %v2529 = vpack.c.b16 %v2514, %v2513
        %v2530 = vpack.c.b16 %v2516, %v2515
        %v2531 = vpack.c.b16 %v2518, %v2517
        %v2532 = vpack.c.b16 %v2520, %v2519
        %v2533 = vpack.c.b16 %v2522, %v2521
        %v2534 = vpack.c.b16 %v2524, %v2523
        %v2535 = vpack.c.b16 %v2526, %v2525
        %v2536 = vpack.c.b16 %v2528, %v2527
        %2545 = vmatprep.subr.bf16.mxu0 0
        %2546 = vmatpush1.bf16.msra.mxu0 %v2536
        %2547 = vmatprep.subr.bf16.mxu0 0
        %2548 = vmatpush1.bf16.msra.mxu0 %v2535
        %2549 = vmatprep.subr.bf16.mxu0 0
        %2550 = vmatpush1.bf16.msra.mxu0 %v2534
        %2551 = vmatprep.subr.bf16.mxu0 0
        %2552 = vmatpush1.bf16.msra.mxu0 %v2533
        %2553 = vmatprep.subr.bf16.mxu0 0
        %2554 = vmatpush1.bf16.msra.mxu0 %v2532
        %2555 = vmatprep.subr.bf16.mxu0 0
        %2556 = vmatpush1.bf16.msra.mxu0 %v2531
        %2557 = vmatprep.subr.bf16.mxu0 0
        %2558 = vmatpush1.bf16.msra.mxu0 %v2530
        %2559 = vmatprep.subr.bf16.mxu0 0
        %2560 = vmatpush1.bf16.msra.mxu0 %v2529
        %2561 = vmatprep.subr.bf16.mxu0 0
        %2562 = vmatpush2.bf16.msra.mxu0 0
        %2563 = vmatprep.subr.bf16.mxu0 0
        %2564 = vmatpush2.bf16.msra.mxu0 0
        %2565 = vmatprep.subr.bf16.mxu0 0
        %2566 = vmatpush2.bf16.msra.mxu0 0
        %2567 = vmatprep.subr.bf16.mxu0 0
        %2568 = vmatpush2.bf16.msra.mxu0 0
        %2569 = vmatprep.subr.bf16.mxu0 0
        %2570 = vmatpush2.bf16.msra.mxu0 0
        %2571 = vmatprep.subr.bf16.mxu0 0
        %2572 = vmatpush2.bf16.msra.mxu0 0
        %2573 = vmatprep.subr.bf16.mxu0 0
        %2574 = vmatpush2.bf16.msra.mxu0 0
        %2575 = vmatprep.subr.bf16.mxu0 0
        %2576 = vmatpush2.bf16.msra.mxu0 0
        %2577 = vmatprep.mubr.bf16.mxu0 0
        %2578 = vmatmul.mubr.bf16.gmra.mxu0 %v2325
        %v2579 = vpop.f32.mrf.mxu0
        %v2580 = vadd.f32 %v2163, %v2579
        %v2581 = vpop.f32.mrf.mxu0
        %v2582 = vpop.f32.mrf.mxu0
        %v2583 = vadd.f32 %v2166, %v2582
        %v2584 = vpop.f32.mrf.mxu0
        %2585 = vmatprep.mubr.bf16.mxu0 0
        %2586 = vmatmul.mubr.bf16.gmra.mxu0 %v2334
        %v2587 = vpop.f32.mrf.mxu0
        %v2588 = vadd.f32 %v2171, %v2587
        %v2589 = vpop.f32.mrf.mxu0
        %v2590 = vpop.f32.mrf.mxu0
        %v2591 = vadd.f32 %v2174, %v2590
        %v2592 = vpop.f32.mrf.mxu0
        %2593 = vmatprep.mubr.bf16.mxu0 0
        %2594 = vmatmul.mubr.bf16.gmra.mxu0 %v2343
        %v2595 = vpop.f32.mrf.mxu0
        %v2596 = vadd.f32 %v2179, %v2595
        %v2597 = vpop.f32.mrf.mxu0
        %v2598 = vpop.f32.mrf.mxu0
        %v2599 = vadd.f32 %v2182, %v2598
        %v2600 = vpop.f32.mrf.mxu0
        %2601 = vmatprep.mubr.bf16.mxu0 0
        %2602 = vmatmul.mubr.bf16.gmra.mxu0 %v2352
        %v2603 = vpop.f32.mrf.mxu0
        %v2604 = vadd.f32 %v2187, %v2603
        %v2605 = vpop.f32.mrf.mxu0
        %v2606 = vpop.f32.mrf.mxu0
        %v2607 = vadd.f32 %v2190, %v2606
        %v2608 = vpop.f32.mrf.mxu0
        %2609 = vmatprep.mubr.bf16.mxu0 0
        %2610 = vmatmul.mubr.bf16.gmra.mxu0 %v2361
        %v2611 = vpop.f32.mrf.mxu0
        %v2612 = vadd.f32 %v2195, %v2611
        %v2613 = vpop.f32.mrf.mxu0
        %v2614 = vpop.f32.mrf.mxu0
        %v2615 = vadd.f32 %v2198, %v2614
        %v2616 = vpop.f32.mrf.mxu0
        %2617 = vmatprep.mubr.bf16.mxu0 0
        %2618 = vmatmul.mubr.bf16.gmra.mxu0 %v2370
        %v2619 = vpop.f32.mrf.mxu0
        %v2620 = vadd.f32 %v2203, %v2619
        %v2621 = vpop.f32.mrf.mxu0
        %v2622 = vpop.f32.mrf.mxu0
        %v2623 = vadd.f32 %v2206, %v2622
        %v2624 = vpop.f32.mrf.mxu0
        %2625 = vmatprep.mubr.bf16.mxu0 0
        %2626 = vmatmul.mubr.bf16.gmra.mxu0 %v2379
        %v2627 = vpop.f32.mrf.mxu0
        %v2628 = vadd.f32 %v2211, %v2627
        %v2629 = vpop.f32.mrf.mxu0
        %v2630 = vpop.f32.mrf.mxu0
        %v2631 = vadd.f32 %v2214, %v2630
        %v2632 = vpop.f32.mrf.mxu0
        %2633 = vmatprep.mubr.bf16.mxu0 0
        %2634 = vmatmul.mubr.bf16.gmra.mxu0 %v2388
        %v2635 = vpop.f32.mrf.mxu0
        %v2636 = vadd.f32 %v2219, %v2635
        %v2637 = vpop.f32.mrf.mxu0
        %v2638 = vpop.f32.mrf.mxu0
        %v2639 = vadd.f32 %v2222, %v2638
        %v2640 = vpop.f32.mrf.mxu0
        %2641 = vmatprep.mubr.bf16.mxu0 0
        %2642 = vmatmul.mubr.bf16.gmra.mxu0 %v2397
        %v2643 = vpop.f32.mrf.mxu0
        %v2644 = vadd.f32 %v2227, %v2643
        %v2645 = vpop.f32.mrf.mxu0
        %v2646 = vpop.f32.mrf.mxu0
        %v2647 = vadd.f32 %v2230, %v2646
        %v2648 = vpop.f32.mrf.mxu0
        %2649 = vmatprep.mubr.bf16.mxu0 0
        %2650 = vmatmul.mubr.bf16.gmra.mxu0 %v2406
        %v2651 = vpop.f32.mrf.mxu0
        %v2652 = vadd.f32 %v2235, %v2651
        %v2653 = vpop.f32.mrf.mxu0
        %v2654 = vpop.f32.mrf.mxu0
        %v2655 = vadd.f32 %v2238, %v2654
        %v2656 = vpop.f32.mrf.mxu0
        %2657 = vmatprep.mubr.bf16.mxu0 0
        %2658 = vmatmul.mubr.bf16.gmra.mxu0 %v2415
        %v2659 = vpop.f32.mrf.mxu0
        %v2660 = vadd.f32 %v2243, %v2659
        %v2661 = vpop.f32.mrf.mxu0
        %v2662 = vpop.f32.mrf.mxu0
        %v2663 = vadd.f32 %v2246, %v2662
        %v2664 = vpop.f32.mrf.mxu0
        %2665 = vmatprep.mubr.bf16.mxu0 0
        %2666 = vmatmul.mubr.bf16.gmra.mxu0 %v2424
        %v2667 = vpop.f32.mrf.mxu0
        %v2668 = vadd.f32 %v2251, %v2667
        %v2669 = vpop.f32.mrf.mxu0
        %v2670 = vpop.f32.mrf.mxu0
        %v2671 = vadd.f32 %v2254, %v2670
        %v2672 = vpop.f32.mrf.mxu0
        %2673 = vmatprep.mubr.bf16.mxu0 0
        %2674 = vmatmul.mubr.bf16.gmra.mxu0 %v2433
        %v2675 = vpop.f32.mrf.mxu0
        %v2676 = vadd.f32 %v2259, %v2675
        %v2677 = vpop.f32.mrf.mxu0
        %v2678 = vpop.f32.mrf.mxu0
        %v2679 = vadd.f32 %v2262, %v2678
        %v2680 = vpop.f32.mrf.mxu0
        %2681 = vmatprep.mubr.bf16.mxu0 0
        %2682 = vmatmul.mubr.bf16.gmra.mxu0 %v2442
        %v2683 = vpop.f32.mrf.mxu0
        %v2684 = vadd.f32 %v2267, %v2683
        %v2685 = vpop.f32.mrf.mxu0
        %v2686 = vpop.f32.mrf.mxu0
        %v2687 = vadd.f32 %v2270, %v2686
        %v2688 = vpop.f32.mrf.mxu0
        %2689 = vmatprep.mubr.bf16.mxu0 0
        %2690 = vmatmul.mubr.bf16.gmra.mxu0 %v2451
        %v2691 = vpop.f32.mrf.mxu0
        %v2692 = vadd.f32 %v2275, %v2691
        %v2693 = vpop.f32.mrf.mxu0
        %v2694 = vpop.f32.mrf.mxu0
        %v2695 = vadd.f32 %v2278, %v2694
        %v2696 = vpop.f32.mrf.mxu0
        %2697 = vmatprep.mubr.bf16.mxu0 0
        %2698 = vmatmul.mubr.bf16.gmra.mxu0 %v2460
        %v2699 = vpop.f32.mrf.mxu0
        %v2700 = vadd.f32 %v2283, %v2699
        %v2701 = vpop.f32.mrf.mxu0
        %v2702 = vpop.f32.mrf.mxu0
        %v2703 = vadd.f32 %v2286, %v2702
        %v2704 = vpop.f32.mrf.mxu0
        %2705 = vmatprep.mubr.bf16.mxu0 0
        %2706 = vmatmul.mubr.bf16.gmra.mxu0 %v2469
        %v2707 = vpop.f32.mrf.mxu0
        %v2708 = vadd.f32 %v2291, %v2707
        %v2709 = vpop.f32.mrf.mxu0
        %v2710 = vpop.f32.mrf.mxu0
        %v2711 = vadd.f32 %v2294, %v2710
        %v2712 = vpop.f32.mrf.mxu0
        %2713 = vmatprep.mubr.bf16.mxu0 0
        %2714 = vmatmul.mubr.bf16.gmra.mxu0 %v2478
        %v2715 = vpop.f32.mrf.mxu0
        %v2716 = vadd.f32 %v2299, %v2715
        %v2717 = vpop.f32.mrf.mxu0
        %v2718 = vpop.f32.mrf.mxu0
        %v2719 = vadd.f32 %v2302, %v2718
        %v2720 = vpop.f32.mrf.mxu0
        %2721 = vdwg.mxu0
        %v2722 = vld [vmem:[#allocation2 + $0x94] sm:$0xf]
        %s2723 = scalar_lea.vmem [#allocation8], 128
        %v2724 = vld [vmem:[%s2723] sm:$0xf]
        %v2725 = vld [vmem:[%s2723 + $0x4] sm:$0xf]
        %v2726 = vld [vmem:[%s2723 + $0x8] sm:$0xf]
        %v2727 = vld [vmem:[%s2723 + $0xc] sm:$0xf]
        %v2728 = vld [vmem:[%s2723 + $0x10] sm:$0xf]
        %v2729 = vld [vmem:[%s2723 + $0x14] sm:$0xf]
        %v2730 = vld [vmem:[%s2723 + $0x18] sm:$0xf]
        %v2731 = vld [vmem:[%s2723 + $0x1c] sm:$0xf]
        %v2732 = vld [vmem:[%s2723 + $0x20] sm:$0xf]
        %v2733 = vld [vmem:[%s2723 + $0x24] sm:$0xf]
        %v2734 = vld [vmem:[%s2723 + $0x28] sm:$0xf]
        %v2735 = vld [vmem:[%s2723 + $0x2c] sm:$0xf]
        %v2736 = vld [vmem:[%s2723 + $0x30] sm:$0xf]
        %v2737 = vld [vmem:[%s2723 + $0x34] sm:$0xf]
        %v2738 = vld [vmem:[%s2723 + $0x38] sm:$0xf]
        %v2739 = vld [vmem:[%s2723 + $0x3c] sm:$0xf]
        %v2741 = vunpack.c.l.b16 %v2722
        %v2742 = vpack.c.b16 %v2741, %v2741
        %vm2743 = vsmask.f32 4352
        %v2745 = vshrl.u32 %v2005, 16
        %v2747 = vrot.slane %v2745, 3
        %v2748 = vshll.u32 %v2005, 16
        %v2750 = vrot.slane %v2748, 4
        %v2751 = vor.u32 %v2747, %v2750
        %v2752 = vrot.slane %v2318, 3
        %v2753 = vrot.slane %v2321, 4
        %v2754 = vor.u32 %v2752, %v2753
        %v2755 = vsel %vm2743, %v2751, %v2754
        %v2756 = vrot.slane %v2327, 3
        %v2757 = vrot.slane %v2330, 4
        %v2758 = vor.u32 %v2756, %v2757
        %v2759 = vsel %vm2743, %v2754, %v2758
        %v2760 = vrot.slane %v2336, 3
        %v2761 = vrot.slane %v2339, 4
        %v2762 = vor.u32 %v2760, %v2761
        %v2763 = vsel %vm2743, %v2758, %v2762
        %v2764 = vrot.slane %v2345, 3
        %v2765 = vrot.slane %v2348, 4
        %v2766 = vor.u32 %v2764, %v2765
        %v2767 = vsel %vm2743, %v2762, %v2766
        %v2768 = vrot.slane %v2354, 3
        %v2769 = vrot.slane %v2357, 4
        %v2770 = vor.u32 %v2768, %v2769
        %v2771 = vsel %vm2743, %v2766, %v2770
        %v2772 = vrot.slane %v2363, 3
        %v2773 = vrot.slane %v2366, 4
        %v2774 = vor.u32 %v2772, %v2773
        %v2775 = vsel %vm2743, %v2770, %v2774
        %v2776 = vrot.slane %v2372, 3
        %v2777 = vrot.slane %v2375, 4
        %v2778 = vor.u32 %v2776, %v2777
        %v2779 = vsel %vm2743, %v2774, %v2778
        %v2780 = vrot.slane %v2381, 3
        %v2781 = vrot.slane %v2384, 4
        %v2782 = vor.u32 %v2780, %v2781
        %v2783 = vsel %vm2743, %v2778, %v2782
        %v2784 = vrot.slane %v2390, 3
        %v2785 = vrot.slane %v2393, 4
        %v2786 = vor.u32 %v2784, %v2785
        %v2787 = vsel %vm2743, %v2782, %v2786
        %v2788 = vrot.slane %v2399, 3
        %v2789 = vrot.slane %v2402, 4
        %v2790 = vor.u32 %v2788, %v2789
        %v2791 = vsel %vm2743, %v2786, %v2790
        %v2792 = vrot.slane %v2408, 3
        %v2793 = vrot.slane %v2411, 4
        %v2794 = vor.u32 %v2792, %v2793
        %v2795 = vsel %vm2743, %v2790, %v2794
        %v2796 = vrot.slane %v2417, 3
        %v2797 = vrot.slane %v2420, 4
        %v2798 = vor.u32 %v2796, %v2797
        %v2799 = vsel %vm2743, %v2794, %v2798
        %v2800 = vrot.slane %v2426, 3
        %v2801 = vrot.slane %v2429, 4
        %v2802 = vor.u32 %v2800, %v2801
        %v2803 = vsel %vm2743, %v2798, %v2802
        %v2804 = vrot.slane %v2435, 3
        %v2805 = vrot.slane %v2438, 4
        %v2806 = vor.u32 %v2804, %v2805
        %v2807 = vsel %vm2743, %v2802, %v2806
        %v2808 = vrot.slane %v2444, 3
        %v2809 = vrot.slane %v2447, 4
        %v2810 = vor.u32 %v2808, %v2809
        %v2811 = vsel %vm2743, %v2806, %v2810
        %v2812 = vrot.slane %v2453, 3
        %v2813 = vrot.slane %v2456, 4
        %v2814 = vor.u32 %v2812, %v2813
        %v2815 = vsel %vm2743, %v2810, %v2814
        %v2816 = vrot.slane %v2462, 3
        %v2817 = vrot.slane %v2465, 4
        %v2818 = vor.u32 %v2816, %v2817
        %v2819 = vsel %vm2743, %v2814, %v2818
        %v2821 = vshrl.u32 %v2742, 16
        %v2823 = vrot.slane %v2821, 3
        %v2824 = vshll.u32 %v2742, 16
        %v2826 = vrot.slane %v2824, 4
        %v2827 = vor.u32 %v2823, %v2826
        %v2828 = vsel %vm2743, %v2818, %v2827
        %v2863 = vunpack.c.l.b16 %v2724
        %v2864 = vunpack.c.l.b16 %v2725
        %v2865 = vunpack.c.l.b16 %v2726
        %v2866 = vunpack.c.l.b16 %v2727
        %v2867 = vunpack.c.l.b16 %v2728
        %v2868 = vunpack.c.l.b16 %v2729
        %v2869 = vunpack.c.l.b16 %v2730
        %v2870 = vunpack.c.l.b16 %v2731
        %v2871 = vunpack.c.l.b16 %v2732
        %v2872 = vunpack.c.l.b16 %v2733
        %v2873 = vunpack.c.l.b16 %v2734
        %v2874 = vunpack.c.l.b16 %v2735
        %v2875 = vunpack.c.l.b16 %v2736
        %v2876 = vunpack.c.l.b16 %v2737
        %v2877 = vunpack.c.l.b16 %v2738
        %v2878 = vunpack.c.l.b16 %v2739
        %v2879 = vpack.c.b16 %v2864, %v2863
        %v2880 = vpack.c.b16 %v2866, %v2865
        %v2881 = vpack.c.b16 %v2868, %v2867
        %v2882 = vpack.c.b16 %v2870, %v2869
        %v2883 = vpack.c.b16 %v2872, %v2871
        %v2884 = vpack.c.b16 %v2874, %v2873
        %v2885 = vpack.c.b16 %v2876, %v2875
        %v2886 = vpack.c.b16 %v2878, %v2877
        %2895 = vmatprep.subr.bf16.mxu0 0
        %2896 = vmatpush1.bf16.msra.mxu0 %v2886
        %2897 = vmatprep.subr.bf16.mxu0 0
        %2898 = vmatpush1.bf16.msra.mxu0 %v2885
        %2899 = vmatprep.subr.bf16.mxu0 0
        %2900 = vmatpush1.bf16.msra.mxu0 %v2884
        %2901 = vmatprep.subr.bf16.mxu0 0
        %2902 = vmatpush1.bf16.msra.mxu0 %v2883
        %2903 = vmatprep.subr.bf16.mxu0 0
        %2904 = vmatpush1.bf16.msra.mxu0 %v2882
        %2905 = vmatprep.subr.bf16.mxu0 0
        %2906 = vmatpush1.bf16.msra.mxu0 %v2881
        %2907 = vmatprep.subr.bf16.mxu0 0
        %2908 = vmatpush1.bf16.msra.mxu0 %v2880
        %2909 = vmatprep.subr.bf16.mxu0 0
        %2910 = vmatpush1.bf16.msra.mxu0 %v2879
        %2911 = vmatprep.subr.bf16.mxu0 0
        %2912 = vmatpush2.bf16.msra.mxu0 0
        %2913 = vmatprep.subr.bf16.mxu0 0
        %2914 = vmatpush2.bf16.msra.mxu0 0
        %2915 = vmatprep.subr.bf16.mxu0 0
        %2916 = vmatpush2.bf16.msra.mxu0 0
        %2917 = vmatprep.subr.bf16.mxu0 0
        %2918 = vmatpush2.bf16.msra.mxu0 0
        %2919 = vmatprep.subr.bf16.mxu0 0
        %2920 = vmatpush2.bf16.msra.mxu0 0
        %2921 = vmatprep.subr.bf16.mxu0 0
        %2922 = vmatpush2.bf16.msra.mxu0 0
        %2923 = vmatprep.subr.bf16.mxu0 0
        %2924 = vmatpush2.bf16.msra.mxu0 0
        %2925 = vmatprep.subr.bf16.mxu0 0
        %2926 = vmatpush2.bf16.msra.mxu0 0
        %2927 = vmatprep.mubr.bf16.mxu0 0
        %2928 = vmatmul.mubr.bf16.gmra.mxu0 %v2755
        %v2929 = vpop.f32.mrf.mxu0
        %v2930 = vadd.f32 0.0, %v2929
        %v2931 = vpop.f32.mrf.mxu0
        %v2932 = vpop.f32.mrf.mxu0
        %v2933 = vadd.f32 0.0, %v2932
        %v2934 = vpop.f32.mrf.mxu0
        %2935 = vmatprep.mubr.bf16.mxu0 0
        %2936 = vmatmul.mubr.bf16.gmra.mxu0 %v2759
        %v2937 = vpop.f32.mrf.mxu0
        %v2938 = vadd.f32 0.0, %v2937
        %v2939 = vpop.f32.mrf.mxu0
        %v2940 = vpop.f32.mrf.mxu0
        %v2941 = vadd.f32 0.0, %v2940
        %v2942 = vpop.f32.mrf.mxu0
        %2943 = vmatprep.mubr.bf16.mxu0 0
        %2944 = vmatmul.mubr.bf16.gmra.mxu0 %v2763
        %v2945 = vpop.f32.mrf.mxu0
        %v2946 = vadd.f32 0.0, %v2945
        %v2947 = vpop.f32.mrf.mxu0
        %v2948 = vpop.f32.mrf.mxu0
        %v2949 = vadd.f32 0.0, %v2948
        %v2950 = vpop.f32.mrf.mxu0
        %2951 = vmatprep.mubr.bf16.mxu0 0
        %2952 = vmatmul.mubr.bf16.gmra.mxu0 %v2767
        %v2953 = vpop.f32.mrf.mxu0
        %v2954 = vadd.f32 0.0, %v2953
        %v2955 = vpop.f32.mrf.mxu0
        %v2956 = vpop.f32.mrf.mxu0
        %v2957 = vadd.f32 0.0, %v2956
        %v2958 = vpop.f32.mrf.mxu0
        %2959 = vmatprep.mubr.bf16.mxu0 0
        %2960 = vmatmul.mubr.bf16.gmra.mxu0 %v2771
        %v2961 = vpop.f32.mrf.mxu0
        %v2962 = vadd.f32 0.0, %v2961
        %v2963 = vpop.f32.mrf.mxu0
        %v2964 = vpop.f32.mrf.mxu0
        %v2965 = vadd.f32 0.0, %v2964
        %v2966 = vpop.f32.mrf.mxu0
        %2967 = vmatprep.mubr.bf16.mxu0 0
        %2968 = vmatmul.mubr.bf16.gmra.mxu0 %v2775
        %v2969 = vpop.f32.mrf.mxu0
        %v2970 = vadd.f32 0.0, %v2969
        %v2971 = vpop.f32.mrf.mxu0
        %v2972 = vpop.f32.mrf.mxu0
        %v2973 = vadd.f32 0.0, %v2972
        %v2974 = vpop.f32.mrf.mxu0
        %2975 = vmatprep.mubr.bf16.mxu0 0
        %2976 = vmatmul.mubr.bf16.gmra.mxu0 %v2779
        %v2977 = vpop.f32.mrf.mxu0
        %v2978 = vadd.f32 0.0, %v2977
        %v2979 = vpop.f32.mrf.mxu0
        %v2980 = vpop.f32.mrf.mxu0
        %v2981 = vadd.f32 0.0, %v2980
        %v2982 = vpop.f32.mrf.mxu0
        %2983 = vmatprep.mubr.bf16.mxu0 0
        %2984 = vmatmul.mubr.bf16.gmra.mxu0 %v2783
        %v2985 = vpop.f32.mrf.mxu0
        %v2986 = vadd.f32 0.0, %v2985
        %v2987 = vpop.f32.mrf.mxu0
        %v2988 = vpop.f32.mrf.mxu0
        %v2989 = vadd.f32 0.0, %v2988
        %v2990 = vpop.f32.mrf.mxu0
        %2991 = vmatprep.mubr.bf16.mxu0 0
        %2992 = vmatmul.mubr.bf16.gmra.mxu0 %v2787
        %v2993 = vpop.f32.mrf.mxu0
        %v2994 = vadd.f32 0.0, %v2993
        %v2995 = vpop.f32.mrf.mxu0
        %v2996 = vpop.f32.mrf.mxu0
        %v2997 = vadd.f32 0.0, %v2996
        %v2998 = vpop.f32.mrf.mxu0
        %2999 = vmatprep.mubr.bf16.mxu0 0
        %3000 = vmatmul.mubr.bf16.gmra.mxu0 %v2791
        %v3001 = vpop.f32.mrf.mxu0
        %v3002 = vadd.f32 0.0, %v3001
        %v3003 = vpop.f32.mrf.mxu0
        %v3004 = vpop.f32.mrf.mxu0
        %v3005 = vadd.f32 0.0, %v3004
        %v3006 = vpop.f32.mrf.mxu0
        %3007 = vmatprep.mubr.bf16.mxu0 0
        %3008 = vmatmul.mubr.bf16.gmra.mxu0 %v2795
        %v3009 = vpop.f32.mrf.mxu0
        %v3010 = vadd.f32 0.0, %v3009
        %v3011 = vpop.f32.mrf.mxu0
        %v3012 = vpop.f32.mrf.mxu0
        %v3013 = vadd.f32 0.0, %v3012
        %v3014 = vpop.f32.mrf.mxu0
        %3015 = vmatprep.mubr.bf16.mxu0 0
        %3016 = vmatmul.mubr.bf16.gmra.mxu0 %v2799
        %v3017 = vpop.f32.mrf.mxu0
        %v3018 = vadd.f32 0.0, %v3017
        %v3019 = vpop.f32.mrf.mxu0
        %v3020 = vpop.f32.mrf.mxu0
        %v3021 = vadd.f32 0.0, %v3020
        %v3022 = vpop.f32.mrf.mxu0
        %3023 = vmatprep.mubr.bf16.mxu0 0
        %3024 = vmatmul.mubr.bf16.gmra.mxu0 %v2803
        %v3025 = vpop.f32.mrf.mxu0
        %v3026 = vadd.f32 0.0, %v3025
        %v3027 = vpop.f32.mrf.mxu0
        %v3028 = vpop.f32.mrf.mxu0
        %v3029 = vadd.f32 0.0, %v3028
        %v3030 = vpop.f32.mrf.mxu0
        %3031 = vmatprep.mubr.bf16.mxu0 0
        %3032 = vmatmul.mubr.bf16.gmra.mxu0 %v2807
        %v3033 = vpop.f32.mrf.mxu0
        %v3034 = vadd.f32 0.0, %v3033
        %v3035 = vpop.f32.mrf.mxu0
        %v3036 = vpop.f32.mrf.mxu0
        %v3037 = vadd.f32 0.0, %v3036
        %v3038 = vpop.f32.mrf.mxu0
        %3039 = vmatprep.mubr.bf16.mxu0 0
        %3040 = vmatmul.mubr.bf16.gmra.mxu0 %v2811
        %v3041 = vpop.f32.mrf.mxu0
        %v3042 = vadd.f32 0.0, %v3041
        %v3043 = vpop.f32.mrf.mxu0
        %v3044 = vpop.f32.mrf.mxu0
        %v3045 = vadd.f32 0.0, %v3044
        %v3046 = vpop.f32.mrf.mxu0
        %3047 = vmatprep.mubr.bf16.mxu0 0
        %3048 = vmatmul.mubr.bf16.gmra.mxu0 %v2815
        %v3049 = vpop.f32.mrf.mxu0
        %v3050 = vadd.f32 0.0, %v3049
        %v3051 = vpop.f32.mrf.mxu0
        %v3052 = vpop.f32.mrf.mxu0
        %v3053 = vadd.f32 0.0, %v3052
        %v3054 = vpop.f32.mrf.mxu0
        %3055 = vmatprep.mubr.bf16.mxu0 0
        %3056 = vmatmul.mubr.bf16.gmra.mxu0 %v2819
        %v3057 = vpop.f32.mrf.mxu0
        %v3058 = vadd.f32 0.0, %v3057
        %v3059 = vpop.f32.mrf.mxu0
        %v3060 = vpop.f32.mrf.mxu0
        %v3061 = vadd.f32 0.0, %v3060
        %v3062 = vpop.f32.mrf.mxu0
        %3063 = vmatprep.mubr.bf16.mxu0 0
        %3064 = vmatmul.mubr.bf16.gmra.mxu0 %v2828
        %v3065 = vpop.f32.mrf.mxu0
        %v3066 = vadd.f32 0.0, %v3065
        %v3067 = vpop.f32.mrf.mxu0
        %v3068 = vpop.f32.mrf.mxu0
        %v3069 = vadd.f32 0.0, %v3068
        %v3070 = vpop.f32.mrf.mxu0
        %3071 = vdwg.mxu0
        %v3072 = vadd.f32 %v2580, %v2930
        %v3073 = vadd.f32 %v2583, %v2933
        %v3074 = vadd.f32 %v2588, %v2938
        %v3075 = vadd.f32 %v2591, %v2941
        %v3076 = vadd.f32 %v2596, %v2946
        %v3077 = vadd.f32 %v2599, %v2949
        %v3078 = vadd.f32 %v2604, %v2954
        %v3079 = vadd.f32 %v2607, %v2957
        %v3080 = vadd.f32 %v2612, %v2962
        %v3081 = vadd.f32 %v2615, %v2965
        %v3082 = vadd.f32 %v2620, %v2970
        %v3083 = vadd.f32 %v2623, %v2973
        %v3084 = vadd.f32 %v2628, %v2978
        %v3085 = vadd.f32 %v2631, %v2981
        %v3086 = vadd.f32 %v2636, %v2986
        %v3087 = vadd.f32 %v2639, %v2989
        %v3088 = vadd.f32 %v2644, %v2994
        %v3089 = vadd.f32 %v2647, %v2997
        %v3090 = vadd.f32 %v2652, %v3002
        %v3091 = vadd.f32 %v2655, %v3005
        %v3092 = vadd.f32 %v2660, %v3010
        %v3093 = vadd.f32 %v2663, %v3013
        %v3094 = vadd.f32 %v2668, %v3018
        %v3095 = vadd.f32 %v2671, %v3021
        %v3096 = vadd.f32 %v2676, %v3026
        %v3097 = vadd.f32 %v2679, %v3029
        %v3098 = vadd.f32 %v2684, %v3034
        %v3099 = vadd.f32 %v2687, %v3037
        %v3100 = vadd.f32 %v2692, %v3042
        %v3101 = vadd.f32 %v2695, %v3045
        %v3102 = vadd.f32 %v2700, %v3050
        %v3103 = vadd.f32 %v2703, %v3053
        %v3104 = vadd.f32 %v2708, %v3058
        %v3105 = vadd.f32 %v2711, %v3061
        %v3106 = vadd.f32 %v2716, %v3066
        %v3107 = vadd.f32 %v2719, %v3069
        %v3108 = vld [vmem:[#allocation2 + $0xc] sm:$0x8]
        %v3109 = vld [vmem:[#allocation2 + $0x10] sm:$0xf]
        %v3110 = vld [vmem:[#allocation2 + $0x14] sm:$0xf]
        %v3111 = vld [vmem:[#allocation2 + $0x18] sm:$0xf]
        %v3112 = vld [vmem:[#allocation2 + $0x1c] sm:$0xf]
        %v3113 = vld [vmem:[#allocation2 + $0x20] sm:$0xf]
        %v3114 = vld [vmem:[#allocation2 + $0x24] sm:$0xf]
        %v3115 = vld [vmem:[#allocation2 + $0x28] sm:$0xf]
        %v3116 = vld [vmem:[#allocation2 + $0x2c] sm:$0xf]
        %v3117 = vld [vmem:[#allocation2 + $0x30] sm:$0xf]
        %v3118 = vld [vmem:[#allocation2 + $0x34] sm:$0xf]
        %v3119 = vld [vmem:[#allocation2 + $0x38] sm:$0xf]
        %v3120 = vld [vmem:[#allocation2 + $0x3c] sm:$0xf]
        %v3121 = vld [vmem:[#allocation2 + $0x40] sm:$0xf]
        %v3122 = vld [vmem:[#allocation2 + $0x44] sm:$0xf]
        %v3123 = vld [vmem:[#allocation2 + $0x48] sm:$0xf]
        %v3124 = vld [vmem:[#allocation2 + $0x4c] sm:$0xf]
        %v3125 = vld [vmem:[#allocation2 + $0x50] sm:$0xf]
        %v3126 = vld [vmem:[#allocation2 + $0x54] sm:$0xf]
        %v3127 = vld [vmem:[#allocation2 + $0x58] sm:$0xf]
        %v3128 = vld [vmem:[#allocation2 + $0x5c] sm:$0xf]
        %v3129 = vld [vmem:[#allocation2 + $0x60] sm:$0xf]
        %v3130 = vld [vmem:[#allocation2 + $0x64] sm:$0xf]
        %v3131 = vld [vmem:[#allocation2 + $0x68] sm:$0xf]
        %v3132 = vld [vmem:[#allocation2 + $0x6c] sm:$0xf]
        %v3133 = vld [vmem:[#allocation2 + $0x70] sm:$0xf]
        %v3134 = vld [vmem:[#allocation2 + $0x74] sm:$0xf]
        %v3135 = vld [vmem:[#allocation2 + $0x78] sm:$0xf]
        %v3136 = vld [vmem:[#allocation2 + $0x7c] sm:$0xf]
        %v3137 = vld [vmem:[#allocation2 + $0x80] sm:$0xf]
        %v3138 = vld [vmem:[#allocation2 + $0x84] sm:$0xf]
        %v3139 = vld [vmem:[#allocation2 + $0x88] sm:$0xf]
        %v3140 = vld [vmem:[#allocation2 + $0x8c] sm:$0xf]
        %v3141 = vld [vmem:[#allocation2 + $0x90] sm:$0xf]
        %v3142 = vld [vmem:[#allocation2 + $0x94] sm:$0xf]
        %v3143 = vld [vmem:[#allocation2 + $0x98] sm:$0xf]
        %v3144 = vld [vmem:[#allocation2 + $0x9c] sm:$0xf]
        %s3145 = scalar_lea.vmem [#allocation8], 192
        %v3146 = vld [vmem:[%s3145] sm:$0xf]
        %v3147 = vld [vmem:[%s3145 + $0x4] sm:$0xf]
        %v3148 = vld [vmem:[%s3145 + $0x8] sm:$0xf]
        %v3149 = vld [vmem:[%s3145 + $0xc] sm:$0xf]
        %v3150 = vld [vmem:[%s3145 + $0x10] sm:$0xf]
        %v3151 = vld [vmem:[%s3145 + $0x14] sm:$0xf]
        %v3152 = vld [vmem:[%s3145 + $0x18] sm:$0xf]
        %v3153 = vld [vmem:[%s3145 + $0x1c] sm:$0xf]
        %v3154 = vld [vmem:[%s3145 + $0x20] sm:$0xf]
        %v3155 = vld [vmem:[%s3145 + $0x24] sm:$0xf]
        %v3156 = vld [vmem:[%s3145 + $0x28] sm:$0xf]
        %v3157 = vld [vmem:[%s3145 + $0x2c] sm:$0xf]
        %v3158 = vld [vmem:[%s3145 + $0x30] sm:$0xf]
        %v3159 = vld [vmem:[%s3145 + $0x34] sm:$0xf]
        %v3160 = vld [vmem:[%s3145 + $0x38] sm:$0xf]
        %v3161 = vld [vmem:[%s3145 + $0x3c] sm:$0xf]
        %v3199 = vunpack.c.l.b16 %v3108
        %v3200 = vunpack.c.l.b16 %v3109
        %v3201 = vunpack.c.l.b16 %v3110
        %v3202 = vunpack.c.l.b16 %v3111
        %v3203 = vunpack.c.l.b16 %v3112
        %v3204 = vunpack.c.l.b16 %v3113
        %v3205 = vunpack.c.l.b16 %v3114
        %v3206 = vunpack.c.l.b16 %v3115
        %v3207 = vunpack.c.l.b16 %v3116
        %v3208 = vunpack.c.l.b16 %v3117
        %v3209 = vunpack.c.l.b16 %v3118
        %v3210 = vunpack.c.l.b16 %v3119
        %v3211 = vunpack.c.l.b16 %v3120
        %v3212 = vunpack.c.l.b16 %v3121
        %v3213 = vunpack.c.l.b16 %v3122
        %v3214 = vunpack.c.l.b16 %v3123
        %v3215 = vunpack.c.l.b16 %v3124
        %v3216 = vunpack.c.l.b16 %v3125
        %v3217 = vunpack.c.l.b16 %v3126
        %v3218 = vunpack.c.l.b16 %v3127
        %v3219 = vunpack.c.l.b16 %v3128
        %v3220 = vunpack.c.l.b16 %v3129
        %v3221 = vunpack.c.l.b16 %v3130
        %v3222 = vunpack.c.l.b16 %v3131
        %v3223 = vunpack.c.l.b16 %v3132
        %v3224 = vunpack.c.l.b16 %v3133
        %v3225 = vunpack.c.l.b16 %v3134
        %v3226 = vunpack.c.l.b16 %v3135
        %v3227 = vunpack.c.l.b16 %v3136
        %v3228 = vunpack.c.l.b16 %v3137
        %v3229 = vunpack.c.l.b16 %v3138
        %v3230 = vunpack.c.l.b16 %v3139
        %v3231 = vunpack.c.l.b16 %v3140
        %v3232 = vunpack.c.l.b16 %v3141
        %v3233 = vunpack.c.l.b16 %v3142
        %v3234 = vunpack.c.l.b16 %v3143
        %v3235 = vunpack.c.l.b16 %v3144
        %v3236 = vpack.c.b16 %v3200, %v3199
        %v3237 = vpack.c.b16 %v3202, %v3201
        %v3238 = vpack.c.b16 %v3204, %v3203
        %v3239 = vpack.c.b16 %v3206, %v3205
        %v3240 = vpack.c.b16 %v3208, %v3207
        %v3241 = vpack.c.b16 %v3210, %v3209
        %v3242 = vpack.c.b16 %v3212, %v3211
        %v3243 = vpack.c.b16 %v3214, %v3213
        %v3244 = vpack.c.b16 %v3216, %v3215
        %v3245 = vpack.c.b16 %v3218, %v3217
        %v3246 = vpack.c.b16 %v3220, %v3219
        %v3247 = vpack.c.b16 %v3222, %v3221
        %v3248 = vpack.c.b16 %v3224, %v3223
        %v3249 = vpack.c.b16 %v3226, %v3225
        %v3250 = vpack.c.b16 %v3228, %v3227
        %v3251 = vpack.c.b16 %v3230, %v3229
        %v3252 = vpack.c.b16 %v3232, %v3231
        %v3253 = vpack.c.b16 %v3234, %v3233
        %v3254 = vpack.c.b16 %v3235, %v3235
        %v3256 = vshrl.u32 %v3236, 16
        %v3258 = vrot.slane %v3256, 3
        %v3259 = vshll.u32 %v3236, 16
        %v3261 = vrot.slane %v3259, 4
        %v3262 = vor.u32 %v3258, %v3261
        %v3264 = vshrl.u32 %v3237, 16
        %v3266 = vrot.slane %v3264, 3
        %v3267 = vshll.u32 %v3237, 16
        %v3269 = vrot.slane %v3267, 4
        %v3270 = vor.u32 %v3266, %v3269
        %v3271 = vsel %vm2743, %v3262, %v3270
        %v3273 = vshrl.u32 %v3238, 16
        %v3275 = vrot.slane %v3273, 3
        %v3276 = vshll.u32 %v3238, 16
        %v3278 = vrot.slane %v3276, 4
        %v3279 = vor.u32 %v3275, %v3278
        %v3280 = vsel %vm2743, %v3270, %v3279
        %v3282 = vshrl.u32 %v3239, 16
        %v3284 = vrot.slane %v3282, 3
        %v3285 = vshll.u32 %v3239, 16
        %v3287 = vrot.slane %v3285, 4
        %v3288 = vor.u32 %v3284, %v3287
        %v3289 = vsel %vm2743, %v3279, %v3288
        %v3291 = vshrl.u32 %v3240, 16
        %v3293 = vrot.slane %v3291, 3
        %v3294 = vshll.u32 %v3240, 16
        %v3296 = vrot.slane %v3294, 4
        %v3297 = vor.u32 %v3293, %v3296
        %v3298 = vsel %vm2743, %v3288, %v3297
        %v3300 = vshrl.u32 %v3241, 16
        %v3302 = vrot.slane %v3300, 3
        %v3303 = vshll.u32 %v3241, 16
        %v3305 = vrot.slane %v3303, 4
        %v3306 = vor.u32 %v3302, %v3305
        %v3307 = vsel %vm2743, %v3297, %v3306
        %v3309 = vshrl.u32 %v3242, 16
        %v3311 = vrot.slane %v3309, 3
        %v3312 = vshll.u32 %v3242, 16
        %v3314 = vrot.slane %v3312, 4
        %v3315 = vor.u32 %v3311, %v3314
        %v3316 = vsel %vm2743, %v3306, %v3315
        %v3318 = vshrl.u32 %v3243, 16
        %v3320 = vrot.slane %v3318, 3
        %v3321 = vshll.u32 %v3243, 16
        %v3323 = vrot.slane %v3321, 4
        %v3324 = vor.u32 %v3320, %v3323
        %v3325 = vsel %vm2743, %v3315, %v3324
        %v3327 = vshrl.u32 %v3244, 16
        %v3329 = vrot.slane %v3327, 3
        %v3330 = vshll.u32 %v3244, 16
        %v3332 = vrot.slane %v3330, 4
        %v3333 = vor.u32 %v3329, %v3332
        %v3334 = vsel %vm2743, %v3324, %v3333
        %v3336 = vshrl.u32 %v3245, 16
        %v3338 = vrot.slane %v3336, 3
        %v3339 = vshll.u32 %v3245, 16
        %v3341 = vrot.slane %v3339, 4
        %v3342 = vor.u32 %v3338, %v3341
        %v3343 = vsel %vm2743, %v3333, %v3342
        %v3345 = vshrl.u32 %v3246, 16
        %v3347 = vrot.slane %v3345, 3
        %v3348 = vshll.u32 %v3246, 16
        %v3350 = vrot.slane %v3348, 4
        %v3351 = vor.u32 %v3347, %v3350
        %v3352 = vsel %vm2743, %v3342, %v3351
        %v3354 = vshrl.u32 %v3247, 16
        %v3356 = vrot.slane %v3354, 3
        %v3357 = vshll.u32 %v3247, 16
        %v3359 = vrot.slane %v3357, 4
        %v3360 = vor.u32 %v3356, %v3359
        %v3361 = vsel %vm2743, %v3351, %v3360
        %v3363 = vshrl.u32 %v3248, 16
        %v3365 = vrot.slane %v3363, 3
        %v3366 = vshll.u32 %v3248, 16
        %v3368 = vrot.slane %v3366, 4
        %v3369 = vor.u32 %v3365, %v3368
        %v3370 = vsel %vm2743, %v3360, %v3369
        %v3372 = vshrl.u32 %v3249, 16
        %v3374 = vrot.slane %v3372, 3
        %v3375 = vshll.u32 %v3249, 16
        %v3377 = vrot.slane %v3375, 4
        %v3378 = vor.u32 %v3374, %v3377
        %v3379 = vsel %vm2743, %v3369, %v3378
        %v3381 = vshrl.u32 %v3250, 16
        %v3383 = vrot.slane %v3381, 3
        %v3384 = vshll.u32 %v3250, 16
        %v3386 = vrot.slane %v3384, 4
        %v3387 = vor.u32 %v3383, %v3386
        %v3388 = vsel %vm2743, %v3378, %v3387
        %v3390 = vshrl.u32 %v3251, 16
        %v3392 = vrot.slane %v3390, 3
        %v3393 = vshll.u32 %v3251, 16
        %v3395 = vrot.slane %v3393, 4
        %v3396 = vor.u32 %v3392, %v3395
        %v3397 = vsel %vm2743, %v3387, %v3396
        %v3399 = vshrl.u32 %v3252, 16
        %v3401 = vrot.slane %v3399, 3
        %v3402 = vshll.u32 %v3252, 16
        %v3404 = vrot.slane %v3402, 4
        %v3405 = vor.u32 %v3401, %v3404
        %v3406 = vsel %vm2743, %v3396, %v3405
        %v3408 = vshrl.u32 %v3253, 16
        %v3410 = vrot.slane %v3408, 3
        %v3411 = vshll.u32 %v3253, 16
        %v3413 = vrot.slane %v3411, 4
        %v3414 = vor.u32 %v3410, %v3413
        %v3415 = vsel %vm2743, %v3405, %v3414
        %v3417 = vshrl.u32 %v3254, 16
        %v3419 = vrot.slane %v3417, 3
        %v3420 = vshll.u32 %v3254, 16
        %v3422 = vrot.slane %v3420, 4
        %v3423 = vor.u32 %v3419, %v3422
        %v3424 = vsel %vm2743, %v3414, %v3423
        %v3459 = vunpack.c.l.b16 %v3146
        %v3460 = vunpack.c.l.b16 %v3147
        %v3461 = vunpack.c.l.b16 %v3148
        %v3462 = vunpack.c.l.b16 %v3149
        %v3463 = vunpack.c.l.b16 %v3150
        %v3464 = vunpack.c.l.b16 %v3151
        %v3465 = vunpack.c.l.b16 %v3152
        %v3466 = vunpack.c.l.b16 %v3153
        %v3467 = vunpack.c.l.b16 %v3154
        %v3468 = vunpack.c.l.b16 %v3155
        %v3469 = vunpack.c.l.b16 %v3156
        %v3470 = vunpack.c.l.b16 %v3157
        %v3471 = vunpack.c.l.b16 %v3158
        %v3472 = vunpack.c.l.b16 %v3159
        %v3473 = vunpack.c.l.b16 %v3160
        %v3474 = vunpack.c.l.b16 %v3161
        %v3475 = vpack.c.b16 %v3460, %v3459
        %v3476 = vpack.c.b16 %v3462, %v3461
        %v3477 = vpack.c.b16 %v3464, %v3463
        %v3478 = vpack.c.b16 %v3466, %v3465
        %v3479 = vpack.c.b16 %v3468, %v3467
        %v3480 = vpack.c.b16 %v3470, %v3469
        %v3481 = vpack.c.b16 %v3472, %v3471
        %v3482 = vpack.c.b16 %v3474, %v3473
        %3491 = vmatprep.subr.bf16.mxu0 0
        %3492 = vmatpush1.bf16.msra.mxu0 %v3482
        %3493 = vmatprep.subr.bf16.mxu0 0
        %3494 = vmatpush1.bf16.msra.mxu0 %v3481
        %3495 = vmatprep.subr.bf16.mxu0 0
        %3496 = vmatpush1.bf16.msra.mxu0 %v3480
        %3497 = vmatprep.subr.bf16.mxu0 0
        %3498 = vmatpush1.bf16.msra.mxu0 %v3479
        %3499 = vmatprep.subr.bf16.mxu0 0
        %3500 = vmatpush1.bf16.msra.mxu0 %v3478
        %3501 = vmatprep.subr.bf16.mxu0 0
        %3502 = vmatpush1.bf16.msra.mxu0 %v3477
        %3503 = vmatprep.subr.bf16.mxu0 0
        %3504 = vmatpush1.bf16.msra.mxu0 %v3476
        %3505 = vmatprep.subr.bf16.mxu0 0
        %3506 = vmatpush1.bf16.msra.mxu0 %v3475
        %3507 = vmatprep.subr.bf16.mxu0 0
        %3508 = vmatpush2.bf16.msra.mxu0 0
        %3509 = vmatprep.subr.bf16.mxu0 0
        %3510 = vmatpush2.bf16.msra.mxu0 0
        %3511 = vmatprep.subr.bf16.mxu0 0
        %3512 = vmatpush2.bf16.msra.mxu0 0
        %3513 = vmatprep.subr.bf16.mxu0 0
        %3514 = vmatpush2.bf16.msra.mxu0 0
        %3515 = vmatprep.subr.bf16.mxu0 0
        %3516 = vmatpush2.bf16.msra.mxu0 0
        %3517 = vmatprep.subr.bf16.mxu0 0
        %3518 = vmatpush2.bf16.msra.mxu0 0
        %3519 = vmatprep.subr.bf16.mxu0 0
        %3520 = vmatpush2.bf16.msra.mxu0 0
        %3521 = vmatprep.subr.bf16.mxu0 0
        %3522 = vmatpush2.bf16.msra.mxu0 0
        %3523 = vmatprep.mubr.bf16.mxu0 0
        %3524 = vmatmul.mubr.bf16.gmra.mxu0 %v3271
        %v3525 = vpop.f32.mrf.mxu0
        %v3526 = vadd.f32 0.0, %v3525
        %v3527 = vpop.f32.mrf.mxu0
        %v3528 = vpop.f32.mrf.mxu0
        %v3529 = vadd.f32 0.0, %v3528
        %v3530 = vpop.f32.mrf.mxu0
        %3531 = vmatprep.mubr.bf16.mxu0 0
        %3532 = vmatmul.mubr.bf16.gmra.mxu0 %v3280
        %v3533 = vpop.f32.mrf.mxu0
        %v3534 = vadd.f32 0.0, %v3533
        %v3535 = vpop.f32.mrf.mxu0
        %v3536 = vpop.f32.mrf.mxu0
        %v3537 = vadd.f32 0.0, %v3536
        %v3538 = vpop.f32.mrf.mxu0
        %3539 = vmatprep.mubr.bf16.mxu0 0
        %3540 = vmatmul.mubr.bf16.gmra.mxu0 %v3289
        %v3541 = vpop.f32.mrf.mxu0
        %v3542 = vadd.f32 0.0, %v3541
        %v3543 = vpop.f32.mrf.mxu0
        %v3544 = vpop.f32.mrf.mxu0
        %v3545 = vadd.f32 0.0, %v3544
        %v3546 = vpop.f32.mrf.mxu0
        %3547 = vmatprep.mubr.bf16.mxu0 0
        %3548 = vmatmul.mubr.bf16.gmra.mxu0 %v3298
        %v3549 = vpop.f32.mrf.mxu0
        %v3550 = vadd.f32 0.0, %v3549
        %v3551 = vpop.f32.mrf.mxu0
        %v3552 = vpop.f32.mrf.mxu0
        %v3553 = vadd.f32 0.0, %v3552
        %v3554 = vpop.f32.mrf.mxu0
        %3555 = vmatprep.mubr.bf16.mxu0 0
        %3556 = vmatmul.mubr.bf16.gmra.mxu0 %v3307
        %v3557 = vpop.f32.mrf.mxu0
        %v3558 = vadd.f32 0.0, %v3557
        %v3559 = vpop.f32.mrf.mxu0
        %v3560 = vpop.f32.mrf.mxu0
        %v3561 = vadd.f32 0.0, %v3560
        %v3562 = vpop.f32.mrf.mxu0
        %3563 = vmatprep.mubr.bf16.mxu0 0
        %3564 = vmatmul.mubr.bf16.gmra.mxu0 %v3316
        %v3565 = vpop.f32.mrf.mxu0
        %v3566 = vadd.f32 0.0, %v3565
        %v3567 = vpop.f32.mrf.mxu0
        %v3568 = vpop.f32.mrf.mxu0
        %v3569 = vadd.f32 0.0, %v3568
        %v3570 = vpop.f32.mrf.mxu0
        %3571 = vmatprep.mubr.bf16.mxu0 0
        %3572 = vmatmul.mubr.bf16.gmra.mxu0 %v3325
        %v3573 = vpop.f32.mrf.mxu0
        %v3574 = vadd.f32 0.0, %v3573
        %v3575 = vpop.f32.mrf.mxu0
        %v3576 = vpop.f32.mrf.mxu0
        %v3577 = vadd.f32 0.0, %v3576
        %v3578 = vpop.f32.mrf.mxu0
        %3579 = vmatprep.mubr.bf16.mxu0 0
        %3580 = vmatmul.mubr.bf16.gmra.mxu0 %v3334
        %v3581 = vpop.f32.mrf.mxu0
        %v3582 = vadd.f32 0.0, %v3581
        %v3583 = vpop.f32.mrf.mxu0
        %v3584 = vpop.f32.mrf.mxu0
        %v3585 = vadd.f32 0.0, %v3584
        %v3586 = vpop.f32.mrf.mxu0
        %3587 = vmatprep.mubr.bf16.mxu0 0
        %3588 = vmatmul.mubr.bf16.gmra.mxu0 %v3343
        %v3589 = vpop.f32.mrf.mxu0
        %v3590 = vadd.f32 0.0, %v3589
        %v3591 = vpop.f32.mrf.mxu0
        %v3592 = vpop.f32.mrf.mxu0
        %v3593 = vadd.f32 0.0, %v3592
        %v3594 = vpop.f32.mrf.mxu0
        %3595 = vmatprep.mubr.bf16.mxu0 0
        %3596 = vmatmul.mubr.bf16.gmra.mxu0 %v3352
        %v3597 = vpop.f32.mrf.mxu0
        %v3598 = vadd.f32 0.0, %v3597
        %v3599 = vpop.f32.mrf.mxu0
        %v3600 = vpop.f32.mrf.mxu0
        %v3601 = vadd.f32 0.0, %v3600
        %v3602 = vpop.f32.mrf.mxu0
        %3603 = vmatprep.mubr.bf16.mxu0 0
        %3604 = vmatmul.mubr.bf16.gmra.mxu0 %v3361
        %v3605 = vpop.f32.mrf.mxu0
        %v3606 = vadd.f32 0.0, %v3605
        %v3607 = vpop.f32.mrf.mxu0
        %v3608 = vpop.f32.mrf.mxu0
        %v3609 = vadd.f32 0.0, %v3608
        %v3610 = vpop.f32.mrf.mxu0
        %3611 = vmatprep.mubr.bf16.mxu0 0
        %3612 = vmatmul.mubr.bf16.gmra.mxu0 %v3370
        %v3613 = vpop.f32.mrf.mxu0
        %v3614 = vadd.f32 0.0, %v3613
        %v3615 = vpop.f32.mrf.mxu0
        %v3616 = vpop.f32.mrf.mxu0
        %v3617 = vadd.f32 0.0, %v3616
        %v3618 = vpop.f32.mrf.mxu0
        %3619 = vmatprep.mubr.bf16.mxu0 0
        %3620 = vmatmul.mubr.bf16.gmra.mxu0 %v3379
        %v3621 = vpop.f32.mrf.mxu0
        %v3622 = vadd.f32 0.0, %v3621
        %v3623 = vpop.f32.mrf.mxu0
        %v3624 = vpop.f32.mrf.mxu0
        %v3625 = vadd.f32 0.0, %v3624
        %v3626 = vpop.f32.mrf.mxu0
        %3627 = vmatprep.mubr.bf16.mxu0 0
        %3628 = vmatmul.mubr.bf16.gmra.mxu0 %v3388
        %v3629 = vpop.f32.mrf.mxu0
        %v3630 = vadd.f32 0.0, %v3629
        %v3631 = vpop.f32.mrf.mxu0
        %v3632 = vpop.f32.mrf.mxu0
        %v3633 = vadd.f32 0.0, %v3632
        %v3634 = vpop.f32.mrf.mxu0
        %3635 = vmatprep.mubr.bf16.mxu0 0
        %3636 = vmatmul.mubr.bf16.gmra.mxu0 %v3397
        %v3637 = vpop.f32.mrf.mxu0
        %v3638 = vadd.f32 0.0, %v3637
        %v3639 = vpop.f32.mrf.mxu0
        %v3640 = vpop.f32.mrf.mxu0
        %v3641 = vadd.f32 0.0, %v3640
        %v3642 = vpop.f32.mrf.mxu0
        %3643 = vmatprep.mubr.bf16.mxu0 0
        %3644 = vmatmul.mubr.bf16.gmra.mxu0 %v3406
        %v3645 = vpop.f32.mrf.mxu0
        %v3646 = vadd.f32 0.0, %v3645
        %v3647 = vpop.f32.mrf.mxu0
        %v3648 = vpop.f32.mrf.mxu0
        %v3649 = vadd.f32 0.0, %v3648
        %v3650 = vpop.f32.mrf.mxu0
        %3651 = vmatprep.mubr.bf16.mxu0 0
        %3652 = vmatmul.mubr.bf16.gmra.mxu0 %v3415
        %v3653 = vpop.f32.mrf.mxu0
        %v3654 = vadd.f32 0.0, %v3653
        %v3655 = vpop.f32.mrf.mxu0
        %v3656 = vpop.f32.mrf.mxu0
        %v3657 = vadd.f32 0.0, %v3656
        %v3658 = vpop.f32.mrf.mxu0
        %3659 = vmatprep.mubr.bf16.mxu0 0
        %3660 = vmatmul.mubr.bf16.gmra.mxu0 %v3424
        %v3661 = vpop.f32.mrf.mxu0
        %v3662 = vadd.f32 0.0, %v3661
        %v3663 = vpop.f32.mrf.mxu0
        %v3664 = vpop.f32.mrf.mxu0
        %v3665 = vadd.f32 0.0, %v3664
        %v3666 = vpop.f32.mrf.mxu0
        %3667 = vdwg.mxu0
        %v3668 = vadd.f32 %v3072, %v3526
        %v3669 = vadd.f32 %v3073, %v3529
        %v3670 = vadd.f32 %v3074, %v3534
        %v3671 = vadd.f32 %v3075, %v3537
        %v3672 = vadd.f32 %v3076, %v3542
        %v3673 = vadd.f32 %v3077, %v3545
        %v3674 = vadd.f32 %v3078, %v3550
        %v3675 = vadd.f32 %v3079, %v3553
        %v3676 = vadd.f32 %v3080, %v3558
        %v3677 = vadd.f32 %v3081, %v3561
        %v3678 = vadd.f32 %v3082, %v3566
        %v3679 = vadd.f32 %v3083, %v3569
        %v3680 = vadd.f32 %v3084, %v3574
        %v3681 = vadd.f32 %v3085, %v3577
        %v3682 = vadd.f32 %v3086, %v3582
        %v3683 = vadd.f32 %v3087, %v3585
        %v3684 = vadd.f32 %v3088, %v3590
        %v3685 = vadd.f32 %v3089, %v3593
        %v3686 = vadd.f32 %v3090, %v3598
        %v3687 = vadd.f32 %v3091, %v3601
        %v3688 = vadd.f32 %v3092, %v3606
        %v3689 = vadd.f32 %v3093, %v3609
        %v3690 = vadd.f32 %v3094, %v3614
        %v3691 = vadd.f32 %v3095, %v3617
        %v3692 = vadd.f32 %v3096, %v3622
        %v3693 = vadd.f32 %v3097, %v3625
        %v3694 = vadd.f32 %v3098, %v3630
        %v3695 = vadd.f32 %v3099, %v3633
        %v3696 = vadd.f32 %v3100, %v3638
        %v3697 = vadd.f32 %v3101, %v3641
        %v3698 = vadd.f32 %v3102, %v3646
        %v3699 = vadd.f32 %v3103, %v3649
        %v3700 = vadd.f32 %v3104, %v3654
        %v3701 = vadd.f32 %v3105, %v3657
        %v3702 = vadd.f32 %v3106, %v3662
        %v3703 = vadd.f32 %v3107, %v3665
        %s3704 = scalar_lea.vmem [#allocation8], 256
        %v3705 = vld [vmem:[%s3704] sm:$0xf]
        %v3706 = vld [vmem:[%s3704 + $0x4] sm:$0xf]
        %v3707 = vld [vmem:[%s3704 + $0x8] sm:$0xf]
        %v3708 = vld [vmem:[%s3704 + $0xc] sm:$0xf]
        %v3709 = vld [vmem:[%s3704 + $0x10] sm:$0xf]
        %v3710 = vld [vmem:[%s3704 + $0x14] sm:$0xf]
        %v3711 = vld [vmem:[%s3704 + $0x18] sm:$0xf]
        %v3712 = vld [vmem:[%s3704 + $0x1c] sm:$0xf]
        %v3713 = vld [vmem:[%s3704 + $0x20] sm:$0xf]
        %v3714 = vld [vmem:[%s3704 + $0x24] sm:$0xf]
        %v3715 = vld [vmem:[%s3704 + $0x28] sm:$0xf]
        %v3716 = vld [vmem:[%s3704 + $0x2c] sm:$0xf]
        %v3717 = vld [vmem:[%s3704 + $0x30] sm:$0xf]
        %v3718 = vld [vmem:[%s3704 + $0x34] sm:$0xf]
        %v3719 = vld [vmem:[%s3704 + $0x38] sm:$0xf]
        %v3720 = vld [vmem:[%s3704 + $0x3c] sm:$0xf]
        %v3721 = vpack.c.b16 %v3201, %v3200
        %v3722 = vpack.c.b16 %v3203, %v3202
        %v3723 = vpack.c.b16 %v3205, %v3204
        %v3724 = vpack.c.b16 %v3207, %v3206
        %v3725 = vpack.c.b16 %v3209, %v3208
        %v3726 = vpack.c.b16 %v3211, %v3210
        %v3727 = vpack.c.b16 %v3213, %v3212
        %v3728 = vpack.c.b16 %v3215, %v3214
        %v3729 = vpack.c.b16 %v3217, %v3216
        %v3730 = vpack.c.b16 %v3219, %v3218
        %v3731 = vpack.c.b16 %v3221, %v3220
        %v3732 = vpack.c.b16 %v3223, %v3222
        %v3733 = vpack.c.b16 %v3225, %v3224
        %v3734 = vpack.c.b16 %v3227, %v3226
        %v3735 = vpack.c.b16 %v3229, %v3228
        %v3736 = vpack.c.b16 %v3231, %v3230
        %v3737 = vpack.c.b16 %v3233, %v3232
        %v3738 = vpack.c.b16 %v3235, %v3234
        %v3773 = vunpack.c.l.b16 %v3705
        %v3774 = vunpack.c.l.b16 %v3706
        %v3775 = vunpack.c.l.b16 %v3707
        %v3776 = vunpack.c.l.b16 %v3708
        %v3777 = vunpack.c.l.b16 %v3709
        %v3778 = vunpack.c.l.b16 %v3710
        %v3779 = vunpack.c.l.b16 %v3711
        %v3780 = vunpack.c.l.b16 %v3712
        %v3781 = vunpack.c.l.b16 %v3713
        %v3782 = vunpack.c.l.b16 %v3714
        %v3783 = vunpack.c.l.b16 %v3715
        %v3784 = vunpack.c.l.b16 %v3716
        %v3785 = vunpack.c.l.b16 %v3717
        %v3786 = vunpack.c.l.b16 %v3718
        %v3787 = vunpack.c.l.b16 %v3719
        %v3788 = vunpack.c.l.b16 %v3720
        %v3789 = vpack.c.b16 %v3774, %v3773
        %v3790 = vpack.c.b16 %v3776, %v3775
        %v3791 = vpack.c.b16 %v3778, %v3777
        %v3792 = vpack.c.b16 %v3780, %v3779
        %v3793 = vpack.c.b16 %v3782, %v3781
        %v3794 = vpack.c.b16 %v3784, %v3783
        %v3795 = vpack.c.b16 %v3786, %v3785
        %v3796 = vpack.c.b16 %v3788, %v3787
        %3805 = vmatprep.subr.bf16.mxu0 0
        %3806 = vmatpush1.bf16.msra.mxu0 %v3796
        %3807 = vmatprep.subr.bf16.mxu0 0
        %3808 = vmatpush1.bf16.msra.mxu0 %v3795
        %3809 = vmatprep.subr.bf16.mxu0 0
        %3810 = vmatpush1.bf16.msra.mxu0 %v3794
        %3811 = vmatprep.subr.bf16.mxu0 0
        %3812 = vmatpush1.bf16.msra.mxu0 %v3793
        %3813 = vmatprep.subr.bf16.mxu0 0
        %3814 = vmatpush1.bf16.msra.mxu0 %v3792
        %3815 = vmatprep.subr.bf16.mxu0 0
        %3816 = vmatpush1.bf16.msra.mxu0 %v3791
        %3817 = vmatprep.subr.bf16.mxu0 0
        %3818 = vmatpush1.bf16.msra.mxu0 %v3790
        %3819 = vmatprep.subr.bf16.mxu0 0
        %3820 = vmatpush1.bf16.msra.mxu0 %v3789
        %3821 = vmatprep.subr.bf16.mxu0 0
        %3822 = vmatpush2.bf16.msra.mxu0 0
        %3823 = vmatprep.subr.bf16.mxu0 0
        %3824 = vmatpush2.bf16.msra.mxu0 0
        %3825 = vmatprep.subr.bf16.mxu0 0
        %3826 = vmatpush2.bf16.msra.mxu0 0
        %3827 = vmatprep.subr.bf16.mxu0 0
        %3828 = vmatpush2.bf16.msra.mxu0 0
        %3829 = vmatprep.subr.bf16.mxu0 0
        %3830 = vmatpush2.bf16.msra.mxu0 0
        %3831 = vmatprep.subr.bf16.mxu0 0
        %3832 = vmatpush2.bf16.msra.mxu0 0
        %3833 = vmatprep.subr.bf16.mxu0 0
        %3834 = vmatpush2.bf16.msra.mxu0 0
        %3835 = vmatprep.subr.bf16.mxu0 0
        %3836 = vmatpush2.bf16.msra.mxu0 0
        %3837 = vmatprep.mubr.bf16.mxu0 0
        %3838 = vmatmul.mubr.bf16.gmra.mxu0 %v3721
        %v3839 = vpop.f32.mrf.mxu0
        %v3840 = vadd.f32 0.0, %v3839
        %v3841 = vpop.f32.mrf.mxu0
        %v3842 = vpop.f32.mrf.mxu0
        %v3843 = vadd.f32 0.0, %v3842
        %v3844 = vpop.f32.mrf.mxu0
        %3845 = vmatprep.mubr.bf16.mxu0 0
        %3846 = vmatmul.mubr.bf16.gmra.mxu0 %v3722
        %v3847 = vpop.f32.mrf.mxu0
        %v3848 = vadd.f32 0.0, %v3847
        %v3849 = vpop.f32.mrf.mxu0
        %v3850 = vpop.f32.mrf.mxu0
        %v3851 = vadd.f32 0.0, %v3850
        %v3852 = vpop.f32.mrf.mxu0
        %3853 = vmatprep.mubr.bf16.mxu0 0
        %3854 = vmatmul.mubr.bf16.gmra.mxu0 %v3723
        %v3855 = vpop.f32.mrf.mxu0
        %v3856 = vadd.f32 0.0, %v3855
        %v3857 = vpop.f32.mrf.mxu0
        %v3858 = vpop.f32.mrf.mxu0
        %v3859 = vadd.f32 0.0, %v3858
        %v3860 = vpop.f32.mrf.mxu0
        %3861 = vmatprep.mubr.bf16.mxu0 0
        %3862 = vmatmul.mubr.bf16.gmra.mxu0 %v3724
        %v3863 = vpop.f32.mrf.mxu0
        %v3864 = vadd.f32 0.0, %v3863
        %v3865 = vpop.f32.mrf.mxu0
        %v3866 = vpop.f32.mrf.mxu0
        %v3867 = vadd.f32 0.0, %v3866
        %v3868 = vpop.f32.mrf.mxu0
        %3869 = vmatprep.mubr.bf16.mxu0 0
        %3870 = vmatmul.mubr.bf16.gmra.mxu0 %v3725
        %v3871 = vpop.f32.mrf.mxu0
        %v3872 = vadd.f32 0.0, %v3871
        %v3873 = vpop.f32.mrf.mxu0
        %v3874 = vpop.f32.mrf.mxu0
        %v3875 = vadd.f32 0.0, %v3874
        %v3876 = vpop.f32.mrf.mxu0
        %3877 = vmatprep.mubr.bf16.mxu0 0
        %3878 = vmatmul.mubr.bf16.gmra.mxu0 %v3726
        %v3879 = vpop.f32.mrf.mxu0
        %v3880 = vadd.f32 0.0, %v3879
        %v3881 = vpop.f32.mrf.mxu0
        %v3882 = vpop.f32.mrf.mxu0
        %v3883 = vadd.f32 0.0, %v3882
        %v3884 = vpop.f32.mrf.mxu0
        %3885 = vmatprep.mubr.bf16.mxu0 0
        %3886 = vmatmul.mubr.bf16.gmra.mxu0 %v3727
        %v3887 = vpop.f32.mrf.mxu0
        %v3888 = vadd.f32 0.0, %v3887
        %v3889 = vpop.f32.mrf.mxu0
        %v3890 = vpop.f32.mrf.mxu0
        %v3891 = vadd.f32 0.0, %v3890
        %v3892 = vpop.f32.mrf.mxu0
        %3893 = vmatprep.mubr.bf16.mxu0 0
        %3894 = vmatmul.mubr.bf16.gmra.mxu0 %v3728
        %v3895 = vpop.f32.mrf.mxu0
        %v3896 = vadd.f32 0.0, %v3895
        %v3897 = vpop.f32.mrf.mxu0
        %v3898 = vpop.f32.mrf.mxu0
        %v3899 = vadd.f32 0.0, %v3898
        %v3900 = vpop.f32.mrf.mxu0
        %3901 = vmatprep.mubr.bf16.mxu0 0
        %3902 = vmatmul.mubr.bf16.gmra.mxu0 %v3729
        %v3903 = vpop.f32.mrf.mxu0
        %v3904 = vadd.f32 0.0, %v3903
        %v3905 = vpop.f32.mrf.mxu0
        %v3906 = vpop.f32.mrf.mxu0
        %v3907 = vadd.f32 0.0, %v3906
        %v3908 = vpop.f32.mrf.mxu0
        %3909 = vmatprep.mubr.bf16.mxu0 0
        %3910 = vmatmul.mubr.bf16.gmra.mxu0 %v3730
        %v3911 = vpop.f32.mrf.mxu0
        %v3912 = vadd.f32 0.0, %v3911
        %v3913 = vpop.f32.mrf.mxu0
        %v3914 = vpop.f32.mrf.mxu0
        %v3915 = vadd.f32 0.0, %v3914
        %v3916 = vpop.f32.mrf.mxu0
        %3917 = vmatprep.mubr.bf16.mxu0 0
        %3918 = vmatmul.mubr.bf16.gmra.mxu0 %v3731
        %v3919 = vpop.f32.mrf.mxu0
        %v3920 = vadd.f32 0.0, %v3919
        %v3921 = vpop.f32.mrf.mxu0
        %v3922 = vpop.f32.mrf.mxu0
        %v3923 = vadd.f32 0.0, %v3922
        %v3924 = vpop.f32.mrf.mxu0
        %3925 = vmatprep.mubr.bf16.mxu0 0
        %3926 = vmatmul.mubr.bf16.gmra.mxu0 %v3732
        %v3927 = vpop.f32.mrf.mxu0
        %v3928 = vadd.f32 0.0, %v3927
        %v3929 = vpop.f32.mrf.mxu0
        %v3930 = vpop.f32.mrf.mxu0
        %v3931 = vadd.f32 0.0, %v3930
        %v3932 = vpop.f32.mrf.mxu0
        %3933 = vmatprep.mubr.bf16.mxu0 0
        %3934 = vmatmul.mubr.bf16.gmra.mxu0 %v3733
        %v3935 = vpop.f32.mrf.mxu0
        %v3936 = vadd.f32 0.0, %v3935
        %v3937 = vpop.f32.mrf.mxu0
        %v3938 = vpop.f32.mrf.mxu0
        %v3939 = vadd.f32 0.0, %v3938
        %v3940 = vpop.f32.mrf.mxu0
        %3941 = vmatprep.mubr.bf16.mxu0 0
        %3942 = vmatmul.mubr.bf16.gmra.mxu0 %v3734
        %v3943 = vpop.f32.mrf.mxu0
        %v3944 = vadd.f32 0.0, %v3943
        %v3945 = vpop.f32.mrf.mxu0
        %v3946 = vpop.f32.mrf.mxu0
        %v3947 = vadd.f32 0.0, %v3946
        %v3948 = vpop.f32.mrf.mxu0
        %3949 = vmatprep.mubr.bf16.mxu0 0
        %3950 = vmatmul.mubr.bf16.gmra.mxu0 %v3735
        %v3951 = vpop.f32.mrf.mxu0
        %v3952 = vadd.f32 0.0, %v3951
        %v3953 = vpop.f32.mrf.mxu0
        %v3954 = vpop.f32.mrf.mxu0
        %v3955 = vadd.f32 0.0, %v3954
        %v3956 = vpop.f32.mrf.mxu0
        %3957 = vmatprep.mubr.bf16.mxu0 0
        %3958 = vmatmul.mubr.bf16.gmra.mxu0 %v3736
        %v3959 = vpop.f32.mrf.mxu0
        %v3960 = vadd.f32 0.0, %v3959
        %v3961 = vpop.f32.mrf.mxu0
        %v3962 = vpop.f32.mrf.mxu0
        %v3963 = vadd.f32 0.0, %v3962
        %v3964 = vpop.f32.mrf.mxu0
        %3965 = vmatprep.mubr.bf16.mxu0 0
        %3966 = vmatmul.mubr.bf16.gmra.mxu0 %v3737
        %v3967 = vpop.f32.mrf.mxu0
        %v3968 = vadd.f32 0.0, %v3967
        %v3969 = vpop.f32.mrf.mxu0
        %v3970 = vpop.f32.mrf.mxu0
        %v3971 = vadd.f32 0.0, %v3970
        %v3972 = vpop.f32.mrf.mxu0
        %3973 = vmatprep.mubr.bf16.mxu0 0
        %3974 = vmatmul.mubr.bf16.gmra.mxu0 %v3738
        %v3975 = vpop.f32.mrf.mxu0
        %v3976 = vadd.f32 0.0, %v3975
        %v3977 = vpop.f32.mrf.mxu0
        %v3978 = vpop.f32.mrf.mxu0
        %v3979 = vadd.f32 0.0, %v3978
        %v3980 = vpop.f32.mrf.mxu0
        %3981 = vdwg.mxu0
        %v3982 = vadd.f32 %v3668, %v3840
        %v3983 = vadd.f32 %v3669, %v3843
        %v3984 = vadd.f32 %v3670, %v3848
        %v3985 = vadd.f32 %v3671, %v3851
        %v3986 = vadd.f32 %v3672, %v3856
        %v3987 = vadd.f32 %v3673, %v3859
        %v3988 = vadd.f32 %v3674, %v3864
        %v3989 = vadd.f32 %v3675, %v3867
        %v3990 = vadd.f32 %v3676, %v3872
        %v3991 = vadd.f32 %v3677, %v3875
        %v3992 = vadd.f32 %v3678, %v3880
        %v3993 = vadd.f32 %v3679, %v3883
        %v3994 = vadd.f32 %v3680, %v3888
        %v3995 = vadd.f32 %v3681, %v3891
        %v3996 = vadd.f32 %v3682, %v3896
        %v3997 = vadd.f32 %v3683, %v3899
        %v3998 = vadd.f32 %v3684, %v3904
        %v3999 = vadd.f32 %v3685, %v3907
        %v4000 = vadd.f32 %v3686, %v3912
        %v4001 = vadd.f32 %v3687, %v3915
        %v4002 = vadd.f32 %v3688, %v3920
        %v4003 = vadd.f32 %v3689, %v3923
        %v4004 = vadd.f32 %v3690, %v3928
        %v4005 = vadd.f32 %v3691, %v3931
        %v4006 = vadd.f32 %v3692, %v3936
        %v4007 = vadd.f32 %v3693, %v3939
        %v4008 = vadd.f32 %v3694, %v3944
        %v4009 = vadd.f32 %v3695, %v3947
        %v4010 = vadd.f32 %v3696, %v3952
        %v4011 = vadd.f32 %v3697, %v3955
        %v4012 = vadd.f32 %v3698, %v3960
        %v4013 = vadd.f32 %v3699, %v3963
        %v4014 = vadd.f32 %v3700, %v3968
        %v4015 = vadd.f32 %v3701, %v3971
        %v4016 = vadd.f32 %v3702, %v3976
        %v4017 = vadd.f32 %v3703, %v3979
        %v4018 = vld [vmem:[#allocation2 + $0x10] sm:$0xf]
        %v4019 = vld [vmem:[#allocation2 + $0x14] sm:$0xf]
        %v4020 = vld [vmem:[#allocation2 + $0x18] sm:$0xf]
        %v4021 = vld [vmem:[#allocation2 + $0x1c] sm:$0xf]
        %v4022 = vld [vmem:[#allocation2 + $0x20] sm:$0xf]
        %v4023 = vld [vmem:[#allocation2 + $0x24] sm:$0xf]
        %v4024 = vld [vmem:[#allocation2 + $0x28] sm:$0xf]
        %v4025 = vld [vmem:[#allocation2 + $0x2c] sm:$0xf]
        %v4026 = vld [vmem:[#allocation2 + $0x30] sm:$0xf]
        %v4027 = vld [vmem:[#allocation2 + $0x34] sm:$0xf]
        %v4028 = vld [vmem:[#allocation2 + $0x38] sm:$0xf]
        %v4029 = vld [vmem:[#allocation2 + $0x3c] sm:$0xf]
        %v4030 = vld [vmem:[#allocation2 + $0x40] sm:$0xf]
        %v4031 = vld [vmem:[#allocation2 + $0x44] sm:$0xf]
        %v4032 = vld [vmem:[#allocation2 + $0x48] sm:$0xf]
        %v4033 = vld [vmem:[#allocation2 + $0x4c] sm:$0xf]
        %v4034 = vld [vmem:[#allocation2 + $0x50] sm:$0xf]
        %v4035 = vld [vmem:[#allocation2 + $0x54] sm:$0xf]
        %v4036 = vld [vmem:[#allocation2 + $0x58] sm:$0xf]
        %v4037 = vld [vmem:[#allocation2 + $0x5c] sm:$0xf]
        %v4038 = vld [vmem:[#allocation2 + $0x60] sm:$0xf]
        %v4039 = vld [vmem:[#allocation2 + $0x64] sm:$0xf]
        %v4040 = vld [vmem:[#allocation2 + $0x68] sm:$0xf]
        %v4041 = vld [vmem:[#allocation2 + $0x6c] sm:$0xf]
        %v4042 = vld [vmem:[#allocation2 + $0x70] sm:$0xf]
        %v4043 = vld [vmem:[#allocation2 + $0x74] sm:$0xf]
        %v4044 = vld [vmem:[#allocation2 + $0x78] sm:$0xf]
        %v4045 = vld [vmem:[#allocation2 + $0x7c] sm:$0xf]
        %v4046 = vld [vmem:[#allocation2 + $0x80] sm:$0xf]
        %v4047 = vld [vmem:[#allocation2 + $0x84] sm:$0xf]
        %v4048 = vld [vmem:[#allocation2 + $0x88] sm:$0xf]
        %v4049 = vld [vmem:[#allocation2 + $0x8c] sm:$0xf]
        %v4050 = vld [vmem:[#allocation2 + $0x90] sm:$0xf]
        %v4051 = vld [vmem:[#allocation2 + $0x94] sm:$0xf]
        %v4052 = vld [vmem:[#allocation2 + $0x98] sm:$0xf]
        %v4053 = vld [vmem:[#allocation2 + $0x9c] sm:$0xf]
        %v4054 = vld [vmem:[#allocation2 + $0xa0] sm:$0x1]
        %s4055 = scalar_lea.vmem [#allocation8], 320
        %v4056 = vld [vmem:[%s4055] sm:$0xf]
        %v4057 = vld [vmem:[%s4055 + $0x4] sm:$0xf]
        %v4058 = vld [vmem:[%s4055 + $0x8] sm:$0xf]
        %v4059 = vld [vmem:[%s4055 + $0xc] sm:$0xf]
        %v4060 = vld [vmem:[%s4055 + $0x10] sm:$0xf]
        %v4061 = vld [vmem:[%s4055 + $0x14] sm:$0xf]
        %v4062 = vld [vmem:[%s4055 + $0x18] sm:$0xf]
        %v4063 = vld [vmem:[%s4055 + $0x1c] sm:$0xf]
        %v4064 = vld [vmem:[%s4055 + $0x20] sm:$0xf]
        %v4065 = vld [vmem:[%s4055 + $0x24] sm:$0xf]
        %v4066 = vld [vmem:[%s4055 + $0x28] sm:$0xf]
        %v4067 = vld [vmem:[%s4055 + $0x2c] sm:$0xf]
        %v4068 = vld [vmem:[%s4055 + $0x30] sm:$0xf]
        %v4069 = vld [vmem:[%s4055 + $0x34] sm:$0xf]
        %v4070 = vld [vmem:[%s4055 + $0x38] sm:$0xf]
        %v4071 = vld [vmem:[%s4055 + $0x3c] sm:$0xf]
        %v4109 = vunpack.c.l.b16 %v4018
        %v4110 = vunpack.c.l.b16 %v4019
        %v4111 = vunpack.c.l.b16 %v4020
        %v4112 = vunpack.c.l.b16 %v4021
        %v4113 = vunpack.c.l.b16 %v4022
        %v4114 = vunpack.c.l.b16 %v4023
        %v4115 = vunpack.c.l.b16 %v4024
        %v4116 = vunpack.c.l.b16 %v4025
        %v4117 = vunpack.c.l.b16 %v4026
        %v4118 = vunpack.c.l.b16 %v4027
        %v4119 = vunpack.c.l.b16 %v4028
        %v4120 = vunpack.c.l.b16 %v4029
        %v4121 = vunpack.c.l.b16 %v4030
        %v4122 = vunpack.c.l.b16 %v4031
        %v4123 = vunpack.c.l.b16 %v4032
        %v4124 = vunpack.c.l.b16 %v4033
        %v4125 = vunpack.c.l.b16 %v4034
        %v4126 = vunpack.c.l.b16 %v4035
        %v4127 = vunpack.c.l.b16 %v4036
        %v4128 = vunpack.c.l.b16 %v4037
        %v4129 = vunpack.c.l.b16 %v4038
        %v4130 = vunpack.c.l.b16 %v4039
        %v4131 = vunpack.c.l.b16 %v4040
        %v4132 = vunpack.c.l.b16 %v4041
        %v4133 = vunpack.c.l.b16 %v4042
        %v4134 = vunpack.c.l.b16 %v4043
        %v4135 = vunpack.c.l.b16 %v4044
        %v4136 = vunpack.c.l.b16 %v4045
        %v4137 = vunpack.c.l.b16 %v4046
        %v4138 = vunpack.c.l.b16 %v4047
        %v4139 = vunpack.c.l.b16 %v4048
        %v4140 = vunpack.c.l.b16 %v4049
        %v4141 = vunpack.c.l.b16 %v4050
        %v4142 = vunpack.c.l.b16 %v4051
        %v4143 = vunpack.c.l.b16 %v4052
        %v4144 = vunpack.c.l.b16 %v4053
        %v4145 = vunpack.c.l.b16 %v4054
        %v4146 = vpack.c.b16 %v4110, %v4109
        %v4147 = vpack.c.b16 %v4112, %v4111
        %v4148 = vpack.c.b16 %v4114, %v4113
        %v4149 = vpack.c.b16 %v4116, %v4115
        %v4150 = vpack.c.b16 %v4118, %v4117
        %v4151 = vpack.c.b16 %v4120, %v4119
        %v4152 = vpack.c.b16 %v4122, %v4121
        %v4153 = vpack.c.b16 %v4124, %v4123
        %v4154 = vpack.c.b16 %v4126, %v4125
        %v4155 = vpack.c.b16 %v4128, %v4127
        %v4156 = vpack.c.b16 %v4130, %v4129
        %v4157 = vpack.c.b16 %v4132, %v4131
        %v4158 = vpack.c.b16 %v4134, %v4133
        %v4159 = vpack.c.b16 %v4136, %v4135
        %v4160 = vpack.c.b16 %v4138, %v4137
        %v4161 = vpack.c.b16 %v4140, %v4139
        %v4162 = vpack.c.b16 %v4142, %v4141
        %v4163 = vpack.c.b16 %v4144, %v4143
        %v4164 = vpack.c.b16 %v4145, %v4145
        %vm4165 = vsmask.f32 7424
        %v4167 = vshrl.u32 %v4146, 16
        %v4169 = vshll.u32 %v4146, 16
        %v4171 = vrot.slane %v4169, 1
        %v4172 = vor.u32 %v4167, %v4171
        %v4174 = vshll.u32 %v4147, 16
        %v4176 = vrot.slane %v4174, 1
        %v4177 = vsel %vm4165, %v4172, %v4176
        %v4178 = vshrl.u32 %v4147, 16
        %v4180 = vor.u32 %v4178, %v4176
        %v4182 = vshll.u32 %v4148, 16
        %v4184 = vrot.slane %v4182, 1
        %v4185 = vsel %vm4165, %v4180, %v4184
        %v4186 = vshrl.u32 %v4148, 16
        %v4188 = vor.u32 %v4186, %v4184
        %v4190 = vshll.u32 %v4149, 16
        %v4192 = vrot.slane %v4190, 1
        %v4193 = vsel %vm4165, %v4188, %v4192
        %v4194 = vshrl.u32 %v4149, 16
        %v4196 = vor.u32 %v4194, %v4192
        %v4198 = vshll.u32 %v4150, 16
        %v4200 = vrot.slane %v4198, 1
        %v4201 = vsel %vm4165, %v4196, %v4200
        %v4202 = vshrl.u32 %v4150, 16
        %v4204 = vor.u32 %v4202, %v4200
        %v4206 = vshll.u32 %v4151, 16
        %v4208 = vrot.slane %v4206, 1
        %v4209 = vsel %vm4165, %v4204, %v4208
        %v4210 = vshrl.u32 %v4151, 16
        %v4212 = vor.u32 %v4210, %v4208
        %v4214 = vshll.u32 %v4152, 16
        %v4216 = vrot.slane %v4214, 1
        %v4217 = vsel %vm4165, %v4212, %v4216
        %v4218 = vshrl.u32 %v4152, 16
        %v4220 = vor.u32 %v4218, %v4216
        %v4222 = vshll.u32 %v4153, 16
        %v4224 = vrot.slane %v4222, 1
        %v4225 = vsel %vm4165, %v4220, %v4224
        %v4226 = vshrl.u32 %v4153, 16
        %v4228 = vor.u32 %v4226, %v4224
        %v4230 = vshll.u32 %v4154, 16
        %v4232 = vrot.slane %v4230, 1
        %v4233 = vsel %vm4165, %v4228, %v4232
        %v4234 = vshrl.u32 %v4154, 16
        %v4236 = vor.u32 %v4234, %v4232
        %v4238 = vshll.u32 %v4155, 16
        %v4240 = vrot.slane %v4238, 1
        %v4241 = vsel %vm4165, %v4236, %v4240
        %v4242 = vshrl.u32 %v4155, 16
        %v4244 = vor.u32 %v4242, %v4240
        %v4246 = vshll.u32 %v4156, 16
        %v4248 = vrot.slane %v4246, 1
        %v4249 = vsel %vm4165, %v4244, %v4248
        %v4250 = vshrl.u32 %v4156, 16
        %v4252 = vor.u32 %v4250, %v4248
        %v4254 = vshll.u32 %v4157, 16
        %v4256 = vrot.slane %v4254, 1
        %v4257 = vsel %vm4165, %v4252, %v4256
        %v4258 = vshrl.u32 %v4157, 16
        %v4260 = vor.u32 %v4258, %v4256
        %v4262 = vshll.u32 %v4158, 16
        %v4264 = vrot.slane %v4262, 1
        %v4265 = vsel %vm4165, %v4260, %v4264
        %v4266 = vshrl.u32 %v4158, 16
        %v4268 = vor.u32 %v4266, %v4264
        %v4270 = vshll.u32 %v4159, 16
        %v4272 = vrot.slane %v4270, 1
        %v4273 = vsel %vm4165, %v4268, %v4272
        %v4274 = vshrl.u32 %v4159, 16
        %v4276 = vor.u32 %v4274, %v4272
        %v4278 = vshll.u32 %v4160, 16
        %v4280 = vrot.slane %v4278, 1
        %v4281 = vsel %vm4165, %v4276, %v4280
        %v4282 = vshrl.u32 %v4160, 16
        %v4284 = vor.u32 %v4282, %v4280
        %v4286 = vshll.u32 %v4161, 16
        %v4288 = vrot.slane %v4286, 1
        %v4289 = vsel %vm4165, %v4284, %v4288
        %v4290 = vshrl.u32 %v4161, 16
        %v4292 = vor.u32 %v4290, %v4288
        %v4294 = vshll.u32 %v4162, 16
        %v4296 = vrot.slane %v4294, 1
        %v4297 = vsel %vm4165, %v4292, %v4296
        %v4298 = vshrl.u32 %v4162, 16
        %v4300 = vor.u32 %v4298, %v4296
        %v4302 = vshll.u32 %v4163, 16
        %v4304 = vrot.slane %v4302, 1
        %v4305 = vsel %vm4165, %v4300, %v4304
        %v4306 = vshrl.u32 %v4163, 16
        %v4308 = vor.u32 %v4306, %v4304
        %v4310 = vshll.u32 %v4164, 16
        %v4312 = vrot.slane %v4310, 1
        %v4313 = vsel %vm4165, %v4308, %v4312
        %v4348 = vunpack.c.l.b16 %v4056
        %v4349 = vunpack.c.l.b16 %v4057
        %v4350 = vunpack.c.l.b16 %v4058
        %v4351 = vunpack.c.l.b16 %v4059
        %v4352 = vunpack.c.l.b16 %v4060
        %v4353 = vunpack.c.l.b16 %v4061
        %v4354 = vunpack.c.l.b16 %v4062
        %v4355 = vunpack.c.l.b16 %v4063
        %v4356 = vunpack.c.l.b16 %v4064
        %v4357 = vunpack.c.l.b16 %v4065
        %v4358 = vunpack.c.l.b16 %v4066
        %v4359 = vunpack.c.l.b16 %v4067
        %v4360 = vunpack.c.l.b16 %v4068
        %v4361 = vunpack.c.l.b16 %v4069
        %v4362 = vunpack.c.l.b16 %v4070
        %v4363 = vunpack.c.l.b16 %v4071
        %v4364 = vpack.c.b16 %v4349, %v4348
        %v4365 = vpack.c.b16 %v4351, %v4350
        %v4366 = vpack.c.b16 %v4353, %v4352
        %v4367 = vpack.c.b16 %v4355, %v4354
        %v4368 = vpack.c.b16 %v4357, %v4356
        %v4369 = vpack.c.b16 %v4359, %v4358
        %v4370 = vpack.c.b16 %v4361, %v4360
        %v4371 = vpack.c.b16 %v4363, %v4362
        %4380 = vmatprep.subr.bf16.mxu0 0
        %4381 = vmatpush1.bf16.msra.mxu0 %v4371
        %4382 = vmatprep.subr.bf16.mxu0 0
        %4383 = vmatpush1.bf16.msra.mxu0 %v4370
        %4384 = vmatprep.subr.bf16.mxu0 0
        %4385 = vmatpush1.bf16.msra.mxu0 %v4369
        %4386 = vmatprep.subr.bf16.mxu0 0
        %4387 = vmatpush1.bf16.msra.mxu0 %v4368
        %4388 = vmatprep.subr.bf16.mxu0 0
        %4389 = vmatpush1.bf16.msra.mxu0 %v4367
        %4390 = vmatprep.subr.bf16.mxu0 0
        %4391 = vmatpush1.bf16.msra.mxu0 %v4366
        %4392 = vmatprep.subr.bf16.mxu0 0
        %4393 = vmatpush1.bf16.msra.mxu0 %v4365
        %4394 = vmatprep.subr.bf16.mxu0 0
        %4395 = vmatpush1.bf16.msra.mxu0 %v4364
        %4396 = vmatprep.subr.bf16.mxu0 0
        %4397 = vmatpush2.bf16.msra.mxu0 0
        %4398 = vmatprep.subr.bf16.mxu0 0
        %4399 = vmatpush2.bf16.msra.mxu0 0
        %4400 = vmatprep.subr.bf16.mxu0 0
        %4401 = vmatpush2.bf16.msra.mxu0 0
        %4402 = vmatprep.subr.bf16.mxu0 0
        %4403 = vmatpush2.bf16.msra.mxu0 0
        %4404 = vmatprep.subr.bf16.mxu0 0
        %4405 = vmatpush2.bf16.msra.mxu0 0
        %4406 = vmatprep.subr.bf16.mxu0 0
        %4407 = vmatpush2.bf16.msra.mxu0 0
        %4408 = vmatprep.subr.bf16.mxu0 0
        %4409 = vmatpush2.bf16.msra.mxu0 0
        %4410 = vmatprep.subr.bf16.mxu0 0
        %4411 = vmatpush2.bf16.msra.mxu0 0
        %4412 = vmatprep.mubr.bf16.mxu0 0
        %4413 = vmatmul.mubr.bf16.gmra.mxu0 %v4177
        %v4414 = vpop.f32.mrf.mxu0
        %v4415 = vadd.f32 0.0, %v4414
        %v4416 = vpop.f32.mrf.mxu0
        %v4417 = vpop.f32.mrf.mxu0
        %v4418 = vadd.f32 0.0, %v4417
        %v4419 = vpop.f32.mrf.mxu0
        %4420 = vmatprep.mubr.bf16.mxu0 0
        %4421 = vmatmul.mubr.bf16.gmra.mxu0 %v4185
        %v4422 = vpop.f32.mrf.mxu0
        %v4423 = vadd.f32 0.0, %v4422
        %v4424 = vpop.f32.mrf.mxu0
        %v4425 = vpop.f32.mrf.mxu0
        %v4426 = vadd.f32 0.0, %v4425
        %v4427 = vpop.f32.mrf.mxu0
        %4428 = vmatprep.mubr.bf16.mxu0 0
        %4429 = vmatmul.mubr.bf16.gmra.mxu0 %v4193
        %v4430 = vpop.f32.mrf.mxu0
        %v4431 = vadd.f32 0.0, %v4430
        %v4432 = vpop.f32.mrf.mxu0
        %v4433 = vpop.f32.mrf.mxu0
        %v4434 = vadd.f32 0.0, %v4433
        %v4435 = vpop.f32.mrf.mxu0
        %4436 = vmatprep.mubr.bf16.mxu0 0
        %4437 = vmatmul.mubr.bf16.gmra.mxu0 %v4201
        %v4438 = vpop.f32.mrf.mxu0
        %v4439 = vadd.f32 0.0, %v4438
        %v4440 = vpop.f32.mrf.mxu0
        %v4441 = vpop.f32.mrf.mxu0
        %v4442 = vadd.f32 0.0, %v4441
        %v4443 = vpop.f32.mrf.mxu0
        %4444 = vmatprep.mubr.bf16.mxu0 0
        %4445 = vmatmul.mubr.bf16.gmra.mxu0 %v4209
        %v4446 = vpop.f32.mrf.mxu0
        %v4447 = vadd.f32 0.0, %v4446
        %v4448 = vpop.f32.mrf.mxu0
        %v4449 = vpop.f32.mrf.mxu0
        %v4450 = vadd.f32 0.0, %v4449
        %v4451 = vpop.f32.mrf.mxu0
        %4452 = vmatprep.mubr.bf16.mxu0 0
        %4453 = vmatmul.mubr.bf16.gmra.mxu0 %v4217
        %v4454 = vpop.f32.mrf.mxu0
        %v4455 = vadd.f32 0.0, %v4454
        %v4456 = vpop.f32.mrf.mxu0
        %v4457 = vpop.f32.mrf.mxu0
        %v4458 = vadd.f32 0.0, %v4457
        %v4459 = vpop.f32.mrf.mxu0
        %4460 = vmatprep.mubr.bf16.mxu0 0
        %4461 = vmatmul.mubr.bf16.gmra.mxu0 %v4225
        %v4462 = vpop.f32.mrf.mxu0
        %v4463 = vadd.f32 0.0, %v4462
        %v4464 = vpop.f32.mrf.mxu0
        %v4465 = vpop.f32.mrf.mxu0
        %v4466 = vadd.f32 0.0, %v4465
        %v4467 = vpop.f32.mrf.mxu0
        %4468 = vmatprep.mubr.bf16.mxu0 0
        %4469 = vmatmul.mubr.bf16.gmra.mxu0 %v4233
        %v4470 = vpop.f32.mrf.mxu0
        %v4471 = vadd.f32 0.0, %v4470
        %v4472 = vpop.f32.mrf.mxu0
        %v4473 = vpop.f32.mrf.mxu0
        %v4474 = vadd.f32 0.0, %v4473
        %v4475 = vpop.f32.mrf.mxu0
        %4476 = vmatprep.mubr.bf16.mxu0 0
        %4477 = vmatmul.mubr.bf16.gmra.mxu0 %v4241
        %v4478 = vpop.f32.mrf.mxu0
        %v4479 = vadd.f32 0.0, %v4478
        %v4480 = vpop.f32.mrf.mxu0
        %v4481 = vpop.f32.mrf.mxu0
        %v4482 = vadd.f32 0.0, %v4481
        %v4483 = vpop.f32.mrf.mxu0
        %4484 = vmatprep.mubr.bf16.mxu0 0
        %4485 = vmatmul.mubr.bf16.gmra.mxu0 %v4249
        %v4486 = vpop.f32.mrf.mxu0
        %v4487 = vadd.f32 0.0, %v4486
        %v4488 = vpop.f32.mrf.mxu0
        %v4489 = vpop.f32.mrf.mxu0
        %v4490 = vadd.f32 0.0, %v4489
        %v4491 = vpop.f32.mrf.mxu0
        %4492 = vmatprep.mubr.bf16.mxu0 0
        %4493 = vmatmul.mubr.bf16.gmra.mxu0 %v4257
        %v4494 = vpop.f32.mrf.mxu0
        %v4495 = vadd.f32 0.0, %v4494
        %v4496 = vpop.f32.mrf.mxu0
        %v4497 = vpop.f32.mrf.mxu0
        %v4498 = vadd.f32 0.0, %v4497
        %v4499 = vpop.f32.mrf.mxu0
        %4500 = vmatprep.mubr.bf16.mxu0 0
        %4501 = vmatmul.mubr.bf16.gmra.mxu0 %v4265
        %v4502 = vpop.f32.mrf.mxu0
        %v4503 = vadd.f32 0.0, %v4502
        %v4504 = vpop.f32.mrf.mxu0
        %v4505 = vpop.f32.mrf.mxu0
        %v4506 = vadd.f32 0.0, %v4505
        %v4507 = vpop.f32.mrf.mxu0
        %4508 = vmatprep.mubr.bf16.mxu0 0
        %4509 = vmatmul.mubr.bf16.gmra.mxu0 %v4273
        %v4510 = vpop.f32.mrf.mxu0
        %v4511 = vadd.f32 0.0, %v4510
        %v4512 = vpop.f32.mrf.mxu0
        %v4513 = vpop.f32.mrf.mxu0
        %v4514 = vadd.f32 0.0, %v4513
        %v4515 = vpop.f32.mrf.mxu0
        %4516 = vmatprep.mubr.bf16.mxu0 0
        %4517 = vmatmul.mubr.bf16.gmra.mxu0 %v4281
        %v4518 = vpop.f32.mrf.mxu0
        %v4519 = vadd.f32 0.0, %v4518
        %v4520 = vpop.f32.mrf.mxu0
        %v4521 = vpop.f32.mrf.mxu0
        %v4522 = vadd.f32 0.0, %v4521
        %v4523 = vpop.f32.mrf.mxu0
        %4524 = vmatprep.mubr.bf16.mxu0 0
        %4525 = vmatmul.mubr.bf16.gmra.mxu0 %v4289
        %v4526 = vpop.f32.mrf.mxu0
        %v4527 = vadd.f32 0.0, %v4526
        %v4528 = vpop.f32.mrf.mxu0
        %v4529 = vpop.f32.mrf.mxu0
        %v4530 = vadd.f32 0.0, %v4529
        %v4531 = vpop.f32.mrf.mxu0
        %4532 = vmatprep.mubr.bf16.mxu0 0
        %4533 = vmatmul.mubr.bf16.gmra.mxu0 %v4297
        %v4534 = vpop.f32.mrf.mxu0
        %v4535 = vadd.f32 0.0, %v4534
        %v4536 = vpop.f32.mrf.mxu0
        %v4537 = vpop.f32.mrf.mxu0
        %v4538 = vadd.f32 0.0, %v4537
        %v4539 = vpop.f32.mrf.mxu0
        %4540 = vmatprep.mubr.bf16.mxu0 0
        %4541 = vmatmul.mubr.bf16.gmra.mxu0 %v4305
        %v4542 = vpop.f32.mrf.mxu0
        %v4543 = vadd.f32 0.0, %v4542
        %v4544 = vpop.f32.mrf.mxu0
        %v4545 = vpop.f32.mrf.mxu0
        %v4546 = vadd.f32 0.0, %v4545
        %v4547 = vpop.f32.mrf.mxu0
        %4548 = vmatprep.mubr.bf16.mxu0 0
        %4549 = vmatmul.mubr.bf16.gmra.mxu0 %v4313
        %v4550 = vpop.f32.mrf.mxu0
        %v4551 = vadd.f32 0.0, %v4550
        %v4552 = vpop.f32.mrf.mxu0
        %v4553 = vpop.f32.mrf.mxu0
        %v4554 = vadd.f32 0.0, %v4553
        %v4555 = vpop.f32.mrf.mxu0
        %4556 = vdwg.mxu0
        %v4557 = vadd.f32 %v3982, %v4415
        %v4558 = vadd.f32 %v3983, %v4418
        %v4559 = vadd.f32 %v3984, %v4423
        %v4560 = vadd.f32 %v3985, %v4426
        %v4561 = vadd.f32 %v3986, %v4431
        %v4562 = vadd.f32 %v3987, %v4434
        %v4563 = vadd.f32 %v3988, %v4439
        %v4564 = vadd.f32 %v3989, %v4442
        %v4565 = vadd.f32 %v3990, %v4447
        %v4566 = vadd.f32 %v3991, %v4450
        %v4567 = vadd.f32 %v3992, %v4455
        %v4568 = vadd.f32 %v3993, %v4458
        %v4569 = vadd.f32 %v3994, %v4463
        %v4570 = vadd.f32 %v3995, %v4466
        %v4571 = vadd.f32 %v3996, %v4471
        %v4572 = vadd.f32 %v3997, %v4474
        %v4573 = vadd.f32 %v3998, %v4479
        %v4574 = vadd.f32 %v3999, %v4482
        %v4575 = vadd.f32 %v4000, %v4487
        %v4576 = vadd.f32 %v4001, %v4490
        %v4577 = vadd.f32 %v4002, %v4495
        %v4578 = vadd.f32 %v4003, %v4498
        %v4579 = vadd.f32 %v4004, %v4503
        %v4580 = vadd.f32 %v4005, %v4506
        %v4581 = vadd.f32 %v4006, %v4511
        %v4582 = vadd.f32 %v4007, %v4514
        %v4583 = vadd.f32 %v4008, %v4519
        %v4584 = vadd.f32 %v4009, %v4522
        %v4585 = vadd.f32 %v4010, %v4527
        %v4586 = vadd.f32 %v4011, %v4530
        %v4587 = vadd.f32 %v4012, %v4535
        %v4588 = vadd.f32 %v4013, %v4538
        %v4589 = vadd.f32 %v4014, %v4543
        %v4590 = vadd.f32 %v4015, %v4546
        %v4591 = vadd.f32 %v4016, %v4551
        %v4592 = vadd.f32 %v4017, %v4554
        %v4593 = vld [vmem:[#allocation2 + $0x18] sm:$0xf]
        %v4594 = vld [vmem:[#allocation2 + $0x1c] sm:$0xf]
        %v4595 = vld [vmem:[#allocation2 + $0x20] sm:$0xf]
        %v4596 = vld [vmem:[#allocation2 + $0x24] sm:$0xf]
        %v4597 = vld [vmem:[#allocation2 + $0x28] sm:$0xf]
        %v4598 = vld [vmem:[#allocation2 + $0x2c] sm:$0xf]
        %v4599 = vld [vmem:[#allocation2 + $0x30] sm:$0xf]
        %v4600 = vld [vmem:[#allocation2 + $0x34] sm:$0xf]
        %v4601 = vld [vmem:[#allocation2 + $0x38] sm:$0xf]
        %v4602 = vld [vmem:[#allocation2 + $0x3c] sm:$0xf]
        %v4603 = vld [vmem:[#allocation2 + $0x40] sm:$0xf]
        %v4604 = vld [vmem:[#allocation2 + $0x44] sm:$0xf]
        %v4605 = vld [vmem:[#allocation2 + $0x48] sm:$0xf]
        %v4606 = vld [vmem:[#allocation2 + $0x4c] sm:$0xf]
        %v4607 = vld [vmem:[#allocation2 + $0x50] sm:$0xf]
        %v4608 = vld [vmem:[#allocation2 + $0x54] sm:$0xf]
        %v4609 = vld [vmem:[#allocation2 + $0x58] sm:$0xf]
        %v4610 = vld [vmem:[#allocation2 + $0x5c] sm:$0xf]
        %v4611 = vld [vmem:[#allocation2 + $0x60] sm:$0xf]
        %v4612 = vld [vmem:[#allocation2 + $0x64] sm:$0xf]
        %v4613 = vld [vmem:[#allocation2 + $0x68] sm:$0xf]
        %v4614 = vld [vmem:[#allocation2 + $0x6c] sm:$0xf]
        %v4615 = vld [vmem:[#allocation2 + $0x70] sm:$0xf]
        %v4616 = vld [vmem:[#allocation2 + $0x74] sm:$0xf]
        %v4617 = vld [vmem:[#allocation2 + $0x78] sm:$0xf]
        %v4618 = vld [vmem:[#allocation2 + $0x7c] sm:$0xf]
        %v4619 = vld [vmem:[#allocation2 + $0x80] sm:$0xf]
        %v4620 = vld [vmem:[#allocation2 + $0x84] sm:$0xf]
        %v4621 = vld [vmem:[#allocation2 + $0x88] sm:$0xf]
        %v4622 = vld [vmem:[#allocation2 + $0x8c] sm:$0xf]
        %v4623 = vld [vmem:[#allocation2 + $0x90] sm:$0xf]
        %v4624 = vld [vmem:[#allocation2 + $0x94] sm:$0xf]
        %v4625 = vld [vmem:[#allocation2 + $0x98] sm:$0xf]
        %v4626 = vld [vmem:[#allocation2 + $0x9c] sm:$0xf]
        %v4627 = vld [vmem:[#allocation2 + $0xa0] sm:$0xf]
        %v4628 = vld [vmem:[#allocation2 + $0xa4] sm:$0xf]
        %v4629 = vld [vmem:[#allocation2 + $0xa8] sm:$0x1]
        %s4630 = scalar_lea.vmem [#allocation8], 384
        %v4631 = vld [vmem:[%s4630] sm:$0xf]
        %v4632 = vld [vmem:[%s4630 + $0x4] sm:$0xf]
        %v4633 = vld [vmem:[%s4630 + $0x8] sm:$0xf]
        %v4634 = vld [vmem:[%s4630 + $0xc] sm:$0xf]
        %v4635 = vld [vmem:[%s4630 + $0x10] sm:$0xf]
        %v4636 = vld [vmem:[%s4630 + $0x14] sm:$0xf]
        %v4637 = vld [vmem:[%s4630 + $0x18] sm:$0xf]
        %v4638 = vld [vmem:[%s4630 + $0x1c] sm:$0xf]
        %v4639 = vld [vmem:[%s4630 + $0x20] sm:$0xf]
        %v4640 = vld [vmem:[%s4630 + $0x24] sm:$0xf]
        %v4641 = vld [vmem:[%s4630 + $0x28] sm:$0xf]
        %v4642 = vld [vmem:[%s4630 + $0x2c] sm:$0xf]
        %v4643 = vld [vmem:[%s4630 + $0x30] sm:$0xf]
        %v4644 = vld [vmem:[%s4630 + $0x34] sm:$0xf]
        %v4645 = vld [vmem:[%s4630 + $0x38] sm:$0xf]
        %v4646 = vld [vmem:[%s4630 + $0x3c] sm:$0xf]
        %v4684 = vunpack.c.l.b16 %v4593
        %v4685 = vunpack.c.l.b16 %v4594
        %v4686 = vunpack.c.l.b16 %v4595
        %v4687 = vunpack.c.l.b16 %v4596
        %v4688 = vunpack.c.l.b16 %v4597
        %v4689 = vunpack.c.l.b16 %v4598
        %v4690 = vunpack.c.l.b16 %v4599
        %v4691 = vunpack.c.l.b16 %v4600
        %v4692 = vunpack.c.l.b16 %v4601
        %v4693 = vunpack.c.l.b16 %v4602
        %v4694 = vunpack.c.l.b16 %v4603
        %v4695 = vunpack.c.l.b16 %v4604
        %v4696 = vunpack.c.l.b16 %v4605
        %v4697 = vunpack.c.l.b16 %v4606
        %v4698 = vunpack.c.l.b16 %v4607
        %v4699 = vunpack.c.l.b16 %v4608
        %v4700 = vunpack.c.l.b16 %v4609
        %v4701 = vunpack.c.l.b16 %v4610
        %v4702 = vunpack.c.l.b16 %v4611
        %v4703 = vunpack.c.l.b16 %v4612
        %v4704 = vunpack.c.l.b16 %v4613
        %v4705 = vunpack.c.l.b16 %v4614
        %v4706 = vunpack.c.l.b16 %v4615
        %v4707 = vunpack.c.l.b16 %v4616
        %v4708 = vunpack.c.l.b16 %v4617
        %v4709 = vunpack.c.l.b16 %v4618
        %v4710 = vunpack.c.l.b16 %v4619
        %v4711 = vunpack.c.l.b16 %v4620
        %v4712 = vunpack.c.l.b16 %v4621
        %v4713 = vunpack.c.l.b16 %v4622
        %v4714 = vunpack.c.l.b16 %v4623
        %v4715 = vunpack.c.l.b16 %v4624
        %v4716 = vunpack.c.l.b16 %v4625
        %v4717 = vunpack.c.l.b16 %v4626
        %v4718 = vunpack.c.l.b16 %v4627
        %v4719 = vunpack.c.l.b16 %v4628
        %v4720 = vunpack.c.l.b16 %v4629
        %v4721 = vpack.c.b16 %v4685, %v4684
        %v4722 = vpack.c.b16 %v4687, %v4686
        %v4723 = vpack.c.b16 %v4689, %v4688
        %v4724 = vpack.c.b16 %v4691, %v4690
        %v4725 = vpack.c.b16 %v4693, %v4692
        %v4726 = vpack.c.b16 %v4695, %v4694
        %v4727 = vpack.c.b16 %v4697, %v4696
        %v4728 = vpack.c.b16 %v4699, %v4698
        %v4729 = vpack.c.b16 %v4701, %v4700
        %v4730 = vpack.c.b16 %v4703, %v4702
        %v4731 = vpack.c.b16 %v4705, %v4704
        %v4732 = vpack.c.b16 %v4707, %v4706
        %v4733 = vpack.c.b16 %v4709, %v4708
        %v4734 = vpack.c.b16 %v4711, %v4710
        %v4735 = vpack.c.b16 %v4713, %v4712
        %v4736 = vpack.c.b16 %v4715, %v4714
        %v4737 = vpack.c.b16 %v4717, %v4716
        %v4738 = vpack.c.b16 %v4719, %v4718
        %v4739 = vpack.c.b16 %v4720, %v4720
        %v4741 = vshrl.u32 %v4721, 16
        %v4743 = vshll.u32 %v4721, 16
        %v4745 = vrot.slane %v4743, 1
        %v4746 = vor.u32 %v4741, %v4745
        %v4748 = vshll.u32 %v4722, 16
        %v4750 = vrot.slane %v4748, 1
        %v4751 = vsel %vm4165, %v4746, %v4750
        %v4752 = vshrl.u32 %v4722, 16
        %v4754 = vor.u32 %v4752, %v4750
        %v4756 = vshll.u32 %v4723, 16
        %v4758 = vrot.slane %v4756, 1
        %v4759 = vsel %vm4165, %v4754, %v4758
        %v4760 = vshrl.u32 %v4723, 16
        %v4762 = vor.u32 %v4760, %v4758
        %v4764 = vshll.u32 %v4724, 16
        %v4766 = vrot.slane %v4764, 1
        %v4767 = vsel %vm4165, %v4762, %v4766
        %v4768 = vshrl.u32 %v4724, 16
        %v4770 = vor.u32 %v4768, %v4766
        %v4772 = vshll.u32 %v4725, 16
        %v4774 = vrot.slane %v4772, 1
        %v4775 = vsel %vm4165, %v4770, %v4774
        %v4776 = vshrl.u32 %v4725, 16
        %v4778 = vor.u32 %v4776, %v4774
        %v4780 = vshll.u32 %v4726, 16
        %v4782 = vrot.slane %v4780, 1
        %v4783 = vsel %vm4165, %v4778, %v4782
        %v4784 = vshrl.u32 %v4726, 16
        %v4786 = vor.u32 %v4784, %v4782
        %v4788 = vshll.u32 %v4727, 16
        %v4790 = vrot.slane %v4788, 1
        %v4791 = vsel %vm4165, %v4786, %v4790
        %v4792 = vshrl.u32 %v4727, 16
        %v4794 = vor.u32 %v4792, %v4790
        %v4796 = vshll.u32 %v4728, 16
        %v4798 = vrot.slane %v4796, 1
        %v4799 = vsel %vm4165, %v4794, %v4798
        %v4800 = vshrl.u32 %v4728, 16
        %v4802 = vor.u32 %v4800, %v4798
        %v4804 = vshll.u32 %v4729, 16
        %v4806 = vrot.slane %v4804, 1
        %v4807 = vsel %vm4165, %v4802, %v4806
        %v4808 = vshrl.u32 %v4729, 16
        %v4810 = vor.u32 %v4808, %v4806
        %v4812 = vshll.u32 %v4730, 16
        %v4814 = vrot.slane %v4812, 1
        %v4815 = vsel %vm4165, %v4810, %v4814
        %v4816 = vshrl.u32 %v4730, 16
        %v4818 = vor.u32 %v4816, %v4814
        %v4820 = vshll.u32 %v4731, 16
        %v4822 = vrot.slane %v4820, 1
        %v4823 = vsel %vm4165, %v4818, %v4822
        %v4824 = vshrl.u32 %v4731, 16
        %v4826 = vor.u32 %v4824, %v4822
        %v4828 = vshll.u32 %v4732, 16
        %v4830 = vrot.slane %v4828, 1
        %v4831 = vsel %vm4165, %v4826, %v4830
        %v4832 = vshrl.u32 %v4732, 16
        %v4834 = vor.u32 %v4832, %v4830
        %v4836 = vshll.u32 %v4733, 16
        %v4838 = vrot.slane %v4836, 1
        %v4839 = vsel %vm4165, %v4834, %v4838
        %v4840 = vshrl.u32 %v4733, 16
        %v4842 = vor.u32 %v4840, %v4838
        %v4844 = vshll.u32 %v4734, 16
        %v4846 = vrot.slane %v4844, 1
        %v4847 = vsel %vm4165, %v4842, %v4846
        %v4848 = vshrl.u32 %v4734, 16
        %v4850 = vor.u32 %v4848, %v4846
        %v4852 = vshll.u32 %v4735, 16
        %v4854 = vrot.slane %v4852, 1
        %v4855 = vsel %vm4165, %v4850, %v4854
        %v4856 = vshrl.u32 %v4735, 16
        %v4858 = vor.u32 %v4856, %v4854
        %v4860 = vshll.u32 %v4736, 16
        %v4862 = vrot.slane %v4860, 1
        %v4863 = vsel %vm4165, %v4858, %v4862
        %v4864 = vshrl.u32 %v4736, 16
        %v4866 = vor.u32 %v4864, %v4862
        %v4868 = vshll.u32 %v4737, 16
        %v4870 = vrot.slane %v4868, 1
        %v4871 = vsel %vm4165, %v4866, %v4870
        %v4872 = vshrl.u32 %v4737, 16
        %v4874 = vor.u32 %v4872, %v4870
        %v4876 = vshll.u32 %v4738, 16
        %v4878 = vrot.slane %v4876, 1
        %v4879 = vsel %vm4165, %v4874, %v4878
        %v4880 = vshrl.u32 %v4738, 16
        %v4882 = vor.u32 %v4880, %v4878
        %v4884 = vshll.u32 %v4739, 16
        %v4886 = vrot.slane %v4884, 1
        %v4887 = vsel %vm4165, %v4882, %v4886
        %v4922 = vunpack.c.l.b16 %v4631
        %v4923 = vunpack.c.l.b16 %v4632
        %v4924 = vunpack.c.l.b16 %v4633
        %v4925 = vunpack.c.l.b16 %v4634
        %v4926 = vunpack.c.l.b16 %v4635
        %v4927 = vunpack.c.l.b16 %v4636
        %v4928 = vunpack.c.l.b16 %v4637
        %v4929 = vunpack.c.l.b16 %v4638
        %v4930 = vunpack.c.l.b16 %v4639
        %v4931 = vunpack.c.l.b16 %v4640
        %v4932 = vunpack.c.l.b16 %v4641
        %v4933 = vunpack.c.l.b16 %v4642
        %v4934 = vunpack.c.l.b16 %v4643
        %v4935 = vunpack.c.l.b16 %v4644
        %v4936 = vunpack.c.l.b16 %v4645
        %v4937 = vunpack.c.l.b16 %v4646
        %v4938 = vpack.c.b16 %v4923, %v4922
        %v4939 = vpack.c.b16 %v4925, %v4924
        %v4940 = vpack.c.b16 %v4927, %v4926
        %v4941 = vpack.c.b16 %v4929, %v4928
        %v4942 = vpack.c.b16 %v4931, %v4930
        %v4943 = vpack.c.b16 %v4933, %v4932
        %v4944 = vpack.c.b16 %v4935, %v4934
        %v4945 = vpack.c.b16 %v4937, %v4936
        %4954 = vmatprep.subr.bf16.mxu0 0
        %4955 = vmatpush1.bf16.msra.mxu0 %v4945
        %4956 = vmatprep.subr.bf16.mxu0 0
        %4957 = vmatpush1.bf16.msra.mxu0 %v4944
        %4958 = vmatprep.subr.bf16.mxu0 0
        %4959 = vmatpush1.bf16.msra.mxu0 %v4943
        %4960 = vmatprep.subr.bf16.mxu0 0
        %4961 = vmatpush1.bf16.msra.mxu0 %v4942
        %4962 = vmatprep.subr.bf16.mxu0 0
        %4963 = vmatpush1.bf16.msra.mxu0 %v4941
        %4964 = vmatprep.subr.bf16.mxu0 0
        %4965 = vmatpush1.bf16.msra.mxu0 %v4940
        %4966 = vmatprep.subr.bf16.mxu0 0
        %4967 = vmatpush1.bf16.msra.mxu0 %v4939
        %4968 = vmatprep.subr.bf16.mxu0 0
        %4969 = vmatpush1.bf16.msra.mxu0 %v4938
        %4970 = vmatprep.subr.bf16.mxu0 0
        %4971 = vmatpush2.bf16.msra.mxu0 0
        %4972 = vmatprep.subr.bf16.mxu0 0
        %4973 = vmatpush2.bf16.msra.mxu0 0
        %4974 = vmatprep.subr.bf16.mxu0 0
        %4975 = vmatpush2.bf16.msra.mxu0 0
        %4976 = vmatprep.subr.bf16.mxu0 0
        %4977 = vmatpush2.bf16.msra.mxu0 0
        %4978 = vmatprep.subr.bf16.mxu0 0
        %4979 = vmatpush2.bf16.msra.mxu0 0
        %4980 = vmatprep.subr.bf16.mxu0 0
        %4981 = vmatpush2.bf16.msra.mxu0 0
        %4982 = vmatprep.subr.bf16.mxu0 0
        %4983 = vmatpush2.bf16.msra.mxu0 0
        %4984 = vmatprep.subr.bf16.mxu0 0
        %4985 = vmatpush2.bf16.msra.mxu0 0
        %4986 = vmatprep.mubr.bf16.mxu0 0
        %4987 = vmatmul.mubr.bf16.gmra.mxu0 %v4751
        %v4988 = vpop.f32.mrf.mxu0
        %v4989 = vadd.f32 0.0, %v4988
        %v4990 = vpop.f32.mrf.mxu0
        %v4991 = vpop.f32.mrf.mxu0
        %v4992 = vadd.f32 0.0, %v4991
        %v4993 = vpop.f32.mrf.mxu0
        %4994 = vmatprep.mubr.bf16.mxu0 0
        %4995 = vmatmul.mubr.bf16.gmra.mxu0 %v4759
        %v4996 = vpop.f32.mrf.mxu0
        %v4997 = vadd.f32 0.0, %v4996
        %v4998 = vpop.f32.mrf.mxu0
        %v4999 = vpop.f32.mrf.mxu0
        %v5000 = vadd.f32 0.0, %v4999
        %v5001 = vpop.f32.mrf.mxu0
        %5002 = vmatprep.mubr.bf16.mxu0 0
        %5003 = vmatmul.mubr.bf16.gmra.mxu0 %v4767
        %v5004 = vpop.f32.mrf.mxu0
        %v5005 = vadd.f32 0.0, %v5004
        %v5006 = vpop.f32.mrf.mxu0
        %v5007 = vpop.f32.mrf.mxu0
        %v5008 = vadd.f32 0.0, %v5007
        %v5009 = vpop.f32.mrf.mxu0
        %5010 = vmatprep.mubr.bf16.mxu0 0
        %5011 = vmatmul.mubr.bf16.gmra.mxu0 %v4775
        %v5012 = vpop.f32.mrf.mxu0
        %v5013 = vadd.f32 0.0, %v5012
        %v5014 = vpop.f32.mrf.mxu0
        %v5015 = vpop.f32.mrf.mxu0
        %v5016 = vadd.f32 0.0, %v5015
        %v5017 = vpop.f32.mrf.mxu0
        %5018 = vmatprep.mubr.bf16.mxu0 0
        %5019 = vmatmul.mubr.bf16.gmra.mxu0 %v4783
        %v5020 = vpop.f32.mrf.mxu0
        %v5021 = vadd.f32 0.0, %v5020
        %v5022 = vpop.f32.mrf.mxu0
        %v5023 = vpop.f32.mrf.mxu0
        %v5024 = vadd.f32 0.0, %v5023
        %v5025 = vpop.f32.mrf.mxu0
        %5026 = vmatprep.mubr.bf16.mxu0 0
        %5027 = vmatmul.mubr.bf16.gmra.mxu0 %v4791
        %v5028 = vpop.f32.mrf.mxu0
        %v5029 = vadd.f32 0.0, %v5028
        %v5030 = vpop.f32.mrf.mxu0
        %v5031 = vpop.f32.mrf.mxu0
        %v5032 = vadd.f32 0.0, %v5031
        %v5033 = vpop.f32.mrf.mxu0
        %5034 = vmatprep.mubr.bf16.mxu0 0
        %5035 = vmatmul.mubr.bf16.gmra.mxu0 %v4799
        %v5036 = vpop.f32.mrf.mxu0
        %v5037 = vadd.f32 0.0, %v5036
        %v5038 = vpop.f32.mrf.mxu0
        %v5039 = vpop.f32.mrf.mxu0
        %v5040 = vadd.f32 0.0, %v5039
        %v5041 = vpop.f32.mrf.mxu0
        %5042 = vmatprep.mubr.bf16.mxu0 0
        %5043 = vmatmul.mubr.bf16.gmra.mxu0 %v4807
        %v5044 = vpop.f32.mrf.mxu0
        %v5045 = vadd.f32 0.0, %v5044
        %v5046 = vpop.f32.mrf.mxu0
        %v5047 = vpop.f32.mrf.mxu0
        %v5048 = vadd.f32 0.0, %v5047
        %v5049 = vpop.f32.mrf.mxu0
        %5050 = vmatprep.mubr.bf16.mxu0 0
        %5051 = vmatmul.mubr.bf16.gmra.mxu0 %v4815
        %v5052 = vpop.f32.mrf.mxu0
        %v5053 = vadd.f32 0.0, %v5052
        %v5054 = vpop.f32.mrf.mxu0
        %v5055 = vpop.f32.mrf.mxu0
        %v5056 = vadd.f32 0.0, %v5055
        %v5057 = vpop.f32.mrf.mxu0
        %5058 = vmatprep.mubr.bf16.mxu0 0
        %5059 = vmatmul.mubr.bf16.gmra.mxu0 %v4823
        %v5060 = vpop.f32.mrf.mxu0
        %v5061 = vadd.f32 0.0, %v5060
        %v5062 = vpop.f32.mrf.mxu0
        %v5063 = vpop.f32.mrf.mxu0
        %v5064 = vadd.f32 0.0, %v5063
        %v5065 = vpop.f32.mrf.mxu0
        %5066 = vmatprep.mubr.bf16.mxu0 0
        %5067 = vmatmul.mubr.bf16.gmra.mxu0 %v4831
        %v5068 = vpop.f32.mrf.mxu0
        %v5069 = vadd.f32 0.0, %v5068
        %v5070 = vpop.f32.mrf.mxu0
        %v5071 = vpop.f32.mrf.mxu0
        %v5072 = vadd.f32 0.0, %v5071
        %v5073 = vpop.f32.mrf.mxu0
        %5074 = vmatprep.mubr.bf16.mxu0 0
        %5075 = vmatmul.mubr.bf16.gmra.mxu0 %v4839
        %v5076 = vpop.f32.mrf.mxu0
        %v5077 = vadd.f32 0.0, %v5076
        %v5078 = vpop.f32.mrf.mxu0
        %v5079 = vpop.f32.mrf.mxu0
        %v5080 = vadd.f32 0.0, %v5079
        %v5081 = vpop.f32.mrf.mxu0
        %5082 = vmatprep.mubr.bf16.mxu0 0
        %5083 = vmatmul.mubr.bf16.gmra.mxu0 %v4847
        %v5084 = vpop.f32.mrf.mxu0
        %v5085 = vadd.f32 0.0, %v5084
        %v5086 = vpop.f32.mrf.mxu0
        %v5087 = vpop.f32.mrf.mxu0
        %v5088 = vadd.f32 0.0, %v5087
        %v5089 = vpop.f32.mrf.mxu0
        %5090 = vmatprep.mubr.bf16.mxu0 0
        %5091 = vmatmul.mubr.bf16.gmra.mxu0 %v4855
        %v5092 = vpop.f32.mrf.mxu0
        %v5093 = vadd.f32 0.0, %v5092
        %v5094 = vpop.f32.mrf.mxu0
        %v5095 = vpop.f32.mrf.mxu0
        %v5096 = vadd.f32 0.0, %v5095
        %v5097 = vpop.f32.mrf.mxu0
        %5098 = vmatprep.mubr.bf16.mxu0 0
        %5099 = vmatmul.mubr.bf16.gmra.mxu0 %v4863
        %v5100 = vpop.f32.mrf.mxu0
        %v5101 = vadd.f32 0.0, %v5100
        %v5102 = vpop.f32.mrf.mxu0
        %v5103 = vpop.f32.mrf.mxu0
        %v5104 = vadd.f32 0.0, %v5103
        %v5105 = vpop.f32.mrf.mxu0
        %5106 = vmatprep.mubr.bf16.mxu0 0
        %5107 = vmatmul.mubr.bf16.gmra.mxu0 %v4871
        %v5108 = vpop.f32.mrf.mxu0
        %v5109 = vadd.f32 0.0, %v5108
        %v5110 = vpop.f32.mrf.mxu0
        %v5111 = vpop.f32.mrf.mxu0
        %v5112 = vadd.f32 0.0, %v5111
        %v5113 = vpop.f32.mrf.mxu0
        %5114 = vmatprep.mubr.bf16.mxu0 0
        %5115 = vmatmul.mubr.bf16.gmra.mxu0 %v4879
        %v5116 = vpop.f32.mrf.mxu0
        %v5117 = vadd.f32 0.0, %v5116
        %v5118 = vpop.f32.mrf.mxu0
        %v5119 = vpop.f32.mrf.mxu0
        %v5120 = vadd.f32 0.0, %v5119
        %v5121 = vpop.f32.mrf.mxu0
        %5122 = vmatprep.mubr.bf16.mxu0 0
        %5123 = vmatmul.mubr.bf16.gmra.mxu0 %v4887
        %v5124 = vpop.f32.mrf.mxu0
        %v5125 = vadd.f32 0.0, %v5124
        %v5126 = vpop.f32.mrf.mxu0
        %v5127 = vpop.f32.mrf.mxu0
        %v5128 = vadd.f32 0.0, %v5127
        %v5129 = vpop.f32.mrf.mxu0
        %5130 = vdwg.mxu0
        %v5131 = vadd.f32 %v4557, %v4989
        %v5132 = vadd.f32 %v4558, %v4992
        %v5133 = vadd.f32 %v4559, %v4997
        %v5134 = vadd.f32 %v4560, %v5000
        %v5135 = vadd.f32 %v4561, %v5005
        %v5136 = vadd.f32 %v4562, %v5008
        %v5137 = vadd.f32 %v4563, %v5013
        %v5138 = vadd.f32 %v4564, %v5016
        %v5139 = vadd.f32 %v4565, %v5021
        %v5140 = vadd.f32 %v4566, %v5024
        %v5141 = vadd.f32 %v4567, %v5029
        %v5142 = vadd.f32 %v4568, %v5032
        %v5143 = vadd.f32 %v4569, %v5037
        %v5144 = vadd.f32 %v4570, %v5040
        %v5145 = vadd.f32 %v4571, %v5045
        %v5146 = vadd.f32 %v4572, %v5048
        %v5147 = vadd.f32 %v4573, %v5053
        %v5148 = vadd.f32 %v4574, %v5056
        %v5149 = vadd.f32 %v4575, %v5061
        %v5150 = vadd.f32 %v4576, %v5064
        %v5151 = vadd.f32 %v4577, %v5069
        %v5152 = vadd.f32 %v4578, %v5072
        %v5153 = vadd.f32 %v4579, %v5077
        %v5154 = vadd.f32 %v4580, %v5080
        %v5155 = vadd.f32 %v4581, %v5085
        %v5156 = vadd.f32 %v4582, %v5088
        %v5157 = vadd.f32 %v4583, %v5093
        %v5158 = vadd.f32 %v4584, %v5096
        %v5159 = vadd.f32 %v4585, %v5101
        %v5160 = vadd.f32 %v4586, %v5104
        %v5161 = vadd.f32 %v4587, %v5109
        %v5162 = vadd.f32 %v4588, %v5112
        %v5163 = vadd.f32 %v4589, %v5117
        %v5164 = vadd.f32 %v4590, %v5120
        %v5165 = vadd.f32 %v4591, %v5125
        %v5166 = vadd.f32 %v4592, %v5128
        %v5167 = vld [vmem:[#allocation2 + $0x18] sm:$0xe]
        %s5168 = scalar_lea.vmem [#allocation8], 448
        %v5169 = vld [vmem:[%s5168] sm:$0xf]
        %v5170 = vld [vmem:[%s5168 + $0x4] sm:$0xf]
        %v5171 = vld [vmem:[%s5168 + $0x8] sm:$0xf]
        %v5172 = vld [vmem:[%s5168 + $0xc] sm:$0xf]
        %v5173 = vld [vmem:[%s5168 + $0x10] sm:$0xf]
        %v5174 = vld [vmem:[%s5168 + $0x14] sm:$0xf]
        %v5175 = vld [vmem:[%s5168 + $0x18] sm:$0xf]
        %v5176 = vld [vmem:[%s5168 + $0x1c] sm:$0xf]
        %v5177 = vld [vmem:[%s5168 + $0x20] sm:$0xf]
        %v5178 = vld [vmem:[%s5168 + $0x24] sm:$0xf]
        %v5179 = vld [vmem:[%s5168 + $0x28] sm:$0xf]
        %v5180 = vld [vmem:[%s5168 + $0x2c] sm:$0xf]
        %v5181 = vld [vmem:[%s5168 + $0x30] sm:$0xf]
        %v5182 = vld [vmem:[%s5168 + $0x34] sm:$0xf]
        %v5183 = vld [vmem:[%s5168 + $0x38] sm:$0xf]
        %v5184 = vld [vmem:[%s5168 + $0x3c] sm:$0xf]
        %v5186 = vunpack.c.l.b16 %v5167
        %v5187 = vpack.c.b16 %v4685, %v5186
        %vm5188 = vcmask 1046528
        %v5189 = vrot.slane %v5187, 1
        %v5190 = vrot.slane %v4722, 1
        %v5191 = vsel %vm5188, %v5189, %v5190
        %v5192 = vrot.slane %v4723, 1
        %v5193 = vsel %vm5188, %v5190, %v5192
        %v5194 = vrot.slane %v4724, 1
        %v5195 = vsel %vm5188, %v5192, %v5194
        %v5196 = vrot.slane %v4725, 1
        %v5197 = vsel %vm5188, %v5194, %v5196
        %v5198 = vrot.slane %v4726, 1
        %v5199 = vsel %vm5188, %v5196, %v5198
        %v5200 = vrot.slane %v4727, 1
        %v5201 = vsel %vm5188, %v5198, %v5200
        %v5202 = vrot.slane %v4728, 1
        %v5203 = vsel %vm5188, %v5200, %v5202
        %v5204 = vrot.slane %v4729, 1
        %v5205 = vsel %vm5188, %v5202, %v5204
        %v5206 = vrot.slane %v4730, 1
        %v5207 = vsel %vm5188, %v5204, %v5206
        %v5208 = vrot.slane %v4731, 1
        %v5209 = vsel %vm5188, %v5206, %v5208
        %v5210 = vrot.slane %v4732, 1
        %v5211 = vsel %vm5188, %v5208, %v5210
        %v5212 = vrot.slane %v4733, 1
        %v5213 = vsel %vm5188, %v5210, %v5212
        %v5214 = vrot.slane %v4734, 1
        %v5215 = vsel %vm5188, %v5212, %v5214
        %v5216 = vrot.slane %v4735, 1
        %v5217 = vsel %vm5188, %v5214, %v5216
        %v5218 = vrot.slane %v4736, 1
        %v5219 = vsel %vm5188, %v5216, %v5218
        %v5220 = vrot.slane %v4737, 1
        %v5221 = vsel %vm5188, %v5218, %v5220
        %v5222 = vrot.slane %v4738, 1
        %v5223 = vsel %vm5188, %v5220, %v5222
        %v5224 = vrot.slane %v4739, 1
        %v5225 = vsel %vm5188, %v5222, %v5224
        %v5260 = vunpack.c.l.b16 %v5169
        %v5261 = vunpack.c.l.b16 %v5170
        %v5262 = vunpack.c.l.b16 %v5171
        %v5263 = vunpack.c.l.b16 %v5172
        %v5264 = vunpack.c.l.b16 %v5173
        %v5265 = vunpack.c.l.b16 %v5174
        %v5266 = vunpack.c.l.b16 %v5175
        %v5267 = vunpack.c.l.b16 %v5176
        %v5268 = vunpack.c.l.b16 %v5177
        %v5269 = vunpack.c.l.b16 %v5178
        %v5270 = vunpack.c.l.b16 %v5179
        %v5271 = vunpack.c.l.b16 %v5180
        %v5272 = vunpack.c.l.b16 %v5181
        %v5273 = vunpack.c.l.b16 %v5182
        %v5274 = vunpack.c.l.b16 %v5183
        %v5275 = vunpack.c.l.b16 %v5184
        %v5276 = vpack.c.b16 %v5261, %v5260
        %v5277 = vpack.c.b16 %v5263, %v5262
        %v5278 = vpack.c.b16 %v5265, %v5264
        %v5279 = vpack.c.b16 %v5267, %v5266
        %v5280 = vpack.c.b16 %v5269, %v5268
        %v5281 = vpack.c.b16 %v5271, %v5270
        %v5282 = vpack.c.b16 %v5273, %v5272
        %v5283 = vpack.c.b16 %v5275, %v5274
        %5292 = vmatprep.subr.bf16.mxu0 0
        %5293 = vmatpush1.bf16.msra.mxu0 %v5283
        %5294 = vmatprep.subr.bf16.mxu0 0
        %5295 = vmatpush1.bf16.msra.mxu0 %v5282
        %5296 = vmatprep.subr.bf16.mxu0 0
        %5297 = vmatpush1.bf16.msra.mxu0 %v5281
        %5298 = vmatprep.subr.bf16.mxu0 0
        %5299 = vmatpush1.bf16.msra.mxu0 %v5280
        %5300 = vmatprep.subr.bf16.mxu0 0
        %5301 = vmatpush1.bf16.msra.mxu0 %v5279
        %5302 = vmatprep.subr.bf16.mxu0 0
        %5303 = vmatpush1.bf16.msra.mxu0 %v5278
        %5304 = vmatprep.subr.bf16.mxu0 0
        %5305 = vmatpush1.bf16.msra.mxu0 %v5277
        %5306 = vmatprep.subr.bf16.mxu0 0
        %5307 = vmatpush1.bf16.msra.mxu0 %v5276
        %5308 = vmatprep.subr.bf16.mxu0 0
        %5309 = vmatpush2.bf16.msra.mxu0 0
        %5310 = vmatprep.subr.bf16.mxu0 0
        %5311 = vmatpush2.bf16.msra.mxu0 0
        %5312 = vmatprep.subr.bf16.mxu0 0
        %5313 = vmatpush2.bf16.msra.mxu0 0
        %5314 = vmatprep.subr.bf16.mxu0 0
        %5315 = vmatpush2.bf16.msra.mxu0 0
        %5316 = vmatprep.subr.bf16.mxu0 0
        %5317 = vmatpush2.bf16.msra.mxu0 0
        %5318 = vmatprep.subr.bf16.mxu0 0
        %5319 = vmatpush2.bf16.msra.mxu0 0
        %5320 = vmatprep.subr.bf16.mxu0 0
        %5321 = vmatpush2.bf16.msra.mxu0 0
        %5322 = vmatprep.subr.bf16.mxu0 0
        %5323 = vmatpush2.bf16.msra.mxu0 0
        %5324 = vmatprep.mubr.bf16.mxu0 0
        %5325 = vmatmul.mubr.bf16.gmra.mxu0 %v5191
        %v5326 = vpop.f32.mrf.mxu0
        %v5327 = vadd.f32 0.0, %v5326
        %v5328 = vpop.f32.mrf.mxu0
        %v5329 = vpop.f32.mrf.mxu0
        %v5330 = vadd.f32 0.0, %v5329
        %v5331 = vpop.f32.mrf.mxu0
        %5332 = vmatprep.mubr.bf16.mxu0 0
        %5333 = vmatmul.mubr.bf16.gmra.mxu0 %v5193
        %v5334 = vpop.f32.mrf.mxu0
        %v5335 = vadd.f32 0.0, %v5334
        %v5336 = vpop.f32.mrf.mxu0
        %v5337 = vpop.f32.mrf.mxu0
        %v5338 = vadd.f32 0.0, %v5337
        %v5339 = vpop.f32.mrf.mxu0
        %5340 = vmatprep.mubr.bf16.mxu0 0
        %5341 = vmatmul.mubr.bf16.gmra.mxu0 %v5195
        %v5342 = vpop.f32.mrf.mxu0
        %v5343 = vadd.f32 0.0, %v5342
        %v5344 = vpop.f32.mrf.mxu0
        %v5345 = vpop.f32.mrf.mxu0
        %v5346 = vadd.f32 0.0, %v5345
        %v5347 = vpop.f32.mrf.mxu0
        %5348 = vmatprep.mubr.bf16.mxu0 0
        %5349 = vmatmul.mubr.bf16.gmra.mxu0 %v5197
        %v5350 = vpop.f32.mrf.mxu0
        %v5351 = vadd.f32 0.0, %v5350
        %v5352 = vpop.f32.mrf.mxu0
        %v5353 = vpop.f32.mrf.mxu0
        %v5354 = vadd.f32 0.0, %v5353
        %v5355 = vpop.f32.mrf.mxu0
        %5356 = vmatprep.mubr.bf16.mxu0 0
        %5357 = vmatmul.mubr.bf16.gmra.mxu0 %v5199
        %v5358 = vpop.f32.mrf.mxu0
        %v5359 = vadd.f32 0.0, %v5358
        %v5360 = vpop.f32.mrf.mxu0
        %v5361 = vpop.f32.mrf.mxu0
        %v5362 = vadd.f32 0.0, %v5361
        %v5363 = vpop.f32.mrf.mxu0
        %5364 = vmatprep.mubr.bf16.mxu0 0
        %5365 = vmatmul.mubr.bf16.gmra.mxu0 %v5201
        %v5366 = vpop.f32.mrf.mxu0
        %v5367 = vadd.f32 0.0, %v5366
        %v5368 = vpop.f32.mrf.mxu0
        %v5369 = vpop.f32.mrf.mxu0
        %v5370 = vadd.f32 0.0, %v5369
        %v5371 = vpop.f32.mrf.mxu0
        %5372 = vmatprep.mubr.bf16.mxu0 0
        %5373 = vmatmul.mubr.bf16.gmra.mxu0 %v5203
        %v5374 = vpop.f32.mrf.mxu0
        %v5375 = vadd.f32 0.0, %v5374
        %v5376 = vpop.f32.mrf.mxu0
        %v5377 = vpop.f32.mrf.mxu0
        %v5378 = vadd.f32 0.0, %v5377
        %v5379 = vpop.f32.mrf.mxu0
        %5380 = vmatprep.mubr.bf16.mxu0 0
        %5381 = vmatmul.mubr.bf16.gmra.mxu0 %v5205
        %v5382 = vpop.f32.mrf.mxu0
        %v5383 = vadd.f32 0.0, %v5382
        %v5384 = vpop.f32.mrf.mxu0
        %v5385 = vpop.f32.mrf.mxu0
        %v5386 = vadd.f32 0.0, %v5385
        %v5387 = vpop.f32.mrf.mxu0
        %5388 = vmatprep.mubr.bf16.mxu0 0
        %5389 = vmatmul.mubr.bf16.gmra.mxu0 %v5207
        %v5390 = vpop.f32.mrf.mxu0
        %v5391 = vadd.f32 0.0, %v5390
        %v5392 = vpop.f32.mrf.mxu0
        %v5393 = vpop.f32.mrf.mxu0
        %v5394 = vadd.f32 0.0, %v5393
        %v5395 = vpop.f32.mrf.mxu0
        %5396 = vmatprep.mubr.bf16.mxu0 0
        %5397 = vmatmul.mubr.bf16.gmra.mxu0 %v5209
        %v5398 = vpop.f32.mrf.mxu0
        %v5399 = vadd.f32 0.0, %v5398
        %v5400 = vpop.f32.mrf.mxu0
        %v5401 = vpop.f32.mrf.mxu0
        %v5402 = vadd.f32 0.0, %v5401
        %v5403 = vpop.f32.mrf.mxu0
        %5404 = vmatprep.mubr.bf16.mxu0 0
        %5405 = vmatmul.mubr.bf16.gmra.mxu0 %v5211
        %v5406 = vpop.f32.mrf.mxu0
        %v5407 = vadd.f32 0.0, %v5406
        %v5408 = vpop.f32.mrf.mxu0
        %v5409 = vpop.f32.mrf.mxu0
        %v5410 = vadd.f32 0.0, %v5409
        %v5411 = vpop.f32.mrf.mxu0
        %5412 = vmatprep.mubr.bf16.mxu0 0
        %5413 = vmatmul.mubr.bf16.gmra.mxu0 %v5213
        %v5414 = vpop.f32.mrf.mxu0
        %v5415 = vadd.f32 0.0, %v5414
        %v5416 = vpop.f32.mrf.mxu0
        %v5417 = vpop.f32.mrf.mxu0
        %v5418 = vadd.f32 0.0, %v5417
        %v5419 = vpop.f32.mrf.mxu0
        %5420 = vmatprep.mubr.bf16.mxu0 0
        %5421 = vmatmul.mubr.bf16.gmra.mxu0 %v5215
        %v5422 = vpop.f32.mrf.mxu0
        %v5423 = vadd.f32 0.0, %v5422
        %v5424 = vpop.f32.mrf.mxu0
        %v5425 = vpop.f32.mrf.mxu0
        %v5426 = vadd.f32 0.0, %v5425
        %v5427 = vpop.f32.mrf.mxu0
        %5428 = vmatprep.mubr.bf16.mxu0 0
        %5429 = vmatmul.mubr.bf16.gmra.mxu0 %v5217
        %v5430 = vpop.f32.mrf.mxu0
        %v5431 = vadd.f32 0.0, %v5430
        %v5432 = vpop.f32.mrf.mxu0
        %v5433 = vpop.f32.mrf.mxu0
        %v5434 = vadd.f32 0.0, %v5433
        %v5435 = vpop.f32.mrf.mxu0
        %5436 = vmatprep.mubr.bf16.mxu0 0
        %5437 = vmatmul.mubr.bf16.gmra.mxu0 %v5219
        %v5438 = vpop.f32.mrf.mxu0
        %v5439 = vadd.f32 0.0, %v5438
        %v5440 = vpop.f32.mrf.mxu0
        %v5441 = vpop.f32.mrf.mxu0
        %v5442 = vadd.f32 0.0, %v5441
        %v5443 = vpop.f32.mrf.mxu0
        %5444 = vmatprep.mubr.bf16.mxu0 0
        %5445 = vmatmul.mubr.bf16.gmra.mxu0 %v5221
        %v5446 = vpop.f32.mrf.mxu0
        %v5447 = vadd.f32 0.0, %v5446
        %v5448 = vpop.f32.mrf.mxu0
        %v5449 = vpop.f32.mrf.mxu0
        %v5450 = vadd.f32 0.0, %v5449
        %v5451 = vpop.f32.mrf.mxu0
        %5452 = vmatprep.mubr.bf16.mxu0 0
        %5453 = vmatmul.mubr.bf16.gmra.mxu0 %v5223
        %v5454 = vpop.f32.mrf.mxu0
        %v5455 = vadd.f32 0.0, %v5454
        %v5456 = vpop.f32.mrf.mxu0
        %v5457 = vpop.f32.mrf.mxu0
        %v5458 = vadd.f32 0.0, %v5457
        %v5459 = vpop.f32.mrf.mxu0
        %5460 = vmatprep.mubr.bf16.mxu0 0
        %5461 = vmatmul.mubr.bf16.gmra.mxu0 %v5225
        %v5462 = vpop.f32.mrf.mxu0
        %v5463 = vadd.f32 0.0, %v5462
        %v5464 = vpop.f32.mrf.mxu0
        %v5465 = vpop.f32.mrf.mxu0
        %v5466 = vadd.f32 0.0, %v5465
        %v5467 = vpop.f32.mrf.mxu0
        %5468 = vdwg.mxu0
        %v5469 = vadd.f32 %v5131, %v5327
        %v5470 = vadd.f32 %v5132, %v5330
        %v5471 = vadd.f32 %v5133, %v5335
        %v5472 = vadd.f32 %v5134, %v5338
        %v5473 = vadd.f32 %v5135, %v5343
        %v5474 = vadd.f32 %v5136, %v5346
        %v5475 = vadd.f32 %v5137, %v5351
        %v5476 = vadd.f32 %v5138, %v5354
        %v5477 = vadd.f32 %v5139, %v5359
        %v5478 = vadd.f32 %v5140, %v5362
        %v5479 = vadd.f32 %v5141, %v5367
        %v5480 = vadd.f32 %v5142, %v5370
        %v5481 = vadd.f32 %v5143, %v5375
        %v5482 = vadd.f32 %v5144, %v5378
        %v5483 = vadd.f32 %v5145, %v5383
        %v5484 = vadd.f32 %v5146, %v5386
        %v5485 = vadd.f32 %v5147, %v5391
        %v5486 = vadd.f32 %v5148, %v5394
        %v5487 = vadd.f32 %v5149, %v5399
        %v5488 = vadd.f32 %v5150, %v5402
        %v5489 = vadd.f32 %v5151, %v5407
        %v5490 = vadd.f32 %v5152, %v5410
        %v5491 = vadd.f32 %v5153, %v5415
        %v5492 = vadd.f32 %v5154, %v5418
        %v5493 = vadd.f32 %v5155, %v5423
        %v5494 = vadd.f32 %v5156, %v5426
        %v5495 = vadd.f32 %v5157, %v5431
        %v5496 = vadd.f32 %v5158, %v5434
        %v5497 = vadd.f32 %v5159, %v5439
        %v5498 = vadd.f32 %v5160, %v5442
        %v5499 = vadd.f32 %v5161, %v5447
        %v5500 = vadd.f32 %v5162, %v5450
        %v5501 = vadd.f32 %v5163, %v5455
        %v5502 = vadd.f32 %v5164, %v5458
        %v5503 = vadd.f32 %v5165, %v5463
        %v5504 = vadd.f32 %v5166, %v5466
        %v5505 = vld [vmem:[#allocation2 + $0xa8] sm:$0x3]
        %s5506 = scalar_lea.vmem [#allocation8], 512
        %v5507 = vld [vmem:[%s5506] sm:$0xf]
        %v5508 = vld [vmem:[%s5506 + $0x4] sm:$0xf]
        %v5509 = vld [vmem:[%s5506 + $0x8] sm:$0xf]
        %v5510 = vld [vmem:[%s5506 + $0xc] sm:$0xf]
        %v5511 = vld [vmem:[%s5506 + $0x10] sm:$0xf]
        %v5512 = vld [vmem:[%s5506 + $0x14] sm:$0xf]
        %v5513 = vld [vmem:[%s5506 + $0x18] sm:$0xf]
        %v5514 = vld [vmem:[%s5506 + $0x1c] sm:$0xf]
        %v5515 = vld [vmem:[%s5506 + $0x20] sm:$0xf]
        %v5516 = vld [vmem:[%s5506 + $0x24] sm:$0xf]
        %v5517 = vld [vmem:[%s5506 + $0x28] sm:$0xf]
        %v5518 = vld [vmem:[%s5506 + $0x2c] sm:$0xf]
        %v5519 = vld [vmem:[%s5506 + $0x30] sm:$0xf]
        %v5520 = vld [vmem:[%s5506 + $0x34] sm:$0xf]
        %v5521 = vld [vmem:[%s5506 + $0x38] sm:$0xf]
        %v5522 = vld [vmem:[%s5506 + $0x3c] sm:$0xf]
        %v5524 = vunpack.c.l.b16 %v5505
        %v5525 = vpack.c.b16 %v5524, %v5524
        %vm5526 = vsmask.f32 6400
        %v5528 = vshrl.u32 %v5187, 16
        %v5530 = vrot.slane %v5528, 1
        %v5531 = vshll.u32 %v5187, 16
        %v5533 = vrot.slane %v5531, 2
        %v5534 = vor.u32 %v5530, %v5533
        %v5535 = vrot.slane %v4752, 1
        %v5536 = vrot.slane %v4748, 2
        %v5537 = vor.u32 %v5535, %v5536
        %v5538 = vsel %vm5526, %v5534, %v5537
        %v5539 = vrot.slane %v4760, 1
        %v5540 = vrot.slane %v4756, 2
        %v5541 = vor.u32 %v5539, %v5540
        %v5542 = vsel %vm5526, %v5537, %v5541
        %v5543 = vrot.slane %v4768, 1
        %v5544 = vrot.slane %v4764, 2
        %v5545 = vor.u32 %v5543, %v5544
        %v5546 = vsel %vm5526, %v5541, %v5545
        %v5547 = vrot.slane %v4776, 1
        %v5548 = vrot.slane %v4772, 2
        %v5549 = vor.u32 %v5547, %v5548
        %v5550 = vsel %vm5526, %v5545, %v5549
        %v5551 = vrot.slane %v4784, 1
        %v5552 = vrot.slane %v4780, 2
        %v5553 = vor.u32 %v5551, %v5552
        %v5554 = vsel %vm5526, %v5549, %v5553
        %v5555 = vrot.slane %v4792, 1
        %v5556 = vrot.slane %v4788, 2
        %v5557 = vor.u32 %v5555, %v5556
        %v5558 = vsel %vm5526, %v5553, %v5557
        %v5559 = vrot.slane %v4800, 1
        %v5560 = vrot.slane %v4796, 2
        %v5561 = vor.u32 %v5559, %v5560
        %v5562 = vsel %vm5526, %v5557, %v5561
        %v5563 = vrot.slane %v4808, 1
        %v5564 = vrot.slane %v4804, 2
        %v5565 = vor.u32 %v5563, %v5564
        %v5566 = vsel %vm5526, %v5561, %v5565
        %v5567 = vrot.slane %v4816, 1
        %v5568 = vrot.slane %v4812, 2
        %v5569 = vor.u32 %v5567, %v5568
        %v5570 = vsel %vm5526, %v5565, %v5569
        %v5571 = vrot.slane %v4824, 1
        %v5572 = vrot.slane %v4820, 2
        %v5573 = vor.u32 %v5571, %v5572
        %v5574 = vsel %vm5526, %v5569, %v5573
        %v5575 = vrot.slane %v4832, 1
        %v5576 = vrot.slane %v4828, 2
        %v5577 = vor.u32 %v5575, %v5576
        %v5578 = vsel %vm5526, %v5573, %v5577
        %v5579 = vrot.slane %v4840, 1
        %v5580 = vrot.slane %v4836, 2
        %v5581 = vor.u32 %v5579, %v5580
        %v5582 = vsel %vm5526, %v5577, %v5581
        %v5583 = vrot.slane %v4848, 1
        %v5584 = vrot.slane %v4844, 2
        %v5585 = vor.u32 %v5583, %v5584
        %v5586 = vsel %vm5526, %v5581, %v5585
        %v5587 = vrot.slane %v4856, 1
        %v5588 = vrot.slane %v4852, 2
        %v5589 = vor.u32 %v5587, %v5588
        %v5590 = vsel %vm5526, %v5585, %v5589
        %v5591 = vrot.slane %v4864, 1
        %v5592 = vrot.slane %v4860, 2
        %v5593 = vor.u32 %v5591, %v5592
        %v5594 = vsel %vm5526, %v5589, %v5593
        %v5595 = vrot.slane %v4872, 1
        %v5596 = vrot.slane %v4868, 2
        %v5597 = vor.u32 %v5595, %v5596
        %v5598 = vsel %vm5526, %v5593, %v5597
        %v5599 = vrot.slane %v4880, 1
        %v5600 = vrot.slane %v4876, 2
        %v5601 = vor.u32 %v5599, %v5600
        %v5602 = vsel %vm5526, %v5597, %v5601
        %v5604 = vshrl.u32 %v5525, 16
        %v5606 = vrot.slane %v5604, 1
        %v5607 = vshll.u32 %v5525, 16
        %v5609 = vrot.slane %v5607, 2
        %v5610 = vor.u32 %v5606, %v5609
        %v5611 = vsel %vm5526, %v5601, %v5610
        %v5646 = vunpack.c.l.b16 %v5507
        %v5647 = vunpack.c.l.b16 %v5508
        %v5648 = vunpack.c.l.b16 %v5509
        %v5649 = vunpack.c.l.b16 %v5510
        %v5650 = vunpack.c.l.b16 %v5511
        %v5651 = vunpack.c.l.b16 %v5512
        %v5652 = vunpack.c.l.b16 %v5513
        %v5653 = vunpack.c.l.b16 %v5514
        %v5654 = vunpack.c.l.b16 %v5515
        %v5655 = vunpack.c.l.b16 %v5516
        %v5656 = vunpack.c.l.b16 %v5517
        %v5657 = vunpack.c.l.b16 %v5518
        %v5658 = vunpack.c.l.b16 %v5519
        %v5659 = vunpack.c.l.b16 %v5520
        %v5660 = vunpack.c.l.b16 %v5521
        %v5661 = vunpack.c.l.b16 %v5522
        %v5662 = vpack.c.b16 %v5647, %v5646
        %v5663 = vpack.c.b16 %v5649, %v5648
        %v5664 = vpack.c.b16 %v5651, %v5650
        %v5665 = vpack.c.b16 %v5653, %v5652
        %v5666 = vpack.c.b16 %v5655, %v5654
        %v5667 = vpack.c.b16 %v5657, %v5656
        %v5668 = vpack.c.b16 %v5659, %v5658
        %v5669 = vpack.c.b16 %v5661, %v5660
        %5678 = vmatprep.subr.bf16.mxu0 0
        %5679 = vmatpush1.bf16.msra.mxu0 %v5669
        %5680 = vmatprep.subr.bf16.mxu0 0
        %5681 = vmatpush1.bf16.msra.mxu0 %v5668
        %5682 = vmatprep.subr.bf16.mxu0 0
        %5683 = vmatpush1.bf16.msra.mxu0 %v5667
        %5684 = vmatprep.subr.bf16.mxu0 0
        %5685 = vmatpush1.bf16.msra.mxu0 %v5666
        %5686 = vmatprep.subr.bf16.mxu0 0
        %5687 = vmatpush1.bf16.msra.mxu0 %v5665
        %5688 = vmatprep.subr.bf16.mxu0 0
        %5689 = vmatpush1.bf16.msra.mxu0 %v5664
        %5690 = vmatprep.subr.bf16.mxu0 0
        %5691 = vmatpush1.bf16.msra.mxu0 %v5663
        %5692 = vmatprep.subr.bf16.mxu0 0
        %5693 = vmatpush1.bf16.msra.mxu0 %v5662
        %5694 = vmatprep.subr.bf16.mxu0 0
        %5695 = vmatpush2.bf16.msra.mxu0 0
        %5696 = vmatprep.subr.bf16.mxu0 0
        %5697 = vmatpush2.bf16.msra.mxu0 0
        %5698 = vmatprep.subr.bf16.mxu0 0
        %5699 = vmatpush2.bf16.msra.mxu0 0
        %5700 = vmatprep.subr.bf16.mxu0 0
        %5701 = vmatpush2.bf16.msra.mxu0 0
        %5702 = vmatprep.subr.bf16.mxu0 0
        %5703 = vmatpush2.bf16.msra.mxu0 0
        %5704 = vmatprep.subr.bf16.mxu0 0
        %5705 = vmatpush2.bf16.msra.mxu0 0
        %5706 = vmatprep.subr.bf16.mxu0 0
        %5707 = vmatpush2.bf16.msra.mxu0 0
        %5708 = vmatprep.subr.bf16.mxu0 0
        %5709 = vmatpush2.bf16.msra.mxu0 0
        %5710 = vmatprep.mubr.bf16.mxu0 0
        %5711 = vmatmul.mubr.bf16.gmra.mxu0 %v5538
        %v5712 = vpop.f32.mrf.mxu0
        %v5713 = vadd.f32 0.0, %v5712
        %v5714 = vpop.f32.mrf.mxu0
        %v5715 = vpop.f32.mrf.mxu0
        %v5716 = vadd.f32 0.0, %v5715
        %v5717 = vpop.f32.mrf.mxu0
        %5718 = vmatprep.mubr.bf16.mxu0 0
        %5719 = vmatmul.mubr.bf16.gmra.mxu0 %v5542
        %v5720 = vpop.f32.mrf.mxu0
        %v5721 = vadd.f32 0.0, %v5720
        %v5722 = vpop.f32.mrf.mxu0
        %v5723 = vpop.f32.mrf.mxu0
        %v5724 = vadd.f32 0.0, %v5723
        %v5725 = vpop.f32.mrf.mxu0
        %5726 = vmatprep.mubr.bf16.mxu0 0
        %5727 = vmatmul.mubr.bf16.gmra.mxu0 %v5546
        %v5728 = vpop.f32.mrf.mxu0
        %v5729 = vadd.f32 0.0, %v5728
        %v5730 = vpop.f32.mrf.mxu0
        %v5731 = vpop.f32.mrf.mxu0
        %v5732 = vadd.f32 0.0, %v5731
        %v5733 = vpop.f32.mrf.mxu0
        %5734 = vmatprep.mubr.bf16.mxu0 0
        %5735 = vmatmul.mubr.bf16.gmra.mxu0 %v5550
        %v5736 = vpop.f32.mrf.mxu0
        %v5737 = vadd.f32 0.0, %v5736
        %v5738 = vpop.f32.mrf.mxu0
        %v5739 = vpop.f32.mrf.mxu0
        %v5740 = vadd.f32 0.0, %v5739
        %v5741 = vpop.f32.mrf.mxu0
        %5742 = vmatprep.mubr.bf16.mxu0 0
        %5743 = vmatmul.mubr.bf16.gmra.mxu0 %v5554
        %v5744 = vpop.f32.mrf.mxu0
        %v5745 = vadd.f32 0.0, %v5744
        %v5746 = vpop.f32.mrf.mxu0
        %v5747 = vpop.f32.mrf.mxu0
        %v5748 = vadd.f32 0.0, %v5747
        %v5749 = vpop.f32.mrf.mxu0
        %5750 = vmatprep.mubr.bf16.mxu0 0
        %5751 = vmatmul.mubr.bf16.gmra.mxu0 %v5558
        %v5752 = vpop.f32.mrf.mxu0
        %v5753 = vadd.f32 0.0, %v5752
        %v5754 = vpop.f32.mrf.mxu0
        %v5755 = vpop.f32.mrf.mxu0
        %v5756 = vadd.f32 0.0, %v5755
        %v5757 = vpop.f32.mrf.mxu0
        %5758 = vmatprep.mubr.bf16.mxu0 0
        %5759 = vmatmul.mubr.bf16.gmra.mxu0 %v5562
        %v5760 = vpop.f32.mrf.mxu0
        %v5761 = vadd.f32 0.0, %v5760
        %v5762 = vpop.f32.mrf.mxu0
        %v5763 = vpop.f32.mrf.mxu0
        %v5764 = vadd.f32 0.0, %v5763
        %v5765 = vpop.f32.mrf.mxu0
        %5766 = vmatprep.mubr.bf16.mxu0 0
        %5767 = vmatmul.mubr.bf16.gmra.mxu0 %v5566
        %v5768 = vpop.f32.mrf.mxu0
        %v5769 = vadd.f32 0.0, %v5768
        %v5770 = vpop.f32.mrf.mxu0
        %v5771 = vpop.f32.mrf.mxu0
        %v5772 = vadd.f32 0.0, %v5771
        %v5773 = vpop.f32.mrf.mxu0
        %5774 = vmatprep.mubr.bf16.mxu0 0
        %5775 = vmatmul.mubr.bf16.gmra.mxu0 %v5570
        %v5776 = vpop.f32.mrf.mxu0
        %v5777 = vadd.f32 0.0, %v5776
        %v5778 = vpop.f32.mrf.mxu0
        %v5779 = vpop.f32.mrf.mxu0
        %v5780 = vadd.f32 0.0, %v5779
        %v5781 = vpop.f32.mrf.mxu0
        %5782 = vmatprep.mubr.bf16.mxu0 0
        %5783 = vmatmul.mubr.bf16.gmra.mxu0 %v5574
        %v5784 = vpop.f32.mrf.mxu0
        %v5785 = vadd.f32 0.0, %v5784
        %v5786 = vpop.f32.mrf.mxu0
        %v5787 = vpop.f32.mrf.mxu0
        %v5788 = vadd.f32 0.0, %v5787
        %v5789 = vpop.f32.mrf.mxu0
        %5790 = vmatprep.mubr.bf16.mxu0 0
        %5791 = vmatmul.mubr.bf16.gmra.mxu0 %v5578
        %v5792 = vpop.f32.mrf.mxu0
        %v5793 = vadd.f32 0.0, %v5792
        %v5794 = vpop.f32.mrf.mxu0
        %v5795 = vpop.f32.mrf.mxu0
        %v5796 = vadd.f32 0.0, %v5795
        %v5797 = vpop.f32.mrf.mxu0
        %5798 = vmatprep.mubr.bf16.mxu0 0
        %5799 = vmatmul.mubr.bf16.gmra.mxu0 %v5582
        %v5800 = vpop.f32.mrf.mxu0
        %v5801 = vadd.f32 0.0, %v5800
        %v5802 = vpop.f32.mrf.mxu0
        %v5803 = vpop.f32.mrf.mxu0
        %v5804 = vadd.f32 0.0, %v5803
        %v5805 = vpop.f32.mrf.mxu0
        %5806 = vmatprep.mubr.bf16.mxu0 0
        %5807 = vmatmul.mubr.bf16.gmra.mxu0 %v5586
        %v5808 = vpop.f32.mrf.mxu0
        %v5809 = vadd.f32 0.0, %v5808
        %v5810 = vpop.f32.mrf.mxu0
        %v5811 = vpop.f32.mrf.mxu0
        %v5812 = vadd.f32 0.0, %v5811
        %v5813 = vpop.f32.mrf.mxu0
        %5814 = vmatprep.mubr.bf16.mxu0 0
        %5815 = vmatmul.mubr.bf16.gmra.mxu0 %v5590
        %v5816 = vpop.f32.mrf.mxu0
        %v5817 = vadd.f32 0.0, %v5816
        %v5818 = vpop.f32.mrf.mxu0
        %v5819 = vpop.f32.mrf.mxu0
        %v5820 = vadd.f32 0.0, %v5819
        %v5821 = vpop.f32.mrf.mxu0
        %5822 = vmatprep.mubr.bf16.mxu0 0
        %5823 = vmatmul.mubr.bf16.gmra.mxu0 %v5594
        %v5824 = vpop.f32.mrf.mxu0
        %v5825 = vadd.f32 0.0, %v5824
        %v5826 = vpop.f32.mrf.mxu0
        %v5827 = vpop.f32.mrf.mxu0
        %v5828 = vadd.f32 0.0, %v5827
        %v5829 = vpop.f32.mrf.mxu0
        %5830 = vmatprep.mubr.bf16.mxu0 0
        %5831 = vmatmul.mubr.bf16.gmra.mxu0 %v5598
        %v5832 = vpop.f32.mrf.mxu0
        %v5833 = vadd.f32 0.0, %v5832
        %v5834 = vpop.f32.mrf.mxu0
        %v5835 = vpop.f32.mrf.mxu0
        %v5836 = vadd.f32 0.0, %v5835
        %v5837 = vpop.f32.mrf.mxu0
        %5838 = vmatprep.mubr.bf16.mxu0 0
        %5839 = vmatmul.mubr.bf16.gmra.mxu0 %v5602
        %v5840 = vpop.f32.mrf.mxu0
        %v5841 = vadd.f32 0.0, %v5840
        %v5842 = vpop.f32.mrf.mxu0
        %v5843 = vpop.f32.mrf.mxu0
        %v5844 = vadd.f32 0.0, %v5843
        %v5845 = vpop.f32.mrf.mxu0
        %5846 = vmatprep.mubr.bf16.mxu0 0
        %5847 = vmatmul.mubr.bf16.gmra.mxu0 %v5611
        %v5848 = vpop.f32.mrf.mxu0
        %v5849 = vadd.f32 0.0, %v5848
        %v5850 = vpop.f32.mrf.mxu0
        %v5851 = vpop.f32.mrf.mxu0
        %v5852 = vadd.f32 0.0, %v5851
        %v5853 = vpop.f32.mrf.mxu0
        %5854 = vdwg.mxu0
        %v5855 = vadd.f32 %v5469, %v5713
        %v5856 = vadd.f32 %v5470, %v5716
        %v5857 = vadd.f32 %v5471, %v5721
        %v5858 = vadd.f32 %v5472, %v5724
        %v5859 = vadd.f32 %v5473, %v5729
        %v5860 = vadd.f32 %v5474, %v5732
        %v5861 = vadd.f32 %v5475, %v5737
        %v5862 = vadd.f32 %v5476, %v5740
        %v5863 = vadd.f32 %v5477, %v5745
        %v5864 = vadd.f32 %v5478, %v5748
        %v5865 = vadd.f32 %v5479, %v5753
        %v5866 = vadd.f32 %v5480, %v5756
        %v5867 = vadd.f32 %v5481, %v5761
        %v5868 = vadd.f32 %v5482, %v5764
        %v5869 = vadd.f32 %v5483, %v5769
        %v5870 = vadd.f32 %v5484, %v5772
        %v5871 = vadd.f32 %v5485, %v5777
        %v5872 = vadd.f32 %v5486, %v5780
        %v5873 = vadd.f32 %v5487, %v5785
        %v5874 = vadd.f32 %v5488, %v5788
        %v5875 = vadd.f32 %v5489, %v5793
        %v5876 = vadd.f32 %v5490, %v5796
        %v5877 = vadd.f32 %v5491, %v5801
        %v5878 = vadd.f32 %v5492, %v5804
        %v5879 = vadd.f32 %v5493, %v5809
        %v5880 = vadd.f32 %v5494, %v5812
        %v5881 = vadd.f32 %v5495, %v5817
        %v5882 = vadd.f32 %v5496, %v5820
        %v5883 = vadd.f32 %v5497, %v5825
        %v5884 = vadd.f32 %v5498, %v5828
        %v5885 = vadd.f32 %v5499, %v5833
        %v5886 = vadd.f32 %v5500, %v5836
        %v5887 = vadd.f32 %v5501, %v5841
        %v5888 = vadd.f32 %v5502, %v5844
        %v5889 = vadd.f32 %v5503, %v5849
        %v5890 = vadd.f32 %v5504, %v5852
        %v5891 = vld [vmem:[%s4] sm:$0x1]
        %v5893 = vlaneseq
        %v5894 = vshrl.u32 %v5893, 7
        %v5895 = vsub.s32 0, %v5894
        %v5896 = vrot.slane %v5891, %v5895
        %v5898 = vadd.f32 %v5855, %v5896
        %v5899 = vadd.f32 %v5856, %v5896
        %v5900 = vadd.f32 %v5857, %v5896
        %v5901 = vadd.f32 %v5858, %v5896
        %v5902 = vadd.f32 %v5859, %v5896
        %v5903 = vadd.f32 %v5860, %v5896
        %v5904 = vadd.f32 %v5861, %v5896
        %v5905 = vadd.f32 %v5862, %v5896
        %v5906 = vadd.f32 %v5863, %v5896
        %v5907 = vadd.f32 %v5864, %v5896
        %v5908 = vadd.f32 %v5865, %v5896
        %v5909 = vadd.f32 %v5866, %v5896
        %v5910 = vadd.f32 %v5867, %v5896
        %v5911 = vadd.f32 %v5868, %v5896
        %v5912 = vadd.f32 %v5869, %v5896
        %v5913 = vadd.f32 %v5870, %v5896
        %v5914 = vadd.f32 %v5871, %v5896
        %v5915 = vadd.f32 %v5872, %v5896
        %v5916 = vadd.f32 %v5873, %v5896
        %v5917 = vadd.f32 %v5874, %v5896
        %v5918 = vadd.f32 %v5875, %v5896
        %v5919 = vadd.f32 %v5876, %v5896
        %v5920 = vadd.f32 %v5877, %v5896
        %v5921 = vadd.f32 %v5878, %v5896
        %v5922 = vadd.f32 %v5879, %v5896
        %v5923 = vadd.f32 %v5880, %v5896
        %v5924 = vadd.f32 %v5881, %v5896
        %v5925 = vadd.f32 %v5882, %v5896
        %v5926 = vadd.f32 %v5883, %v5896
        %v5927 = vadd.f32 %v5884, %v5896
        %v5928 = vadd.f32 %v5885, %v5896
        %v5929 = vadd.f32 %v5886, %v5896
        %v5930 = vadd.f32 %v5887, %v5896
        %v5931 = vadd.f32 %v5888, %v5896
        %v5932 = vadd.f32 %v5889, %v5896
        %v5933 = vadd.f32 %v5890, %v5896
        %v5934 = vmax.f32 %v5898, 0.0
        %v5935 = vmax.f32 %v5899, 0.0
        %v5936 = vmax.f32 %v5900, 0.0
        %v5937 = vmax.f32 %v5901, 0.0
        %v5938 = vmax.f32 %v5902, 0.0
        %v5939 = vmax.f32 %v5903, 0.0
        %v5940 = vmax.f32 %v5904, 0.0
        %v5941 = vmax.f32 %v5905, 0.0
        %v5942 = vmax.f32 %v5906, 0.0
        %v5943 = vmax.f32 %v5907, 0.0
        %v5944 = vmax.f32 %v5908, 0.0
        %v5945 = vmax.f32 %v5909, 0.0
        %v5946 = vmax.f32 %v5910, 0.0
        %v5947 = vmax.f32 %v5911, 0.0
        %v5948 = vmax.f32 %v5912, 0.0
        %v5949 = vmax.f32 %v5913, 0.0
        %v5950 = vmax.f32 %v5914, 0.0
        %v5951 = vmax.f32 %v5915, 0.0
        %v5952 = vmax.f32 %v5916, 0.0
        %v5953 = vmax.f32 %v5917, 0.0
        %v5954 = vmax.f32 %v5918, 0.0
        %v5955 = vmax.f32 %v5919, 0.0
        %v5956 = vmax.f32 %v5920, 0.0
        %v5957 = vmax.f32 %v5921, 0.0
        %v5958 = vmax.f32 %v5922, 0.0
        %v5959 = vmax.f32 %v5923, 0.0
        %v5960 = vmax.f32 %v5924, 0.0
        %v5961 = vmax.f32 %v5925, 0.0
        %v5962 = vmax.f32 %v5926, 0.0
        %v5963 = vmax.f32 %v5927, 0.0
        %v5964 = vmax.f32 %v5928, 0.0
        %v5965 = vmax.f32 %v5929, 0.0
        %v5966 = vmax.f32 %v5930, 0.0
        %v5967 = vmax.f32 %v5931, 0.0
        %v5968 = vmax.f32 %v5932, 0.0
        %v5969 = vmax.f32 %v5933, 0.0
        %v5970 = vpack.c.bf16 %v5935, %v5934
        %v5971 = vpack.c.bf16 %v5937, %v5936
        %v5972 = vpack.c.bf16 %v5939, %v5938
        %v5973 = vpack.c.bf16 %v5941, %v5940
        %v5974 = vpack.c.bf16 %v5943, %v5942
        %v5975 = vpack.c.bf16 %v5945, %v5944
        %v5976 = vpack.c.bf16 %v5947, %v5946
        %v5977 = vpack.c.bf16 %v5949, %v5948
        %v5978 = vpack.c.bf16 %v5951, %v5950
        %v5979 = vpack.c.bf16 %v5953, %v5952
        %v5980 = vpack.c.bf16 %v5955, %v5954
        %v5981 = vpack.c.bf16 %v5957, %v5956
        %v5982 = vpack.c.bf16 %v5959, %v5958
        %v5983 = vpack.c.bf16 %v5961, %v5960
        %v5984 = vpack.c.bf16 %v5963, %v5962
        %v5985 = vpack.c.bf16 %v5965, %v5964
        %v5986 = vpack.c.bf16 %v5967, %v5966
        %v5987 = vpack.c.bf16 %v5969, %v5968
        %v5988 = vld [vmem:[#allocation9] sm:$0xf]
        %v5989 = vld [vmem:[#allocation9 + $0x4] sm:$0xf]
        %v5990 = vld [vmem:[#allocation9 + $0x8] sm:$0xf]
        %v5991 = vld [vmem:[#allocation9 + $0xc] sm:$0xf]
        %v5992 = vld [vmem:[#allocation9 + $0x10] sm:$0xf]
        %v5993 = vld [vmem:[#allocation9 + $0x14] sm:$0xf]
        %v5994 = vld [vmem:[#allocation9 + $0x18] sm:$0xf]
        %v5995 = vld [vmem:[#allocation9 + $0x1c] sm:$0xf]
        %v5996 = vld [vmem:[#allocation9 + $0x20] sm:$0xf]
        %v5997 = vld [vmem:[#allocation9 + $0x24] sm:$0xf]
        %v5998 = vld [vmem:[#allocation9 + $0x28] sm:$0xf]
        %v5999 = vld [vmem:[#allocation9 + $0x2c] sm:$0xf]
        %v6000 = vld [vmem:[#allocation9 + $0x30] sm:$0xf]
        %v6001 = vld [vmem:[#allocation9 + $0x34] sm:$0xf]
        %v6002 = vld [vmem:[#allocation9 + $0x38] sm:$0xf]
        %v6003 = vld [vmem:[#allocation9 + $0x3c] sm:$0xf]
        %v6004 = vld [vmem:[%s6] sm:$0x1]
        %v6006 = vlaneseq
        %v6007 = vshrl.u32 %v6006, 7
        %v6008 = vsub.s32 0, %v6007
        %v6009 = vrot.slane %v6004, %v6008
        %v6027 = vunpack.c.l.b16 %v5988
        %v6028 = vunpack.c.l.b16 %v5989
        %v6029 = vunpack.c.l.b16 %v5990
        %v6030 = vunpack.c.l.b16 %v5991
        %v6031 = vunpack.c.l.b16 %v5992
        %v6032 = vunpack.c.l.b16 %v5993
        %v6033 = vunpack.c.l.b16 %v5994
        %v6034 = vunpack.c.l.b16 %v5995
        %v6035 = vunpack.c.l.b16 %v5996
        %v6036 = vunpack.c.l.b16 %v5997
        %v6037 = vunpack.c.l.b16 %v5998
        %v6038 = vunpack.c.l.b16 %v5999
        %v6039 = vunpack.c.l.b16 %v6000
        %v6040 = vunpack.c.l.b16 %v6001
        %v6041 = vunpack.c.l.b16 %v6002
        %v6042 = vunpack.c.l.b16 %v6003
        %v6043 = vpack.c.b16 %v6028, %v6027
        %v6044 = vpack.c.b16 %v6030, %v6029
        %v6045 = vpack.c.b16 %v6032, %v6031
        %v6046 = vpack.c.b16 %v6034, %v6033
        %v6047 = vpack.c.b16 %v6036, %v6035
        %v6048 = vpack.c.b16 %v6038, %v6037
        %v6049 = vpack.c.b16 %v6040, %v6039
        %v6050 = vpack.c.b16 %v6042, %v6041
        %6059 = vmatprep.subr.bf16.mxu0 0
        %6060 = vmatpush1.bf16.msra.mxu0 %v6050
        %6061 = vmatprep.subr.bf16.mxu0 0
        %6062 = vmatpush1.bf16.msra.mxu0 %v6049
        %6063 = vmatprep.subr.bf16.mxu0 0
        %6064 = vmatpush1.bf16.msra.mxu0 %v6048
        %6065 = vmatprep.subr.bf16.mxu0 0
        %6066 = vmatpush1.bf16.msra.mxu0 %v6047
        %6067 = vmatprep.subr.bf16.mxu0 0
        %6068 = vmatpush1.bf16.msra.mxu0 %v6046
        %6069 = vmatprep.subr.bf16.mxu0 0
        %6070 = vmatpush1.bf16.msra.mxu0 %v6045
        %6071 = vmatprep.subr.bf16.mxu0 0
        %6072 = vmatpush1.bf16.msra.mxu0 %v6044
        %6073 = vmatprep.subr.bf16.mxu0 0
        %6074 = vmatpush1.bf16.msra.mxu0 %v6043
        %6075 = vmatprep.subr.bf16.mxu0 0
        %6076 = vmatpush2.bf16.msra.mxu0 0
        %6077 = vmatprep.subr.bf16.mxu0 0
        %6078 = vmatpush2.bf16.msra.mxu0 0
        %6079 = vmatprep.subr.bf16.mxu0 0
        %6080 = vmatpush2.bf16.msra.mxu0 0
        %6081 = vmatprep.subr.bf16.mxu0 0
        %6082 = vmatpush2.bf16.msra.mxu0 0
        %6083 = vmatprep.subr.bf16.mxu0 0
        %6084 = vmatpush2.bf16.msra.mxu0 0
        %6085 = vmatprep.subr.bf16.mxu0 0
        %6086 = vmatpush2.bf16.msra.mxu0 0
        %6087 = vmatprep.subr.bf16.mxu0 0
        %6088 = vmatpush2.bf16.msra.mxu0 0
        %6089 = vmatprep.subr.bf16.mxu0 0
        %6090 = vmatpush2.bf16.msra.mxu0 0
        %6091 = vmatprep.mubr.bf16.mxu0 0
        %6092 = vmatmul.mubr.bf16.gmra.mxu0 %v5970
        %v6093 = vpop.f32.mrf.mxu0
        %v6094 = vadd.f32 %v6009, %v6093
        %v6095 = vpop.f32.mrf.mxu0
        %v6096 = vpop.f32.mrf.mxu0
        %v6097 = vadd.f32 %v6009, %v6096
        %v6098 = vpop.f32.mrf.mxu0
        %6099 = vmatprep.mubr.bf16.mxu0 0
        %6100 = vmatmul.mubr.bf16.gmra.mxu0 %v5971
        %v6101 = vpop.f32.mrf.mxu0
        %v6102 = vadd.f32 %v6009, %v6101
        %v6103 = vpop.f32.mrf.mxu0
        %v6104 = vpop.f32.mrf.mxu0
        %v6105 = vadd.f32 %v6009, %v6104
        %v6106 = vpop.f32.mrf.mxu0
        %6107 = vmatprep.mubr.bf16.mxu0 0
        %6108 = vmatmul.mubr.bf16.gmra.mxu0 %v5972
        %v6109 = vpop.f32.mrf.mxu0
        %v6110 = vadd.f32 %v6009, %v6109
        %v6111 = vpop.f32.mrf.mxu0
        %v6112 = vpop.f32.mrf.mxu0
        %v6113 = vadd.f32 %v6009, %v6112
        %v6114 = vpop.f32.mrf.mxu0
        %6115 = vmatprep.mubr.bf16.mxu0 0
        %6116 = vmatmul.mubr.bf16.gmra.mxu0 %v5973
        %v6117 = vpop.f32.mrf.mxu0
        %v6118 = vadd.f32 %v6009, %v6117
        %v6119 = vpop.f32.mrf.mxu0
        %v6120 = vpop.f32.mrf.mxu0
        %v6121 = vadd.f32 %v6009, %v6120
        %v6122 = vpop.f32.mrf.mxu0
        %6123 = vmatprep.mubr.bf16.mxu0 0
        %6124 = vmatmul.mubr.bf16.gmra.mxu0 %v5974
        %v6125 = vpop.f32.mrf.mxu0
        %v6126 = vadd.f32 %v6009, %v6125
        %v6127 = vpop.f32.mrf.mxu0
        %v6128 = vpop.f32.mrf.mxu0
        %v6129 = vadd.f32 %v6009, %v6128
        %v6130 = vpop.f32.mrf.mxu0
        %6131 = vmatprep.mubr.bf16.mxu0 0
        %6132 = vmatmul.mubr.bf16.gmra.mxu0 %v5975
        %v6133 = vpop.f32.mrf.mxu0
        %v6134 = vadd.f32 %v6009, %v6133
        %v6135 = vpop.f32.mrf.mxu0
        %v6136 = vpop.f32.mrf.mxu0
        %v6137 = vadd.f32 %v6009, %v6136
        %v6138 = vpop.f32.mrf.mxu0
        %6139 = vmatprep.mubr.bf16.mxu0 0
        %6140 = vmatmul.mubr.bf16.gmra.mxu0 %v5976
        %v6141 = vpop.f32.mrf.mxu0
        %v6142 = vadd.f32 %v6009, %v6141
        %v6143 = vpop.f32.mrf.mxu0
        %v6144 = vpop.f32.mrf.mxu0
        %v6145 = vadd.f32 %v6009, %v6144
        %v6146 = vpop.f32.mrf.mxu0
        %6147 = vmatprep.mubr.bf16.mxu0 0
        %6148 = vmatmul.mubr.bf16.gmra.mxu0 %v5977
        %v6149 = vpop.f32.mrf.mxu0
        %v6150 = vadd.f32 %v6009, %v6149
        %v6151 = vpop.f32.mrf.mxu0
        %v6152 = vpop.f32.mrf.mxu0
        %v6153 = vadd.f32 %v6009, %v6152
        %v6154 = vpop.f32.mrf.mxu0
        %6155 = vmatprep.mubr.bf16.mxu0 0
        %6156 = vmatmul.mubr.bf16.gmra.mxu0 %v5978
        %v6157 = vpop.f32.mrf.mxu0
        %v6158 = vadd.f32 %v6009, %v6157
        %v6159 = vpop.f32.mrf.mxu0
        %v6160 = vpop.f32.mrf.mxu0
        %v6161 = vadd.f32 %v6009, %v6160
        %v6162 = vpop.f32.mrf.mxu0
        %6163 = vmatprep.mubr.bf16.mxu0 0
        %6164 = vmatmul.mubr.bf16.gmra.mxu0 %v5979
        %v6165 = vpop.f32.mrf.mxu0
        %v6166 = vadd.f32 %v6009, %v6165
        %v6167 = vpop.f32.mrf.mxu0
        %v6168 = vpop.f32.mrf.mxu0
        %v6169 = vadd.f32 %v6009, %v6168
        %v6170 = vpop.f32.mrf.mxu0
        %6171 = vmatprep.mubr.bf16.mxu0 0
        %6172 = vmatmul.mubr.bf16.gmra.mxu0 %v5980
        %v6173 = vpop.f32.mrf.mxu0
        %v6174 = vadd.f32 %v6009, %v6173
        %v6175 = vpop.f32.mrf.mxu0
        %v6176 = vpop.f32.mrf.mxu0
        %v6177 = vadd.f32 %v6009, %v6176
        %v6178 = vpop.f32.mrf.mxu0
        %6179 = vmatprep.mubr.bf16.mxu0 0
        %6180 = vmatmul.mubr.bf16.gmra.mxu0 %v5981
        %v6181 = vpop.f32.mrf.mxu0
        %v6182 = vadd.f32 %v6009, %v6181
        %v6183 = vpop.f32.mrf.mxu0
        %v6184 = vpop.f32.mrf.mxu0
        %v6185 = vadd.f32 %v6009, %v6184
        %v6186 = vpop.f32.mrf.mxu0
        %6187 = vmatprep.mubr.bf16.mxu0 0
        %6188 = vmatmul.mubr.bf16.gmra.mxu0 %v5982
        %v6189 = vpop.f32.mrf.mxu0
        %v6190 = vadd.f32 %v6009, %v6189
        %v6191 = vpop.f32.mrf.mxu0
        %v6192 = vpop.f32.mrf.mxu0
        %v6193 = vadd.f32 %v6009, %v6192
        %v6194 = vpop.f32.mrf.mxu0
        %6195 = vmatprep.mubr.bf16.mxu0 0
        %6196 = vmatmul.mubr.bf16.gmra.mxu0 %v5983
        %v6197 = vpop.f32.mrf.mxu0
        %v6198 = vadd.f32 %v6009, %v6197
        %v6199 = vpop.f32.mrf.mxu0
        %v6200 = vpop.f32.mrf.mxu0
        %v6201 = vadd.f32 %v6009, %v6200
        %v6202 = vpop.f32.mrf.mxu0
        %6203 = vmatprep.mubr.bf16.mxu0 0
        %6204 = vmatmul.mubr.bf16.gmra.mxu0 %v5984
        %v6205 = vpop.f32.mrf.mxu0
        %v6206 = vadd.f32 %v6009, %v6205
        %v6207 = vpop.f32.mrf.mxu0
        %v6208 = vpop.f32.mrf.mxu0
        %v6209 = vadd.f32 %v6009, %v6208
        %v6210 = vpop.f32.mrf.mxu0
        %6211 = vmatprep.mubr.bf16.mxu0 0
        %6212 = vmatmul.mubr.bf16.gmra.mxu0 %v5985
        %v6213 = vpop.f32.mrf.mxu0
        %v6214 = vadd.f32 %v6009, %v6213
        %v6215 = vpop.f32.mrf.mxu0
        %v6216 = vpop.f32.mrf.mxu0
        %v6217 = vadd.f32 %v6009, %v6216
        %v6218 = vpop.f32.mrf.mxu0
        %6219 = vmatprep.mubr.bf16.mxu0 0
        %6220 = vmatmul.mubr.bf16.gmra.mxu0 %v5986
        %v6221 = vpop.f32.mrf.mxu0
        %v6222 = vadd.f32 %v6009, %v6221
        %v6223 = vpop.f32.mrf.mxu0
        %v6224 = vpop.f32.mrf.mxu0
        %v6225 = vadd.f32 %v6009, %v6224
        %v6226 = vpop.f32.mrf.mxu0
        %6227 = vmatprep.mubr.bf16.mxu0 0
        %6228 = vmatmul.mubr.bf16.gmra.mxu0 %v5987
        %v6229 = vpop.f32.mrf.mxu0
        %v6230 = vadd.f32 %v6009, %v6229
        %v6231 = vpop.f32.mrf.mxu0
        %v6232 = vpop.f32.mrf.mxu0
        %v6233 = vadd.f32 %v6009, %v6232
        %v6234 = vpop.f32.mrf.mxu0
        %6235 = vdwg.mxu0
        %v6236 = vadd.f32 %v6094, %v639
        %v6237 = vadd.f32 %v6097, %v643
        %v6238 = vadd.f32 %v6102, %v649
        %v6239 = vadd.f32 %v6105, %v653
        %v6240 = vadd.f32 %v6110, %v659
        %v6241 = vadd.f32 %v6113, %v663
        %v6242 = vadd.f32 %v6118, %v669
        %v6243 = vadd.f32 %v6121, %v673
        %v6244 = vadd.f32 %v6126, %v679
        %v6245 = vadd.f32 %v6129, %v683
        %v6246 = vadd.f32 %v6134, %v689
        %v6247 = vadd.f32 %v6137, %v693
        %v6248 = vadd.f32 %v6142, %v699
        %v6249 = vadd.f32 %v6145, %v703
        %v6250 = vadd.f32 %v6150, %v709
        %v6251 = vadd.f32 %v6153, %v713
        %v6252 = vadd.f32 %v6158, %v719
        %v6253 = vadd.f32 %v6161, %v723
        %v6254 = vadd.f32 %v6166, %v729
        %v6255 = vadd.f32 %v6169, %v733
        %v6256 = vadd.f32 %v6174, %v739
        %v6257 = vadd.f32 %v6177, %v743
        %v6258 = vadd.f32 %v6182, %v749
        %v6259 = vadd.f32 %v6185, %v753
        %v6260 = vadd.f32 %v6190, %v759
        %v6261 = vadd.f32 %v6193, %v763
        %v6262 = vadd.f32 %v6198, %v769
        %v6263 = vadd.f32 %v6201, %v773
        %v6264 = vadd.f32 %v6206, %v779
        %v6265 = vadd.f32 %v6209, %v783
        %v6266 = vadd.f32 %v6214, %v789
        %v6267 = vadd.f32 %v6217, %v793
        %v6268 = vadd.f32 %v6222, %v799
        %v6269 = vadd.f32 %v6225, %v803
        %v6270 = vadd.f32 %v6230, %v809
        %v6271 = vadd.f32 %v6233, %v813
        %v6272 = vmax.f32 %v6236, 0.0
        %v6273 = vmax.f32 %v6237, 0.0
        %v6274 = vmax.f32 %v6238, 0.0
        %v6275 = vmax.f32 %v6239, 0.0
        %v6276 = vmax.f32 %v6240, 0.0
        %v6277 = vmax.f32 %v6241, 0.0
        %v6278 = vmax.f32 %v6242, 0.0
        %v6279 = vmax.f32 %v6243, 0.0
        %v6280 = vmax.f32 %v6244, 0.0
        %v6281 = vmax.f32 %v6245, 0.0
        %v6282 = vmax.f32 %v6246, 0.0
        %v6283 = vmax.f32 %v6247, 0.0
        %v6284 = vmax.f32 %v6248, 0.0
        %v6285 = vmax.f32 %v6249, 0.0
        %v6286 = vmax.f32 %v6250, 0.0
        %v6287 = vmax.f32 %v6251, 0.0
        %v6288 = vmax.f32 %v6252, 0.0
        %v6289 = vmax.f32 %v6253, 0.0
        %v6290 = vmax.f32 %v6254, 0.0
        %v6291 = vmax.f32 %v6255, 0.0
        %v6292 = vmax.f32 %v6256, 0.0
        %v6293 = vmax.f32 %v6257, 0.0
        %v6294 = vmax.f32 %v6258, 0.0
        %v6295 = vmax.f32 %v6259, 0.0
        %v6296 = vmax.f32 %v6260, 0.0
        %v6297 = vmax.f32 %v6261, 0.0
        %v6298 = vmax.f32 %v6262, 0.0
        %v6299 = vmax.f32 %v6263, 0.0
        %v6300 = vmax.f32 %v6264, 0.0
        %v6301 = vmax.f32 %v6265, 0.0
        %v6302 = vmax.f32 %v6266, 0.0
        %v6303 = vmax.f32 %v6267, 0.0
        %v6304 = vmax.f32 %v6268, 0.0
        %v6305 = vmax.f32 %v6269, 0.0
        %v6306 = vmax.f32 %v6270, 0.0
        %v6307 = vmax.f32 %v6271, 0.0
        %v6308 = vpack.c.bf16 %v6273, %v6272
        %v6309 = vpack.c.bf16 %v6275, %v6274
        %v6310 = vpack.c.bf16 %v6277, %v6276
        %v6311 = vpack.c.bf16 %v6279, %v6278
        %v6312 = vpack.c.bf16 %v6281, %v6280
        %v6313 = vpack.c.bf16 %v6283, %v6282
        %v6314 = vpack.c.bf16 %v6285, %v6284
        %v6315 = vpack.c.bf16 %v6287, %v6286
        %v6316 = vpack.c.bf16 %v6289, %v6288
        %v6317 = vpack.c.bf16 %v6291, %v6290
        %v6318 = vpack.c.bf16 %v6293, %v6292
        %v6319 = vpack.c.bf16 %v6295, %v6294
        %v6320 = vpack.c.bf16 %v6297, %v6296
        %v6321 = vpack.c.bf16 %v6299, %v6298
        %v6322 = vpack.c.bf16 %v6301, %v6300
        %v6323 = vpack.c.bf16 %v6303, %v6302
        %v6324 = vpack.c.bf16 %v6305, %v6304
        %v6325 = vpack.c.bf16 %v6307, %v6306
        %v6344 = vunpack.c.l.b16 %v6308
        %v6345 = vunpack.c.h.b16 %v6308
        %v6346 = vunpack.c.l.b16 %v6309
        %v6347 = vunpack.c.h.b16 %v6309
        %v6348 = vunpack.c.l.b16 %v6310
        %v6349 = vunpack.c.h.b16 %v6310
        %v6350 = vunpack.c.l.b16 %v6311
        %v6351 = vunpack.c.h.b16 %v6311
        %v6352 = vunpack.c.l.b16 %v6312
        %v6353 = vunpack.c.h.b16 %v6312
        %v6354 = vunpack.c.l.b16 %v6313
        %v6355 = vunpack.c.h.b16 %v6313
        %v6356 = vunpack.c.l.b16 %v6314
        %v6357 = vunpack.c.h.b16 %v6314
        %v6358 = vunpack.c.l.b16 %v6315
        %v6359 = vunpack.c.h.b16 %v6315
        %v6360 = vunpack.c.l.b16 %v6316
        %v6361 = vunpack.c.h.b16 %v6316
        %v6362 = vunpack.c.l.b16 %v6317
        %v6363 = vunpack.c.h.b16 %v6317
        %v6364 = vunpack.c.l.b16 %v6318
        %v6365 = vunpack.c.h.b16 %v6318
        %v6366 = vunpack.c.l.b16 %v6319
        %v6367 = vunpack.c.h.b16 %v6319
        %v6368 = vunpack.c.l.b16 %v6320
        %v6369 = vunpack.c.h.b16 %v6320
        %v6370 = vunpack.c.l.b16 %v6321
        %v6371 = vunpack.c.h.b16 %v6321
        %v6372 = vunpack.c.l.b16 %v6322
        %v6373 = vunpack.c.h.b16 %v6322
        %v6374 = vunpack.c.l.b16 %v6323
        %v6375 = vunpack.c.h.b16 %v6323
        %v6376 = vunpack.c.l.b16 %v6324
        %v6377 = vunpack.c.h.b16 %v6324
        %v6378 = vunpack.c.l.b16 %v6325
        %v6379 = vunpack.c.h.b16 %v6325
        %v6380 = vpack.c.b16 %v6344, %v6344
        %v6381 = vpack.c.b16 %v6345, %v6345
        %v6382 = vpack.c.b16 %v6346, %v6346
        %v6383 = vpack.c.b16 %v6347, %v6347
        %v6384 = vpack.c.b16 %v6348, %v6348
        %v6385 = vpack.c.b16 %v6349, %v6349
        %v6386 = vpack.c.b16 %v6350, %v6350
        %v6387 = vpack.c.b16 %v6351, %v6351
        %v6388 = vpack.c.b16 %v6352, %v6352
        %v6389 = vpack.c.b16 %v6353, %v6353
        %v6390 = vpack.c.b16 %v6354, %v6354
        %v6391 = vpack.c.b16 %v6355, %v6355
        %v6392 = vpack.c.b16 %v6356, %v6356
        %v6393 = vpack.c.b16 %v6357, %v6357
        %v6394 = vpack.c.b16 %v6358, %v6358
        %v6395 = vpack.c.b16 %v6359, %v6359
        %v6396 = vpack.c.b16 %v6360, %v6360
        %v6397 = vpack.c.b16 %v6361, %v6361
        %v6398 = vpack.c.b16 %v6362, %v6362
        %v6399 = vpack.c.b16 %v6363, %v6363
        %v6400 = vpack.c.b16 %v6364, %v6364
        %v6401 = vpack.c.b16 %v6365, %v6365
        %v6402 = vpack.c.b16 %v6366, %v6366
        %v6403 = vpack.c.b16 %v6367, %v6367
        %v6404 = vpack.c.b16 %v6368, %v6368
        %v6405 = vpack.c.b16 %v6369, %v6369
        %v6406 = vpack.c.b16 %v6370, %v6370
        %v6407 = vpack.c.b16 %v6371, %v6371
        %v6408 = vpack.c.b16 %v6372, %v6372
        %v6409 = vpack.c.b16 %v6373, %v6373
        %v6410 = vpack.c.b16 %v6374, %v6374
        %v6411 = vpack.c.b16 %v6375, %v6375
        %v6412 = vpack.c.b16 %v6376, %v6376
        %v6413 = vpack.c.b16 %v6377, %v6377
        %v6414 = vpack.c.b16 %v6378, %v6378
        %v6415 = vpack.c.b16 %v6379, %v6379
        %6452 = vst [vmem:[%s340] sm:$0xf] %v6380
        %6453 = vst [vmem:[%s340 + $0x4] sm:$0xf] %v6381
        %6454 = vst [vmem:[%s340 + $0x8] sm:$0xf] %v6382
        %6455 = vst [vmem:[%s340 + $0xc] sm:$0xf] %v6383
        %6456 = vst [vmem:[%s340 + $0x10] sm:$0xf] %v6384
        %6457 = vst [vmem:[%s340 + $0x14] sm:$0xf] %v6385
        %6458 = vst [vmem:[%s340 + $0x18] sm:$0xf] %v6386
        %6459 = vst [vmem:[%s340 + $0x1c] sm:$0xf] %v6387
        %6460 = vst [vmem:[%s340 + $0x20] sm:$0xf] %v6388
        %6461 = vst [vmem:[%s340 + $0x24] sm:$0xf] %v6389
        %6462 = vst [vmem:[%s340 + $0x28] sm:$0xf] %v6390
        %6463 = vst [vmem:[%s340 + $0x2c] sm:$0xf] %v6391
        %6464 = vst [vmem:[%s340 + $0x30] sm:$0xf] %v6392
        %6465 = vst [vmem:[%s340 + $0x34] sm:$0xf] %v6393
        %6466 = vst [vmem:[%s340 + $0x38] sm:$0xf] %v6394
        %6467 = vst [vmem:[%s340 + $0x3c] sm:$0xf] %v6395
        %6468 = vst [vmem:[%s340 + $0x40] sm:$0xf] %v6396
        %6469 = vst [vmem:[%s340 + $0x44] sm:$0xf] %v6397
        %6470 = vst [vmem:[%s340 + $0x48] sm:$0xf] %v6398
        %6471 = vst [vmem:[%s340 + $0x4c] sm:$0xf] %v6399
        %6472 = vst [vmem:[%s340 + $0x50] sm:$0xf] %v6400
        %6473 = vst [vmem:[%s340 + $0x54] sm:$0xf] %v6401
        %6474 = vst [vmem:[%s340 + $0x58] sm:$0xf] %v6402
        %6475 = vst [vmem:[%s340 + $0x5c] sm:$0xf] %v6403
        %6476 = vst [vmem:[%s340 + $0x60] sm:$0xf] %v6404
        %6477 = vst [vmem:[%s340 + $0x64] sm:$0xf] %v6405
        %6478 = vst [vmem:[%s340 + $0x68] sm:$0xf] %v6406
        %6479 = vst [vmem:[%s340 + $0x6c] sm:$0xf] %v6407
        %6480 = vst [vmem:[%s340 + $0x70] sm:$0xf] %v6408
        %6481 = vst [vmem:[%s340 + $0x74] sm:$0xf] %v6409
        %6482 = vst [vmem:[%s340 + $0x78] sm:$0xf] %v6410
        %6483 = vst [vmem:[%s340 + $0x7c] sm:$0xf] %v6411
        %6484 = vst [vmem:[%s340 + $0x80] sm:$0xf] %v6412
        %6485 = vst [vmem:[%s340 + $0x84] sm:$0xf] %v6413
        %6486 = vst [vmem:[%s340 + $0x88] sm:$0xf] %v6414
        %6487 = vst [vmem:[%s340 + $0x8c] sm:$0xf] %v6415
        %s6488 = sand.u32 %s186, 1
        %s6489 = scalar_lea.sflag [#allocation5], %s6488
        %s6490 = sand.u32 %s186, 1
        %s6491 = smul.addr %s6490, 144
        %s6492 = scalar_lea.vmem [#allocation11], %s6491
        // Predicated region
        $region65: #{tpu_custom_call.1} parent=47 // pred_check
          %p6493 = pneg %p196
        $region66: #{tpu_custom_call.1} parent=47 // pred_check_branch
          %6495 = sbr.rel (%p6493) target = $region68
        $region67: #{tpu_custom_call.1} parent=47 // pred_region
          %s6497 = ssub.s32 2304, 2304
          %6498 = vsyncadd %s6489, %s6497
          %s6499 = smul.addr %s26, 36
          %s6500 = smul.addr %s6499, 64
          %s6501 = scalar_lea.hbm %s7, %s6500
          %s6502 = sshll.u32 %s6492, 4
          %s6503 = int_to_ptr.vmem [resolvable:$true] %s6502
          %6508 = dma.vmem_to_hbm [thread:$0]  %s6503, 2304, %s6501, %s6489, 64, 64, 4
        $region68: #{tpu_custom_call.1} parent=47 // pred_fallthru
          _
      $region48: #{tpu_custom_call.1} parent=5 // pred_fallthru
        _
      %p6509 = scmp.le.s32.totalorder 2, %s21
      // Predicated region
      $region69: #{tpu_custom_call.1} parent=5 // pred_check
        %p6510 = pneg %p6509
      $region70: #{tpu_custom_call.1} parent=5 // pred_check_branch
        %6512 = sbr.rel (%p6510) target = $region72
      $region71: #{tpu_custom_call.1} parent=5 // pred_region
        %s6513 = ssub.s32 %s21, 2
        // Predicated region
        $region73: #{tpu_custom_call.1} parent=71 // pred_check
          %p6514 = pneg %p202
        $region74: #{tpu_custom_call.1} parent=71 // pred_check_branch
          %6516 = sbr.rel (%p6514) target = $region76
        $region75: #{tpu_custom_call.1} parent=71 // pred_region
          %s6517 = sand.u32 %s187, 1
          %s6518 = scalar_lea.sflag [#allocation5], %s6517
          %s6519 = sand.u32 %s187, 1
          %s6520 = smul.addr %s6519, 144
          %s6521 = scalar_lea.vmem [#allocation11], %s6520
          %6522 = dma.done %s6518, 2304
        $region76: #{tpu_custom_call.1} parent=71 // pred_fallthru
          _
      $region72: #{tpu_custom_call.1} parent=5 // pred_fallthru
        _
    $region6: #{tpu_custom_call.1} parent=1 // loop_footer
      %s25 = sadd.s32 1, %s21
    $region7: #{tpu_custom_call.1} parent=1 // loop_footer_branch
      %20 = sbr.rel target = $region3
    $region8: #{tpu_custom_call.1} parent=1 // loop_exit
      _
    %6523 = vsyncpa [#allocation4], 1
    %s6524 = scalar_lea.sflag [#allocation4], 1
    %6525 = vsyncpa %s6524, 1
    %6526 = vsyncpa [#allocation7], 1
    %6527 = vsyncpa [#allocation10], 1
    %6528 = vsyncpa [#allocation5], 1
    %s6529 = scalar_lea.sflag [#allocation5], 1
    %6530 = vsyncpa %s6529, 1

</llo_original>
